<compile_context>
chip_gen: v6e
topology: v6e:2x2x1
jax: 0.10.0
libtpu: 0.0.40
codegen_flags: <defaults>
</compile_context>

<pallas_src>
import jax
import jax.numpy as jnp
from jax.experimental import pallas as pl
from jax.experimental.pallas import tpu as pltpu

# ---- model hyper-parameters (the `args.*` of the PyTorch script, small) ----
N_EMBD = 64                 # args.n_embd
HEAD_SIZE = 64              # args.head_size_a
N_HEAD = N_EMBD // HEAD_SIZE
DIM_ATT = N_EMBD            # args.dim_att
DIM_FFN = 128               # args.dim_ffn
N_LAYER = 2
LAYER_ID = 0                # Block(layer_id=0) -> has ln0
HEAD_SIZE_DIVISOR = 8       # args.head_size_divisor
TIME_MIX_EXTRA_DIM = 32
TIME_DECAY_EXTRA_DIM = 64
LN_EPS = 1e-5
GN_EPS = 1e-5 * HEAD_SIZE_DIVISOR ** 2   # GroupNorm (ln_x) eps

B, T = 2, 8

assert N_HEAD == 1                       # single-head WKV chunked form
assert DIM_ATT == N_EMBD
assert TIME_DECAY_EXTRA_DIM == N_EMBD    # lets time_decay_w1 join the (5, C, C) stack


# =============================== Pallas kernel ================================
# pv (packed per-channel vectors, all f32, shape (18, C)) row layout:
#   0 ln0_w   1 ln0_b   2 ln1_w   3 ln1_b   4 ln2_w   5 ln2_b
#   6 time_maa_x   7 time_decay   8 time_faaaa(u)   9 ln_x weight  10 ln_x bias
#  11 cmix time_maa_k  12 cmix time_maa_r
#  13..17 time_maa_[r,k,v,g,w]   (same block order as w1/w2stk/wstk)
def rwkv_block_kernel(x_ref, pv_ref, w1_ref, w2stk_ref, wstk_ref, dw2_ref,
                      wo_ref, wck_ref, wcr_ref, wcv_ref, o_ref):
    f32, bf16 = jnp.float32, jnp.bfloat16
    Tq, C = x_ref.shape

    x = x_ref[...]                                   # (T, C) one batch element
    pv = pv_ref[...]                                 # (18, C)

    def ln(v, w, b):
        mu = jnp.mean(v, axis=-1, keepdims=True)
        var = jnp.mean((v - mu) ** 2, axis=-1, keepdims=True)
        return (v - mu) * jax.lax.rsqrt(var + LN_EPS) * w + b

    def mm(a, w):                                    # bf16 MXU matmul, f32 accumulate
        return jnp.dot(a.astype(bf16), w, preferred_element_type=f32)

    def mm01(m01, v):
        # Exact-f32 product of a {0,1} matrix with v: split v into a bf16-exact
        # high part plus a tiny residual so MXU operand rounding is lossless.
        v_hi = v.astype(bf16).astype(f32)
        v_lo = v - v_hi
        return (jnp.dot(m01, v_hi, preferred_element_type=f32) +
                jnp.dot(m01, v_lo, preferred_element_type=f32))

    # (T,T) helper matrices built once on the VPU, applied on the MXU.
    row = jax.lax.broadcasted_iota(jnp.int32, (Tq, Tq), 0)
    col = jax.lax.broadcasted_iota(jnp.int32, (Tq, Tq), 1)
    shift_m = (col == row - 1).astype(f32)           # out[t] = in[t-1], zeros at t=0
    tril_in = (col <= row).astype(f32)               # inclusive prefix-sum

    def token_shift_delta(v):                        # exact: time_shift(v) - v
        return mm01(shift_m, v) - v

    # ---- ln0 (layer 0) + ln1 ------------------------------------------------
    x = ln(x, pv[0:1], pv[1:2])
    xn = ln(x, pv[2:3], pv[3:4])
    xx = token_shift_delta(xn)

    # ---- RWKV_Tmix: low-rank mixing + r/k/v/g/decay projections -------------
    xxx = xn + xx * pv[6:7]                          # time_maa_x
    hid = jnp.tanh(mm(xxx, w1_ref[...]))             # (T, 5R), block order [r,k,v,g,w]
    outs = []
    for j in range(5):                               # static unroll, no slicing/concat
        mix_j = mm(hid, w2stk_ref[j])                # (T, C)  (block-sparse w2)
        xp_j = xn + xx * (pv[13 + j:14 + j] + mix_j)
        outs.append(mm(xp_j, wstk_ref[j]))           # (T, C)
    r, k, v, glin, dwh = outs
    g = glin * jax.nn.sigmoid(glin)                  # F.silu
    ww = mm(jnp.tanh(dwh), dw2_ref[...])             # (T, C)
    lw = -jnp.exp(pv[7:8] + ww)                      # log decay = -exp(w), f32, < 0

    # ---- WKV6 recurrence, exact chunked (matmul) form ------------------------
    #   y_t = sum_{s<t} (r_t . (k_s * prod_{s<tau<t} w_tau)) v_s + (r_t.(u*k_t)) v_t
    p_in = mm01(tril_in, lw)                         # P_incl[t] = sum_{s<=t} lw_s
    p_ex = p_in - lw                                 # P_excl[t] = sum_{s< t} lw_s
    rd = r * jnp.exp(p_ex)
    kd = k * jnp.exp(-p_in)
    a_off = jax.lax.dot_general(rd, kd, (((1,), (1,)), ((), ())),
                                preferred_element_type=f32)        # (T, T)
    a_diag = jnp.sum(r * pv[8:9] * k, axis=-1, keepdims=True)      # r . (u * k)
    A = jnp.where(col < row, a_off, 0.0) + jnp.where(col == row, a_diag, 0.0)
    y = jnp.dot(A, v, preferred_element_type=f32)                  # (T, C)

    # ---- ln_x (GroupNorm, n_head == 1) + gated output projection ------------
    gmu = jnp.mean(y, axis=-1, keepdims=True)
    gvar = jnp.mean((y - gmu) ** 2, axis=-1, keepdims=True)
    yn = (y - gmu) * jax.lax.rsqrt(gvar + GN_EPS) * pv[9:10] + pv[10:11]
    x = x + mm(yn * g, wo_ref[...])

    # ---- RWKV_CMix (ffn) ------------------------------------------------------
    xn2 = ln(x, pv[4:5], pv[5:6])
    xx2 = token_shift_delta(xn2)
    xkf = xn2 + xx2 * pv[11:12]
    xrf = xn2 + xx2 * pv[12:13]
    kf = jnp.square(jnp.maximum(mm(xkf, wck_ref[...]), 0.0))       # relu(k)**2
    kv = mm(kf, wcv_ref[...])
    rr = jax.nn.sigmoid(mm(xrf, wcr_ref[...]))
    o_ref[...] = (x + rr * kv).astype(o_ref.dtype)


# ---------------------- wrapper: pack / reorder parameters -------------------
def _pack_params(p):
    (ln_w, ln_b, tm_maa, tm_w1, tm_w2, tm_decay, tm_dw1, tm_dw2, tm_u,
     wr, wk, wv, wg, wo, lnx_w, lnx_b, cm_maa, wck, wcr, wcv) = p
    f32, bf16 = jnp.float32, jnp.bfloat16
    C = N_EMBD
    R = tm_w2.shape[1]

    # Target block order [r,k,v,g,w]; source low-rank order [w,k,v,r,g];
    # tm_maa rows are [x,w,k,v,r,g].
    order = (3, 1, 2, 4, 0)
    maa_rows = (4, 2, 3, 5, 1)

    pv = jnp.stack(
        [ln_w[0], ln_b[0], ln_w[1], ln_b[1], ln_w[2], ln_b[2],
         tm_maa[0], tm_decay.reshape(-1), tm_u.reshape(-1),
         lnx_w.reshape(-1), lnx_b.reshape(-1),
         cm_maa[0], cm_maa[1]] + [tm_maa[i] for i in maa_rows],
        axis=0).astype(f32)                                        # (18, C)

    w1p = jnp.concatenate([tm_w1[:, i * R:(i + 1) * R] for i in order], axis=1)
    w2stk = jnp.zeros((5, 5 * R, C), f32)                          # block-sparse w2
    for j, i in enumerate(order):
        w2stk = w2stk.at[j, j * R:(j + 1) * R, :].set(tm_w2[i])
    wstk = jnp.stack([wr, wk, wv, wg, tm_dw1], axis=0)             # (5, C, C)

    return (pv, w1p.astype(bf16), w2stk.astype(bf16), wstk.astype(bf16),
            tm_dw2.astype(bf16), wo.astype(bf16),
            wck.astype(bf16), wcr.astype(bf16), wcv.astype(bf16))


@jax.jit
def rwkv_block_forward(x, raw_params):
    Bq, Tq, C = x.shape
    weights = _pack_params(raw_params)
    x_flat = x.reshape(Bq * Tq, C).astype(jnp.float32)

    def full_spec(a):
        if a.ndim == 2:
            return pl.BlockSpec(a.shape, lambda b: (0, 0))
        return pl.BlockSpec(a.shape, lambda b: (0, 0, 0))

    out = pl.pallas_call(
        rwkv_block_kernel,
        out_shape=jax.ShapeDtypeStruct((Bq * Tq, C), jnp.float32),
        grid=(Bq,),
        in_specs=[pl.BlockSpec((Tq, C), lambda b: (b, 0))]
                 + [full_spec(w) for w in weights],
        out_specs=pl.BlockSpec((Tq, C), lambda b: (b, 0)),
        compiler_params=pltpu.CompilerParams(
            dimension_semantics=("parallel",)),
    )(x_flat, *weights)
    return out.reshape(Bq, Tq, C)


# --------------- pure-JAX reference (original structure, serial WKV) ---------
def _reference_forward(x, p):
    (ln_w, ln_b, tm_maa, tm_w1, tm_w2, tm_decay, tm_dw1, tm_dw2, tm_u,
     wr, wk, wv, wg, wo, lnx_w, lnx_b, cm_maa, wck, wcr, wcv) = p
    f32, bf16 = jnp.float32, jnp.bfloat16
    Bq, Tq, C = x.shape
    H, N = tm_u.shape
    R = tm_w2.shape[1]
    BT = Bq * Tq

    def mm(a, w):                                    # same bf16-operand matmuls
        return jnp.dot(a.astype(bf16), w.astype(bf16), preferred_element_type=f32)

    def layer_norm(v, w, b):
        mu = jnp.mean(v, axis=-1, keepdims=True)
        var = jnp.mean((v - mu) ** 2, axis=-1, keepdims=True)
        return (v - mu) * jax.lax.rsqrt(var + LN_EPS) * w + b

    def token_shift(v):
        return jnp.concatenate(
            [jnp.zeros((Bq, 1, C), v.dtype), v[:, :Tq - 1, :]], axis=1)

    x = layer_norm(x, ln_w[0], ln_b[0])
    xn = layer_norm(x, ln_w[1], ln_b[1])
    xx = token_shift(xn) - xn
    xf, xxf = xn.reshape(BT, C), xx.reshape(BT, C)

    xxx = xf + xxf * tm_maa[0:1]
    tmp = jnp.tanh(mm(xxx, tm_w1))
    mw, mk, mv, mr, mg = [mm(tmp[:, i * R:(i + 1) * R], tm_w2[i]) for i in range(5)]
    xw = xf + xxf * (tm_maa[1:2] + mw)
    xk = xf + xxf * (tm_maa[2:3] + mk)
    xv = xf + xxf * (tm_maa[3:4] + mv)
    xr = xf + xxf * (tm_maa[4:5] + mr)
    xg = xf + xxf * (tm_maa[5:6] + mg)

    r = mm(xr, wr)
    k = mm(xk, wk)
    v = mm(xv, wv)
    glin = mm(xg, wg)
    g = glin * jax.nn.sigmoid(glin)
    ww = mm(jnp.tanh(mm(xw, tm_dw1)), tm_dw2)
    w_dec = jnp.exp(-jnp.exp(tm_decay + ww))

    r4 = r.reshape(Bq, Tq, H, N)
    k4 = k.reshape(Bq, Tq, H, N)
    v4 = v.reshape(Bq, Tq, H, N)
    w4 = w_dec.reshape(Bq, Tq, H, N)
    u = tm_u[None]
    S = jnp.zeros((Bq, H, N, N), f32)
    ys = []
    for t in range(Tq):                              # serial recurrence (reference)
        rt, kt, vt, wt = r4[:, t], k4[:, t], v4[:, t], w4[:, t]
        a = jnp.sum(rt * u * kt, axis=-1, keepdims=True)
        yt = jnp.sum(S * rt[:, :, None, :], axis=-1) + vt * a
        ys.append(yt.reshape(Bq, 1, C))
        S = S * wt[:, :, None, :] + vt[:, :, :, None] * kt[:, :, None, :]
    y = jnp.concatenate(ys, axis=1).reshape(BT, H, N)

    gmu = jnp.mean(y, axis=-1, keepdims=True)
    gvar = jnp.mean((y - gmu) ** 2, axis=-1, keepdims=True)
    yn = ((y - gmu) * jax.lax.rsqrt(gvar + GN_EPS)).reshape(BT, C) * lnx_w + lnx_b
    att = mm(yn * g, wo).reshape(Bq, Tq, C)
    x = x + att

    xn2 = layer_norm(x, ln_w[2], ln_b[2])
    xx2 = token_shift(xn2) - xn2
    xkf = (xn2 + xx2 * cm_maa[0:1]).reshape(BT, C)
    xrf = (xn2 + xx2 * cm_maa[1:2]).reshape(BT, C)
    kf = jnp.square(jnp.maximum(mm(xkf, wck), 0.0))
    kv = mm(kf, wcv)
    rr = jax.nn.sigmoid(mm(xrf, wcr))
    return x + (rr * kv).reshape(Bq, Tq, C)


# ----------------------------- parameter init --------------------------------
def init_params(key):
    C, F, H, N = N_EMBD, DIM_FFN, N_HEAD, HEAD_SIZE
    ratio_0_to_1 = LAYER_ID / (N_LAYER - 1)                # 0.0
    ratio_1_to_almost0 = 1.0 - LAYER_ID / N_LAYER          # 1.0
    ddd = jnp.arange(C, dtype=jnp.float32) / C

    def kaiming(k, fan_in, shape):
        bound = 1.0 / (fan_in ** 0.5)
        return jax.random.uniform(k, shape, jnp.float32, -bound, bound)

    keys = jax.random.split(key, 12)

    ln_w = jnp.ones((3, C), jnp.float32)
    ln_b = jnp.zeros((3, C), jnp.float32)

    maa_1 = 1.0 - ddd ** ratio_1_to_almost0
    maa_v = 1.0 - (ddd ** ratio_1_to_almost0 + 0.3 * ratio_0_to_1)
    maa_h = 1.0 - ddd ** (0.5 * ratio_1_to_almost0)
    tm_maa = jnp.stack([maa_1, maa_1, maa_1, maa_v, maa_h, maa_h], axis=0)

    tm_w1 = jax.random.uniform(keys[0], (C, TIME_MIX_EXTRA_DIM * 5), jnp.float32, -0.05, 0.05)
    tm_w2 = jax.random.uniform(keys[1], (5, TIME_MIX_EXTRA_DIM, C), jnp.float32, -0.05, 0.05)

    n = jnp.arange(DIM_ATT, dtype=jnp.float32)
    decay_speed = -6.0 + 5.0 * (n / (DIM_ATT - 1)) ** (0.7 + 1.3 * ratio_0_to_1)
    tm_decay = decay_speed.reshape(1, DIM_ATT)
    tm_dw1 = jax.random.uniform(keys[2], (C, TIME_DECAY_EXTRA_DIM), jnp.float32, -0.05, 0.05)
    tm_dw2 = jax.random.uniform(keys[3], (TIME_DECAY_EXTRA_DIM, DIM_ATT), jnp.float32, -0.05, 0.05)

    zigzag = ((jnp.arange(DIM_ATT) + 1) % 3 - 1).astype(jnp.float32) * 0.1
    tm_u = (ratio_0_to_1 * (1.0 - n / (DIM_ATT - 1)) + zigzag).reshape(H, N)

    # LoraLinear: lora_B zero-initialised => effective weight is the base weight.
    wr = kaiming(keys[4], C, (C, DIM_ATT))
    wk = kaiming(keys[5], C, (C, DIM_ATT))
    wv = kaiming(keys[6], C, (C, DIM_ATT))
    wg = kaiming(keys[7], C, (C, DIM_ATT))
    wo = kaiming(keys[8], DIM_ATT, (DIM_ATT, C))

    lnx_w = jnp.ones((1, DIM_ATT), jnp.float32)
    lnx_b = jnp.zeros((1, DIM_ATT), jnp.float32)

    cm_maa = jnp.stack([maa_1, maa_1], axis=0)
    wck = kaiming(keys[9], C, (C, F))
    wcr = kaiming(keys[10], C, (C, C))
    wcv = kaiming(keys[11], F, (F, C))

    return (ln_w, ln_b, tm_maa, tm_w1, tm_w2, tm_decay, tm_dw1, tm_dw2, tm_u,
            wr, wk, wv, wg, wo, lnx_w, lnx_b, cm_maa, wck, wcr, wcv)


if __name__ == "__main__":
    key = jax.random.PRNGKey(0)
    kx, kp = jax.random.split(key)
    x = jax.random.normal(kx, (B, T, N_EMBD), jnp.float32)
    params = init_params(kp)

    out = jax.block_until_ready(rwkv_block_forward(x, params))
    ref = jax.block_until_ready(_reference_forward(x, params))

    assert out.shape == (B, T, N_EMBD)
    assert bool(jnp.all(jnp.isfinite(out)))
    max_err = float(jnp.max(jnp.abs(out - ref)))
    assert bool(jnp.allclose(out, ref, atol=2e-2, rtol=2e-2)), f"max_err={max_err}"
    print("KERNEL_OK")
</pallas_src>

<mosaic_0001>
module attributes {stable_mosaic.version = 11 : i64} {
  func.func @rwkv_block_kernel(%arg0: i32, %arg1: memref<8x64xf32, #tpu.memory_space<vmem>>, %arg2: memref<18x64xf32, #tpu.memory_space<vmem>>, %arg3: memref<64x160xbf16, #tpu.memory_space<vmem>>, %arg4: memref<5x160x64xbf16, #tpu.memory_space<vmem>>, %arg5: memref<5x64x64xbf16, #tpu.memory_space<vmem>>, %arg6: memref<64x64xbf16, #tpu.memory_space<vmem>>, %arg7: memref<64x64xbf16, #tpu.memory_space<vmem>>, %arg8: memref<64x128xbf16, #tpu.memory_space<vmem>>, %arg9: memref<64x64xbf16, #tpu.memory_space<vmem>>, %arg10: memref<128x64xbf16, #tpu.memory_space<vmem>>, %arg11: memref<8x64xf32, #tpu.memory_space<vmem>>) attributes {dimension_semantics = [#tpu.dimension_semantics<parallel>], iteration_bounds = array<i64: 2>, scalar_prefetch = 0 : i64, scratch_operands = 0 : i64, tpu.core_type = #tpu.core_type<tc>, window_params = [{transform_indices = @transform_0, window_bounds = array<i64: 8, 64>}, {pipeline_mode = #tpu.pipeline_mode<synchronous>, transform_indices = @transform_1, window_bounds = array<i64: 18, 64>}, {pipeline_mode = #tpu.pipeline_mode<synchronous>, transform_indices = @transform_2, window_bounds = array<i64: 64, 160>}, {pipeline_mode = #tpu.pipeline_mode<synchronous>, transform_indices = @transform_3, window_bounds = array<i64: 5, 160, 64>}, {pipeline_mode = #tpu.pipeline_mode<synchronous>, transform_indices = @transform_4, window_bounds = array<i64: 5, 64, 64>}, {pipeline_mode = #tpu.pipeline_mode<synchronous>, transform_indices = @transform_5, window_bounds = array<i64: 64, 64>}, {pipeline_mode = #tpu.pipeline_mode<synchronous>, transform_indices = @transform_6, window_bounds = array<i64: 64, 64>}, {pipeline_mode = #tpu.pipeline_mode<synchronous>, transform_indices = @transform_7, window_bounds = array<i64: 64, 128>}, {pipeline_mode = #tpu.pipeline_mode<synchronous>, transform_indices = @transform_8, window_bounds = array<i64: 64, 64>}, {pipeline_mode = #tpu.pipeline_mode<synchronous>, transform_indices = @transform_9, window_bounds = array<i64: 128, 64>}, {transform_indices = @transform_10, window_bounds = array<i64: 8, 64>}]} {
    %c0 = arith.constant 0 : index
    %c0_0 = arith.constant 0 : index
    %0 = vector.load %arg1[%c0, %c0_0] : memref<8x64xf32, #tpu.memory_space<vmem>>, vector<8x64xf32>
    %c0_1 = arith.constant 0 : index
    %c0_2 = arith.constant 0 : index
    %1 = vector.load %arg2[%c0_1, %c0_2] : memref<18x64xf32, #tpu.memory_space<vmem>>, vector<18x64xf32>
    %2 = tpu.iota {dimensions = array<i32: 0>} : vector<8x8xi32>
    %3 = tpu.iota {dimensions = array<i32: 1>} : vector<8x8xi32>
    %c1_i32 = arith.constant 1 : i32
    %4 = vector.broadcast %c1_i32 : i32 to vector<8x8xi32>
    %5 = arith.subi %2, %4 : vector<8x8xi32>
    %6 = arith.cmpi eq, %3, %5 : vector<8x8xi32>
    %7 = arith.extui %6 : vector<8x8xi1> to vector<8x8xi32>
    %8 = arith.sitofp %7 : vector<8x8xi32> to vector<8x8xf32>
    %9 = arith.cmpi sle, %3, %2 : vector<8x8xi32>
    %10 = arith.extui %9 : vector<8x8xi1> to vector<8x8xi32>
    %11 = arith.sitofp %10 : vector<8x8xi32> to vector<8x8xf32>
    %12 = vector.extract_strided_slice %1 {offsets = [0, 0], sizes = [1, 64], strides = [1, 1]} : vector<18x64xf32> to vector<1x64xf32>
    %13 = vector.extract_strided_slice %1 {offsets = [1, 0], sizes = [1, 64], strides = [1, 1]} : vector<18x64xf32> to vector<1x64xf32>
    %cst = arith.constant dense<0.000000e+00> : vector<8xf32>
    %14 = vector.multi_reduction <add>, %0, %cst [1] : vector<8x64xf32> to vector<8xf32>
    %15 = vector.shape_cast %14 : vector<8xf32> to vector<8x1xf32>
    %cst_3 = arith.constant 6.400000e+01 : f32
    %16 = vector.broadcast %cst_3 : f32 to vector<8x1xf32>
    %17 = arith.divf %15, %16 : vector<8x1xf32>
    %18 = vector.broadcast %17 : vector<8x1xf32> to vector<8x64xf32>
    %19 = arith.subf %0, %18 : vector<8x64xf32>
    %20 = arith.mulf %19, %19 : vector<8x64xf32>
    %cst_4 = arith.constant dense<0.000000e+00> : vector<8xf32>
    %21 = vector.multi_reduction <add>, %20, %cst_4 [1] : vector<8x64xf32> to vector<8xf32>
    %22 = vector.shape_cast %21 : vector<8xf32> to vector<8x1xf32>
    %cst_5 = arith.constant 6.400000e+01 : f32
    %23 = vector.broadcast %cst_5 : f32 to vector<8x1xf32>
    %24 = arith.divf %22, %23 : vector<8x1xf32>
    %25 = vector.broadcast %17 : vector<8x1xf32> to vector<8x64xf32>
    %26 = arith.subf %0, %25 : vector<8x64xf32>
    %cst_6 = arith.constant 9.99999974E-6 : f32
    %27 = vector.broadcast %cst_6 : f32 to vector<8x1xf32>
    %28 = arith.addf %24, %27 : vector<8x1xf32>
    %29 = math.rsqrt %28 : vector<8x1xf32>
    %30 = vector.broadcast %29 : vector<8x1xf32> to vector<8x64xf32>
    %31 = arith.mulf %26, %30 : vector<8x64xf32>
    %32 = vector.broadcast %12 : vector<1x64xf32> to vector<8x64xf32>
    %33 = arith.mulf %31, %32 : vector<8x64xf32>
    %34 = vector.broadcast %13 : vector<1x64xf32> to vector<8x64xf32>
    %35 = arith.addf %33, %34 : vector<8x64xf32>
    %36 = vector.extract_strided_slice %1 {offsets = [2, 0], sizes = [1, 64], strides = [1, 1]} : vector<18x64xf32> to vector<1x64xf32>
    %37 = vector.extract_strided_slice %1 {offsets = [3, 0], sizes = [1, 64], strides = [1, 1]} : vector<18x64xf32> to vector<1x64xf32>
    %cst_7 = arith.constant dense<0.000000e+00> : vector<8xf32>
    %38 = vector.multi_reduction <add>, %35, %cst_7 [1] : vector<8x64xf32> to vector<8xf32>
    %39 = vector.shape_cast %38 : vector<8xf32> to vector<8x1xf32>
    %cst_8 = arith.constant 6.400000e+01 : f32
    %40 = vector.broadcast %cst_8 : f32 to vector<8x1xf32>
    %41 = arith.divf %39, %40 : vector<8x1xf32>
    %42 = vector.broadcast %41 : vector<8x1xf32> to vector<8x64xf32>
    %43 = arith.subf %35, %42 : vector<8x64xf32>
    %44 = arith.mulf %43, %43 : vector<8x64xf32>
    %cst_9 = arith.constant dense<0.000000e+00> : vector<8xf32>
    %45 = vector.multi_reduction <add>, %44, %cst_9 [1] : vector<8x64xf32> to vector<8xf32>
    %46 = vector.shape_cast %45 : vector<8xf32> to vector<8x1xf32>
    %cst_10 = arith.constant 6.400000e+01 : f32
    %47 = vector.broadcast %cst_10 : f32 to vector<8x1xf32>
    %48 = arith.divf %46, %47 : vector<8x1xf32>
    %49 = vector.broadcast %41 : vector<8x1xf32> to vector<8x64xf32>
    %50 = arith.subf %35, %49 : vector<8x64xf32>
    %cst_11 = arith.constant 9.99999974E-6 : f32
    %51 = vector.broadcast %cst_11 : f32 to vector<8x1xf32>
    %52 = arith.addf %48, %51 : vector<8x1xf32>
    %53 = math.rsqrt %52 : vector<8x1xf32>
    %54 = vector.broadcast %53 : vector<8x1xf32> to vector<8x64xf32>
    %55 = arith.mulf %50, %54 : vector<8x64xf32>
    %56 = vector.broadcast %36 : vector<1x64xf32> to vector<8x64xf32>
    %57 = arith.mulf %55, %56 : vector<8x64xf32>
    %58 = vector.broadcast %37 : vector<1x64xf32> to vector<8x64xf32>
    %59 = arith.addf %57, %58 : vector<8x64xf32>
    %60 = arith.truncf %59 : vector<8x64xf32> to vector<8x64xbf16>
    %61 = arith.extf %60 : vector<8x64xbf16> to vector<8x64xf32>
    %62 = arith.subf %59, %61 : vector<8x64xf32>
    %cst_12 = arith.constant dense<0.000000e+00> : vector<8x64xf32>
    %63 = tpu.matmul %8, %61, %cst_12 {dimension_numbers = #tpu.dot_dimension_numbers<[1], [0], [0], [1], [0, 0, 1, 1], [], []>} : vector<8x8xf32>, vector<8x64xf32>, vector<8x64xf32> -> vector<8x64xf32>
    %cst_13 = arith.constant dense<0.000000e+00> : vector<8x64xf32>
    %64 = tpu.matmul %8, %62, %cst_13 {dimension_numbers = #tpu.dot_dimension_numbers<[1], [0], [0], [1], [0, 0, 1, 1], [], []>} : vector<8x8xf32>, vector<8x64xf32>, vector<8x64xf32> -> vector<8x64xf32>
    %65 = arith.addf %63, %64 : vector<8x64xf32>
    %66 = arith.subf %65, %59 : vector<8x64xf32>
    %67 = vector.extract_strided_slice %1 {offsets = [6, 0], sizes = [1, 64], strides = [1, 1]} : vector<18x64xf32> to vector<1x64xf32>
    %68 = vector.broadcast %67 : vector<1x64xf32> to vector<8x64xf32>
    %69 = arith.mulf %66, %68 : vector<8x64xf32>
    %70 = arith.addf %59, %69 : vector<8x64xf32>
    %c0_14 = arith.constant 0 : index
    %c0_15 = arith.constant 0 : index
    %71 = vector.load %arg3[%c0_14, %c0_15] : memref<64x160xbf16, #tpu.memory_space<vmem>>, vector<64x160xbf16>
    %72 = arith.truncf %70 : vector<8x64xf32> to vector<8x64xbf16>
    %cst_16 = arith.constant dense<0.000000e+00> : vector<8x160xf32>
    %73 = tpu.matmul %72, %71, %cst_16 {dimension_numbers = #tpu.dot_dimension_numbers<[1], [0], [0], [1], [0, 0, 1, 1], [], []>} : vector<8x64xbf16>, vector<64x160xbf16>, vector<8x160xf32> -> vector<8x160xf32>
    %74 = math.tanh %73 : vector<8x160xf32>
    %c0_17 = arith.constant 0 : index
    %c0_18 = arith.constant 0 : index
    %c0_19 = arith.constant 0 : index
    %75 = vector.load %arg4[%c0_17, %c0_18, %c0_19] : memref<5x160x64xbf16, #tpu.memory_space<vmem>>, vector<1x160x64xbf16>
    %76 = vector.shape_cast %75 : vector<1x160x64xbf16> to vector<160x64xbf16>
    %77 = arith.truncf %74 : vector<8x160xf32> to vector<8x160xbf16>
    %cst_20 = arith.constant dense<0.000000e+00> : vector<8x64xf32>
    %78 = tpu.matmul %77, %76, %cst_20 {dimension_numbers = #tpu.dot_dimension_numbers<[1], [0], [0], [1], [0, 0, 1, 1], [], []>} : vector<8x160xbf16>, vector<160x64xbf16>, vector<8x64xf32> -> vector<8x64xf32>
    %79 = vector.extract_strided_slice %1 {offsets = [13, 0], sizes = [1, 64], strides = [1, 1]} : vector<18x64xf32> to vector<1x64xf32>
    %80 = vector.broadcast %79 : vector<1x64xf32> to vector<8x64xf32>
    %81 = arith.addf %80, %78 : vector<8x64xf32>
    %82 = arith.mulf %66, %81 : vector<8x64xf32>
    %83 = arith.addf %59, %82 : vector<8x64xf32>
    %c0_21 = arith.constant 0 : index
    %c0_22 = arith.constant 0 : index
    %c0_23 = arith.constant 0 : index
    %84 = vector.load %arg5[%c0_21, %c0_22, %c0_23] : memref<5x64x64xbf16, #tpu.memory_space<vmem>>, vector<1x64x64xbf16>
    %85 = vector.shape_cast %84 : vector<1x64x64xbf16> to vector<64x64xbf16>
    %86 = arith.truncf %83 : vector<8x64xf32> to vector<8x64xbf16>
    %cst_24 = arith.constant dense<0.000000e+00> : vector<8x64xf32>
    %87 = tpu.matmul %86, %85, %cst_24 {dimension_numbers = #tpu.dot_dimension_numbers<[1], [0], [0], [1], [0, 0, 1, 1], [], []>} : vector<8x64xbf16>, vector<64x64xbf16>, vector<8x64xf32> -> vector<8x64xf32>
    %c1 = arith.constant 1 : index
    %c0_25 = arith.constant 0 : index
    %c0_26 = arith.constant 0 : index
    %88 = vector.load %arg4[%c1, %c0_25, %c0_26] : memref<5x160x64xbf16, #tpu.memory_space<vmem>>, vector<1x160x64xbf16>
    %89 = vector.shape_cast %88 : vector<1x160x64xbf16> to vector<160x64xbf16>
    %90 = arith.truncf %74 : vector<8x160xf32> to vector<8x160xbf16>
    %cst_27 = arith.constant dense<0.000000e+00> : vector<8x64xf32>
    %91 = tpu.matmul %90, %89, %cst_27 {dimension_numbers = #tpu.dot_dimension_numbers<[1], [0], [0], [1], [0, 0, 1, 1], [], []>} : vector<8x160xbf16>, vector<160x64xbf16>, vector<8x64xf32> -> vector<8x64xf32>
    %92 = vector.extract_strided_slice %1 {offsets = [14, 0], sizes = [1, 64], strides = [1, 1]} : vector<18x64xf32> to vector<1x64xf32>
    %93 = vector.broadcast %92 : vector<1x64xf32> to vector<8x64xf32>
    %94 = arith.addf %93, %91 : vector<8x64xf32>
    %95 = arith.mulf %66, %94 : vector<8x64xf32>
    %96 = arith.addf %59, %95 : vector<8x64xf32>
    %c1_28 = arith.constant 1 : index
    %c0_29 = arith.constant 0 : index
    %c0_30 = arith.constant 0 : index
    %97 = vector.load %arg5[%c1_28, %c0_29, %c0_30] : memref<5x64x64xbf16, #tpu.memory_space<vmem>>, vector<1x64x64xbf16>
    %98 = vector.shape_cast %97 : vector<1x64x64xbf16> to vector<64x64xbf16>
    %99 = arith.truncf %96 : vector<8x64xf32> to vector<8x64xbf16>
    %cst_31 = arith.constant dense<0.000000e+00> : vector<8x64xf32>
    %100 = tpu.matmul %99, %98, %cst_31 {dimension_numbers = #tpu.dot_dimension_numbers<[1], [0], [0], [1], [0, 0, 1, 1], [], []>} : vector<8x64xbf16>, vector<64x64xbf16>, vector<8x64xf32> -> vector<8x64xf32>
    %c2 = arith.constant 2 : index
    %c0_32 = arith.constant 0 : index
    %c0_33 = arith.constant 0 : index
    %101 = vector.load %arg4[%c2, %c0_32, %c0_33] : memref<5x160x64xbf16, #tpu.memory_space<vmem>>, vector<1x160x64xbf16>
    %102 = vector.shape_cast %101 : vector<1x160x64xbf16> to vector<160x64xbf16>
    %103 = arith.truncf %74 : vector<8x160xf32> to vector<8x160xbf16>
    %cst_34 = arith.constant dense<0.000000e+00> : vector<8x64xf32>
    %104 = tpu.matmul %103, %102, %cst_34 {dimension_numbers = #tpu.dot_dimension_numbers<[1], [0], [0], [1], [0, 0, 1, 1], [], []>} : vector<8x160xbf16>, vector<160x64xbf16>, vector<8x64xf32> -> vector<8x64xf32>
    %105 = vector.extract_strided_slice %1 {offsets = [15, 0], sizes = [1, 64], strides = [1, 1]} : vector<18x64xf32> to vector<1x64xf32>
    %106 = vector.broadcast %105 : vector<1x64xf32> to vector<8x64xf32>
    %107 = arith.addf %106, %104 : vector<8x64xf32>
    %108 = arith.mulf %66, %107 : vector<8x64xf32>
    %109 = arith.addf %59, %108 : vector<8x64xf32>
    %c2_35 = arith.constant 2 : index
    %c0_36 = arith.constant 0 : index
    %c0_37 = arith.constant 0 : index
    %110 = vector.load %arg5[%c2_35, %c0_36, %c0_37] : memref<5x64x64xbf16, #tpu.memory_space<vmem>>, vector<1x64x64xbf16>
    %111 = vector.shape_cast %110 : vector<1x64x64xbf16> to vector<64x64xbf16>
    %112 = arith.truncf %109 : vector<8x64xf32> to vector<8x64xbf16>
    %cst_38 = arith.constant dense<0.000000e+00> : vector<8x64xf32>
    %113 = tpu.matmul %112, %111, %cst_38 {dimension_numbers = #tpu.dot_dimension_numbers<[1], [0], [0], [1], [0, 0, 1, 1], [], []>} : vector<8x64xbf16>, vector<64x64xbf16>, vector<8x64xf32> -> vector<8x64xf32>
    %c3 = arith.constant 3 : index
    %c0_39 = arith.constant 0 : index
    %c0_40 = arith.constant 0 : index
    %114 = vector.load %arg4[%c3, %c0_39, %c0_40] : memref<5x160x64xbf16, #tpu.memory_space<vmem>>, vector<1x160x64xbf16>
    %115 = vector.shape_cast %114 : vector<1x160x64xbf16> to vector<160x64xbf16>
    %116 = arith.truncf %74 : vector<8x160xf32> to vector<8x160xbf16>
    %cst_41 = arith.constant dense<0.000000e+00> : vector<8x64xf32>
    %117 = tpu.matmul %116, %115, %cst_41 {dimension_numbers = #tpu.dot_dimension_numbers<[1], [0], [0], [1], [0, 0, 1, 1], [], []>} : vector<8x160xbf16>, vector<160x64xbf16>, vector<8x64xf32> -> vector<8x64xf32>
    %118 = vector.extract_strided_slice %1 {offsets = [16, 0], sizes = [1, 64], strides = [1, 1]} : vector<18x64xf32> to vector<1x64xf32>
    %119 = vector.broadcast %118 : vector<1x64xf32> to vector<8x64xf32>
    %120 = arith.addf %119, %117 : vector<8x64xf32>
    %121 = arith.mulf %66, %120 : vector<8x64xf32>
    %122 = arith.addf %59, %121 : vector<8x64xf32>
    %c3_42 = arith.constant 3 : index
    %c0_43 = arith.constant 0 : index
    %c0_44 = arith.constant 0 : index
    %123 = vector.load %arg5[%c3_42, %c0_43, %c0_44] : memref<5x64x64xbf16, #tpu.memory_space<vmem>>, vector<1x64x64xbf16>
    %124 = vector.shape_cast %123 : vector<1x64x64xbf16> to vector<64x64xbf16>
    %125 = arith.truncf %122 : vector<8x64xf32> to vector<8x64xbf16>
    %cst_45 = arith.constant dense<0.000000e+00> : vector<8x64xf32>
    %126 = tpu.matmul %125, %124, %cst_45 {dimension_numbers = #tpu.dot_dimension_numbers<[1], [0], [0], [1], [0, 0, 1, 1], [], []>} : vector<8x64xbf16>, vector<64x64xbf16>, vector<8x64xf32> -> vector<8x64xf32>
    %c4 = arith.constant 4 : index
    %c0_46 = arith.constant 0 : index
    %c0_47 = arith.constant 0 : index
    %127 = vector.load %arg4[%c4, %c0_46, %c0_47] : memref<5x160x64xbf16, #tpu.memory_space<vmem>>, vector<1x160x64xbf16>
    %128 = vector.shape_cast %127 : vector<1x160x64xbf16> to vector<160x64xbf16>
    %129 = arith.truncf %74 : vector<8x160xf32> to vector<8x160xbf16>
    %cst_48 = arith.constant dense<0.000000e+00> : vector<8x64xf32>
    %130 = tpu.matmul %129, %128, %cst_48 {dimension_numbers = #tpu.dot_dimension_numbers<[1], [0], [0], [1], [0, 0, 1, 1], [], []>} : vector<8x160xbf16>, vector<160x64xbf16>, vector<8x64xf32> -> vector<8x64xf32>
    %131 = vector.extract_strided_slice %1 {offsets = [17, 0], sizes = [1, 64], strides = [1, 1]} : vector<18x64xf32> to vector<1x64xf32>
    %132 = vector.broadcast %131 : vector<1x64xf32> to vector<8x64xf32>
    %133 = arith.addf %132, %130 : vector<8x64xf32>
    %134 = arith.mulf %66, %133 : vector<8x64xf32>
    %135 = arith.addf %59, %134 : vector<8x64xf32>
    %c4_49 = arith.constant 4 : index
    %c0_50 = arith.constant 0 : index
    %c0_51 = arith.constant 0 : index
    %136 = vector.load %arg5[%c4_49, %c0_50, %c0_51] : memref<5x64x64xbf16, #tpu.memory_space<vmem>>, vector<1x64x64xbf16>
    %137 = vector.shape_cast %136 : vector<1x64x64xbf16> to vector<64x64xbf16>
    %138 = arith.truncf %135 : vector<8x64xf32> to vector<8x64xbf16>
    %cst_52 = arith.constant dense<0.000000e+00> : vector<8x64xf32>
    %139 = tpu.matmul %138, %137, %cst_52 {dimension_numbers = #tpu.dot_dimension_numbers<[1], [0], [0], [1], [0, 0, 1, 1], [], []>} : vector<8x64xbf16>, vector<64x64xbf16>, vector<8x64xf32> -> vector<8x64xf32>
    %140 = arith.negf %126 : vector<8x64xf32>
    %141 = math.exp %140 : vector<8x64xf32>
    %cst_53 = arith.constant 1.000000e+00 : f32
    %142 = vector.broadcast %cst_53 : f32 to vector<8x64xf32>
    %143 = arith.addf %142, %141 : vector<8x64xf32>
    %144 = arith.divf %142, %143 : vector<8x64xf32>
    %145 = arith.mulf %126, %144 : vector<8x64xf32>
    %146 = math.tanh %139 : vector<8x64xf32>
    %c0_54 = arith.constant 0 : index
    %c0_55 = arith.constant 0 : index
    %147 = vector.load %arg6[%c0_54, %c0_55] : memref<64x64xbf16, #tpu.memory_space<vmem>>, vector<64x64xbf16>
    %148 = arith.truncf %146 : vector<8x64xf32> to vector<8x64xbf16>
    %cst_56 = arith.constant dense<0.000000e+00> : vector<8x64xf32>
    %149 = tpu.matmul %148, %147, %cst_56 {dimension_numbers = #tpu.dot_dimension_numbers<[1], [0], [0], [1], [0, 0, 1, 1], [], []>} : vector<8x64xbf16>, vector<64x64xbf16>, vector<8x64xf32> -> vector<8x64xf32>
    %150 = vector.extract_strided_slice %1 {offsets = [7, 0], sizes = [1, 64], strides = [1, 1]} : vector<18x64xf32> to vector<1x64xf32>
    %151 = vector.broadcast %150 : vector<1x64xf32> to vector<8x64xf32>
    %152 = arith.addf %151, %149 : vector<8x64xf32>
    %153 = math.exp %152 : vector<8x64xf32>
    %cst_57 = arith.constant 0.000000e+00 : f32
    %154 = vector.broadcast %cst_57 : f32 to vector<8x64xf32>
    %155 = arith.subf %154, %153 : vector<8x64xf32>
    %156 = arith.truncf %155 : vector<8x64xf32> to vector<8x64xbf16>
    %157 = arith.extf %156 : vector<8x64xbf16> to vector<8x64xf32>
    %158 = arith.subf %155, %157 : vector<8x64xf32>
    %cst_58 = arith.constant dense<0.000000e+00> : vector<8x64xf32>
    %159 = tpu.matmul %11, %157, %cst_58 {dimension_numbers = #tpu.dot_dimension_numbers<[1], [0], [0], [1], [0, 0, 1, 1], [], []>} : vector<8x8xf32>, vector<8x64xf32>, vector<8x64xf32> -> vector<8x64xf32>
    %cst_59 = arith.constant dense<0.000000e+00> : vector<8x64xf32>
    %160 = tpu.matmul %11, %158, %cst_59 {dimension_numbers = #tpu.dot_dimension_numbers<[1], [0], [0], [1], [0, 0, 1, 1], [], []>} : vector<8x8xf32>, vector<8x64xf32>, vector<8x64xf32> -> vector<8x64xf32>
    %161 = arith.addf %159, %160 : vector<8x64xf32>
    %162 = arith.subf %161, %155 : vector<8x64xf32>
    %163 = math.exp %162 : vector<8x64xf32>
    %164 = arith.mulf %87, %163 : vector<8x64xf32>
    %cst_60 = arith.constant 0.000000e+00 : f32
    %165 = vector.broadcast %cst_60 : f32 to vector<8x64xf32>
    %166 = arith.subf %165, %161 : vector<8x64xf32>
    %167 = math.exp %166 : vector<8x64xf32>
    %168 = arith.mulf %100, %167 : vector<8x64xf32>
    %cst_61 = arith.constant dense<0.000000e+00> : vector<8x8xf32>
    %169 = tpu.matmul %164, %168, %cst_61 {dimension_numbers = #tpu.dot_dimension_numbers<[1], [1], [0], [0], [0, 0, 1, 0], [], []>} : vector<8x64xf32>, vector<8x64xf32>, vector<8x8xf32> -> vector<8x8xf32>
    %170 = vector.extract_strided_slice %1 {offsets = [8, 0], sizes = [1, 64], strides = [1, 1]} : vector<18x64xf32> to vector<1x64xf32>
    %171 = vector.broadcast %170 : vector<1x64xf32> to vector<8x64xf32>
    %172 = arith.mulf %87, %171 : vector<8x64xf32>
    %173 = arith.mulf %172, %100 : vector<8x64xf32>
    %cst_62 = arith.constant dense<0.000000e+00> : vector<8xf32>
    %174 = vector.multi_reduction <add>, %173, %cst_62 [1] : vector<8x64xf32> to vector<8xf32>
    %175 = vector.shape_cast %174 : vector<8xf32> to vector<8x1xf32>
    %176 = arith.cmpi slt, %3, %2 : vector<8x8xi32>
    %cst_63 = arith.constant 0.000000e+00 : f32
    %177 = vector.broadcast %cst_63 : f32 to vector<8x8xf32>
    %178 = arith.select %176, %169, %177 : vector<8x8xi1>, vector<8x8xf32>
    %179 = arith.cmpi eq, %3, %2 : vector<8x8xi32>
    %cst_64 = arith.constant 0.000000e+00 : f32
    %180 = vector.shape_cast %175 : vector<8x1xf32> to vector<8x1xf32>
    %181 = vector.broadcast %180 : vector<8x1xf32> to vector<8x8xf32>
    %182 = vector.broadcast %cst_64 : f32 to vector<8x8xf32>
    %183 = arith.select %179, %181, %182 : vector<8x8xi1>, vector<8x8xf32>
    %184 = arith.addf %178, %183 : vector<8x8xf32>
    %cst_65 = arith.constant dense<0.000000e+00> : vector<8x64xf32>
    %185 = tpu.matmul %184, %113, %cst_65 {dimension_numbers = #tpu.dot_dimension_numbers<[1], [0], [0], [1], [0, 0, 1, 1], [], []>} : vector<8x8xf32>, vector<8x64xf32>, vector<8x64xf32> -> vector<8x64xf32>
    %cst_66 = arith.constant dense<0.000000e+00> : vector<8xf32>
    %186 = vector.multi_reduction <add>, %185, %cst_66 [1] : vector<8x64xf32> to vector<8xf32>
    %187 = vector.shape_cast %186 : vector<8xf32> to vector<8x1xf32>
    %cst_67 = arith.constant 6.400000e+01 : f32
    %188 = vector.broadcast %cst_67 : f32 to vector<8x1xf32>
    %189 = arith.divf %187, %188 : vector<8x1xf32>
    %190 = vector.broadcast %189 : vector<8x1xf32> to vector<8x64xf32>
    %191 = arith.subf %185, %190 : vector<8x64xf32>
    %192 = arith.mulf %191, %191 : vector<8x64xf32>
    %cst_68 = arith.constant dense<0.000000e+00> : vector<8xf32>
    %193 = vector.multi_reduction <add>, %192, %cst_68 [1] : vector<8x64xf32> to vector<8xf32>
    %194 = vector.shape_cast %193 : vector<8xf32> to vector<8x1xf32>
    %cst_69 = arith.constant 6.400000e+01 : f32
    %195 = vector.broadcast %cst_69 : f32 to vector<8x1xf32>
    %196 = arith.divf %194, %195 : vector<8x1xf32>
    %197 = vector.broadcast %189 : vector<8x1xf32> to vector<8x64xf32>
    %198 = arith.subf %185, %197 : vector<8x64xf32>
    %cst_70 = arith.constant 6.400000e-04 : f32
    %199 = vector.broadcast %cst_70 : f32 to vector<8x1xf32>
    %200 = arith.addf %196, %199 : vector<8x1xf32>
    %201 = math.rsqrt %200 : vector<8x1xf32>
    %202 = vector.broadcast %201 : vector<8x1xf32> to vector<8x64xf32>
    %203 = arith.mulf %198, %202 : vector<8x64xf32>
    %204 = vector.extract_strided_slice %1 {offsets = [9, 0], sizes = [1, 64], strides = [1, 1]} : vector<18x64xf32> to vector<1x64xf32>
    %205 = vector.broadcast %204 : vector<1x64xf32> to vector<8x64xf32>
    %206 = arith.mulf %203, %205 : vector<8x64xf32>
    %207 = vector.extract_strided_slice %1 {offsets = [10, 0], sizes = [1, 64], strides = [1, 1]} : vector<18x64xf32> to vector<1x64xf32>
    %208 = vector.broadcast %207 : vector<1x64xf32> to vector<8x64xf32>
    %209 = arith.addf %206, %208 : vector<8x64xf32>
    %210 = arith.mulf %209, %145 : vector<8x64xf32>
    %c0_71 = arith.constant 0 : index
    %c0_72 = arith.constant 0 : index
    %211 = vector.load %arg7[%c0_71, %c0_72] : memref<64x64xbf16, #tpu.memory_space<vmem>>, vector<64x64xbf16>
    %212 = arith.truncf %210 : vector<8x64xf32> to vector<8x64xbf16>
    %cst_73 = arith.constant dense<0.000000e+00> : vector<8x64xf32>
    %213 = tpu.matmul %212, %211, %cst_73 {dimension_numbers = #tpu.dot_dimension_numbers<[1], [0], [0], [1], [0, 0, 1, 1], [], []>} : vector<8x64xbf16>, vector<64x64xbf16>, vector<8x64xf32> -> vector<8x64xf32>
    %214 = arith.addf %35, %213 : vector<8x64xf32>
    %215 = vector.extract_strided_slice %1 {offsets = [4, 0], sizes = [1, 64], strides = [1, 1]} : vector<18x64xf32> to vector<1x64xf32>
    %216 = vector.extract_strided_slice %1 {offsets = [5, 0], sizes = [1, 64], strides = [1, 1]} : vector<18x64xf32> to vector<1x64xf32>
    %cst_74 = arith.constant dense<0.000000e+00> : vector<8xf32>
    %217 = vector.multi_reduction <add>, %214, %cst_74 [1] : vector<8x64xf32> to vector<8xf32>
    %218 = vector.shape_cast %217 : vector<8xf32> to vector<8x1xf32>
    %cst_75 = arith.constant 6.400000e+01 : f32
    %219 = vector.broadcast %cst_75 : f32 to vector<8x1xf32>
    %220 = arith.divf %218, %219 : vector<8x1xf32>
    %221 = vector.broadcast %220 : vector<8x1xf32> to vector<8x64xf32>
    %222 = arith.subf %214, %221 : vector<8x64xf32>
    %223 = arith.mulf %222, %222 : vector<8x64xf32>
    %cst_76 = arith.constant dense<0.000000e+00> : vector<8xf32>
    %224 = vector.multi_reduction <add>, %223, %cst_76 [1] : vector<8x64xf32> to vector<8xf32>
    %225 = vector.shape_cast %224 : vector<8xf32> to vector<8x1xf32>
    %cst_77 = arith.constant 6.400000e+01 : f32
    %226 = vector.broadcast %cst_77 : f32 to vector<8x1xf32>
    %227 = arith.divf %225, %226 : vector<8x1xf32>
    %228 = vector.broadcast %220 : vector<8x1xf32> to vector<8x64xf32>
    %229 = arith.subf %214, %228 : vector<8x64xf32>
    %cst_78 = arith.constant 9.99999974E-6 : f32
    %230 = vector.broadcast %cst_78 : f32 to vector<8x1xf32>
    %231 = arith.addf %227, %230 : vector<8x1xf32>
    %232 = math.rsqrt %231 : vector<8x1xf32>
    %233 = vector.broadcast %232 : vector<8x1xf32> to vector<8x64xf32>
    %234 = arith.mulf %229, %233 : vector<8x64xf32>
    %235 = vector.broadcast %215 : vector<1x64xf32> to vector<8x64xf32>
    %236 = arith.mulf %234, %235 : vector<8x64xf32>
    %237 = vector.broadcast %216 : vector<1x64xf32> to vector<8x64xf32>
    %238 = arith.addf %236, %237 : vector<8x64xf32>
    %239 = arith.truncf %238 : vector<8x64xf32> to vector<8x64xbf16>
    %240 = arith.extf %239 : vector<8x64xbf16> to vector<8x64xf32>
    %241 = arith.subf %238, %240 : vector<8x64xf32>
    %cst_79 = arith.constant dense<0.000000e+00> : vector<8x64xf32>
    %242 = tpu.matmul %8, %240, %cst_79 {dimension_numbers = #tpu.dot_dimension_numbers<[1], [0], [0], [1], [0, 0, 1, 1], [], []>} : vector<8x8xf32>, vector<8x64xf32>, vector<8x64xf32> -> vector<8x64xf32>
    %cst_80 = arith.constant dense<0.000000e+00> : vector<8x64xf32>
    %243 = tpu.matmul %8, %241, %cst_80 {dimension_numbers = #tpu.dot_dimension_numbers<[1], [0], [0], [1], [0, 0, 1, 1], [], []>} : vector<8x8xf32>, vector<8x64xf32>, vector<8x64xf32> -> vector<8x64xf32>
    %244 = arith.addf %242, %243 : vector<8x64xf32>
    %245 = arith.subf %244, %238 : vector<8x64xf32>
    %246 = vector.extract_strided_slice %1 {offsets = [11, 0], sizes = [1, 64], strides = [1, 1]} : vector<18x64xf32> to vector<1x64xf32>
    %247 = vector.broadcast %246 : vector<1x64xf32> to vector<8x64xf32>
    %248 = arith.mulf %245, %247 : vector<8x64xf32>
    %249 = arith.addf %238, %248 : vector<8x64xf32>
    %250 = vector.extract_strided_slice %1 {offsets = [12, 0], sizes = [1, 64], strides = [1, 1]} : vector<18x64xf32> to vector<1x64xf32>
    %251 = vector.broadcast %250 : vector<1x64xf32> to vector<8x64xf32>
    %252 = arith.mulf %245, %251 : vector<8x64xf32>
    %253 = arith.addf %238, %252 : vector<8x64xf32>
    %c0_81 = arith.constant 0 : index
    %c0_82 = arith.constant 0 : index
    %254 = vector.load %arg8[%c0_81, %c0_82] : memref<64x128xbf16, #tpu.memory_space<vmem>>, vector<64x128xbf16>
    %255 = arith.truncf %249 : vector<8x64xf32> to vector<8x64xbf16>
    %cst_83 = arith.constant dense<0.000000e+00> : vector<8x128xf32>
    %256 = tpu.matmul %255, %254, %cst_83 {dimension_numbers = #tpu.dot_dimension_numbers<[1], [0], [0], [1], [0, 0, 1, 1], [], []>} : vector<8x64xbf16>, vector<64x128xbf16>, vector<8x128xf32> -> vector<8x128xf32>
    %cst_84 = arith.constant 0.000000e+00 : f32
    %257 = vector.broadcast %cst_84 : f32 to vector<8x128xf32>
    %258 = arith.maximumf %256, %257 : vector<8x128xf32>
    %259 = arith.mulf %258, %258 : vector<8x128xf32>
    %c0_85 = arith.constant 0 : index
    %c0_86 = arith.constant 0 : index
    %260 = vector.load %arg10[%c0_85, %c0_86] : memref<128x64xbf16, #tpu.memory_space<vmem>>, vector<128x64xbf16>
    %261 = arith.truncf %259 : vector<8x128xf32> to vector<8x128xbf16>
    %cst_87 = arith.constant dense<0.000000e+00> : vector<8x64xf32>
    %262 = tpu.matmul %261, %260, %cst_87 {dimension_numbers = #tpu.dot_dimension_numbers<[1], [0], [0], [1], [0, 0, 1, 1], [], []>} : vector<8x128xbf16>, vector<128x64xbf16>, vector<8x64xf32> -> vector<8x64xf32>
    %c0_88 = arith.constant 0 : index
    %c0_89 = arith.constant 0 : index
    %263 = vector.load %arg9[%c0_88, %c0_89] : memref<64x64xbf16, #tpu.memory_space<vmem>>, vector<64x64xbf16>
    %264 = arith.truncf %253 : vector<8x64xf32> to vector<8x64xbf16>
    %cst_90 = arith.constant dense<0.000000e+00> : vector<8x64xf32>
    %265 = tpu.matmul %264, %263, %cst_90 {dimension_numbers = #tpu.dot_dimension_numbers<[1], [0], [0], [1], [0, 0, 1, 1], [], []>} : vector<8x64xbf16>, vector<64x64xbf16>, vector<8x64xf32> -> vector<8x64xf32>
    %266 = arith.negf %265 : vector<8x64xf32>
    %267 = math.exp %266 : vector<8x64xf32>
    %cst_91 = arith.constant 1.000000e+00 : f32
    %268 = vector.broadcast %cst_91 : f32 to vector<8x64xf32>
    %269 = arith.addf %268, %267 : vector<8x64xf32>
    %270 = arith.divf %268, %269 : vector<8x64xf32>
    %271 = arith.mulf %270, %262 : vector<8x64xf32>
    %272 = arith.addf %214, %271 : vector<8x64xf32>
    %c0_92 = arith.constant 0 : index
    %c0_93 = arith.constant 0 : index
    %273 = vector.load %arg11[%c0_92, %c0_93] : memref<8x64xf32, #tpu.memory_space<vmem>>, vector<8x64xf32>
    tpu.vector_store %arg11[%c0_92, %c0_93], %272 {strides = array<i32>} : memref<8x64xf32, #tpu.memory_space<vmem>>, vector<8x64xf32>,
    return
  }
  func.func @transform_0(%arg0: i32) -> (i32, i32) {
    %c0_i32 = arith.constant 0 : i32
    %c0_i32_0 = arith.constant 0 : i32
    return %arg0, %c0_i32 : i32, i32
  }
  func.func @transform_1(%arg0: i32) -> (i32, i32) {
    %c0_i32 = arith.constant 0 : i32
    %c0_i32_0 = arith.constant 0 : i32
    %c0_i32_1 = arith.constant 0 : i32
    return %c0_i32, %c0_i32_0 : i32, i32
  }
  func.func @transform_2(%arg0: i32) -> (i32, i32) {
    %c0_i32 = arith.constant 0 : i32
    %c0_i32_0 = arith.constant 0 : i32
    %c0_i32_1 = arith.constant 0 : i32
    return %c0_i32, %c0_i32_0 : i32, i32
  }
  func.func @transform_3(%arg0: i32) -> (i32, i32, i32) {
    %c0_i32 = arith.constant 0 : i32
    %c0_i32_0 = arith.constant 0 : i32
    %c0_i32_1 = arith.constant 0 : i32
    %c0_i32_2 = arith.constant 0 : i32
    return %c0_i32, %c0_i32_0, %c0_i32_1 : i32, i32, i32
  }
  func.func @transform_4(%arg0: i32) -> (i32, i32, i32) {
    %c0_i32 = arith.constant 0 : i32
    %c0_i32_0 = arith.constant 0 : i32
    %c0_i32_1 = arith.constant 0 : i32
    %c0_i32_2 = arith.constant 0 : i32
    return %c0_i32, %c0_i32_0, %c0_i32_1 : i32, i32, i32
  }
  func.func @transform_5(%arg0: i32) -> (i32, i32) {
    %c0_i32 = arith.constant 0 : i32
    %c0_i32_0 = arith.constant 0 : i32
    %c0_i32_1 = arith.constant 0 : i32
    return %c0_i32, %c0_i32_0 : i32, i32
  }
  func.func @transform_6(%arg0: i32) -> (i32, i32) {
    %c0_i32 = arith.constant 0 : i32
    %c0_i32_0 = arith.constant 0 : i32
    %c0_i32_1 = arith.constant 0 : i32
    return %c0_i32, %c0_i32_0 : i32, i32
  }
  func.func @transform_7(%arg0: i32) -> (i32, i32) {
    %c0_i32 = arith.constant 0 : i32
    %c0_i32_0 = arith.constant 0 : i32
    %c0_i32_1 = arith.constant 0 : i32
    return %c0_i32, %c0_i32_0 : i32, i32
  }
  func.func @transform_8(%arg0: i32) -> (i32, i32) {
    %c0_i32 = arith.constant 0 : i32
    %c0_i32_0 = arith.constant 0 : i32
    %c0_i32_1 = arith.constant 0 : i32
    return %c0_i32, %c0_i32_0 : i32, i32
  }
  func.func @transform_9(%arg0: i32) -> (i32, i32) {
    %c0_i32 = arith.constant 0 : i32
    %c0_i32_0 = arith.constant 0 : i32
    %c0_i32_1 = arith.constant 0 : i32
    return %c0_i32, %c0_i32_0 : i32, i32
  }
  func.func @transform_10(%arg0: i32) -> (i32, i32) {
    %c0_i32 = arith.constant 0 : i32
    %c0_i32_0 = arith.constant 0 : i32
    return %arg0, %c0_i32 : i32, i32
  }
}

</mosaic_0001>

<llo_original>
// kernel: rwkv_block_forward.1
$region0: #{rwkv_block_forward.1}
  #allocation0 [shape = 'u32[]', space=smem, size = 0x4, offset = 0x4, fixed_abs, tag = 'smem constant byte address 0x4 - core index']
  #allocation1 [shape = 'u32[144,128]{1,0:T(1,128)}', space=vmem, size = 0x12000, scoped, tag = 'internal scratch']
  %s0 = inlined_call_operand.vmem [shape: f32[16,64], index: 0, kind: input, shape index: {}]
  %s1 = inlined_call_operand.vmem [shape: f32[18,64], index: 1, kind: input, shape index: {}]
  %s2 = inlined_call_operand.vmem [shape: bf16[64,160], index: 2, kind: input, shape index: {}]
  %s3 = inlined_call_operand.vmem [shape: bf16[5,160,64], index: 3, kind: input, shape index: {}]
  %s4 = inlined_call_operand.vmem [shape: bf16[5,64,64], index: 4, kind: input, shape index: {}]
  %s5 = inlined_call_operand.vmem [shape: bf16[64,64], index: 5, kind: input, shape index: {}]
  %s6 = inlined_call_operand.vmem [shape: bf16[64,64], index: 6, kind: input, shape index: {}]
  %s7 = inlined_call_operand.vmem [shape: bf16[64,128], index: 7, kind: input, shape index: {}]
  %s8 = inlined_call_operand.vmem [shape: bf16[64,64], index: 8, kind: input, shape index: {}]
  %s9 = inlined_call_operand.vmem [shape: bf16[128,64], index: 9, kind: input, shape index: {}]
  %s10 = inlined_call_operand.hbm [shape: f32[16,64], index: 10, kind: output, shape index: {}]
  %s11 = sld [smem:[#allocation0]]
  $region73: #{rwkv_block_forward.1} parent=0
    _
  %s13 = ssub.s32 1, %s11
  %s14 = scalar_select 0, %s13, %s11
  $region1: #{rwkv_block_forward.1} parent=0
    #allocation2 [shape = 'u8[8192]{0}', space=vmem, size = 0x2000, scoped, tag = 'output window, operand 0']
    #allocation3 [shape = 's32[2]{0}', space=sflag, size = 0x8, scoped, tag = 'scoped memory for rwkv_block_forward.1']
    %15 = vsyncpa [#allocation3], 0
    %s16 = scalar_lea.sflag [#allocation3], 1
    %17 = vsyncpa %s16, 0
    loop: start=0, step=1, limit=4
    $region2: #{rwkv_block_forward.1} parent=1 // loop_pre_header
      _
    $region3: #{rwkv_block_forward.1} parent=1 // loop_header
      %s19 = sphi 0, %s23
      %p20 = scmp.ge.s32.totalorder %s19, 4
      %s29 = sphi 0, %s31
      %s32 = sphi 0, %s29
      %s33 = sphi 0, %s32
      %s49 = sphi 0, %s33
      %s53 = sphi 0, %s53
      %s55 = sphi 0, %s53
      %s56 = sphi 0, %s55
      %s70 = sphi 0, %s56
      %s74 = sphi 0, %s74
      %s76 = sphi 0, %s74
      %s77 = sphi 0, %s76
      %s91 = sphi 0, %s77
      %s95 = sphi 0, %s95
      %s97 = sphi 0, %s95
      %s98 = sphi 0, %s97
      %s112 = sphi 0, %s98
      %s116 = sphi 0, %s116
      %s118 = sphi 0, %s116
      %s119 = sphi 0, %s118
      %s133 = sphi 0, %s119
      %s137 = sphi 0, %s137
      %s139 = sphi 0, %s137
      %s140 = sphi 0, %s139
      %s154 = sphi 0, %s140
      %s158 = sphi 0, %s158
      %s160 = sphi 0, %s158
      %s161 = sphi 0, %s160
      %s175 = sphi 0, %s161
      %s179 = sphi 0, %s179
      %s181 = sphi 0, %s179
      %s182 = sphi 0, %s181
      %s196 = sphi 0, %s182
      %s200 = sphi 0, %s200
      %s202 = sphi 0, %s200
      %s203 = sphi 0, %s202
      %s217 = sphi 0, %s203
      %s221 = sphi 0, %s221
      %s223 = sphi 0, %s221
      %s224 = sphi 0, %s223
      %s238 = sphi 0, %s224
      %s244 = sphi 0, %s246
      %s247 = sphi 0, %s244
      %s248 = sphi 0, %s247
      %s264 = sphi 0, %s248
    $region4: #{rwkv_block_forward.1} parent=1 // loop_header_branch
      %22 = sbr.rel (%p20) target = $region8
    $region5: #{rwkv_block_forward.1} parent=1 // loop_body
      %s24 = ssub.s32 %s19, 1
      %s25 = ssub.s32 %s19, 2
      %s26 = sadd.s32 %s19, 1
      %s27 = ssub.s32 %s19, %s26
      %p28 = scmp.eq.s32.totalorder %s27, 0
      %s30 = sadd.s32 %s29, 1
      %s31 = scalar_select %p28, %s29, %s30
      %p34 = pneg %p28
      %p35 = scmp.eq.s32.totalorder %s19, 1
      %p36 = por %p34, %p35
      %p37 = scmp.ne.s32.totalorder %s29, %s32
      %p38 = scmp.eq.s32.totalorder %s19, 0
      %p39 = por %p37, %p38
      %p40 = scmp.ne.s32.totalorder %s29, %s32
      %p41 = scmp.eq.s32.totalorder %s24, 1
      %p42 = por %p40, %p41
      %p43 = scmp.ne.s32.totalorder %s32, %s33
      %p44 = scmp.eq.s32.totalorder %s24, 0
      %p45 = por %p43, %p44
      %p46 = scmp.ne.s32.totalorder %s32, %s33
      %p47 = scmp.eq.s32.totalorder %s25, 1
      %p48 = por %p46, %p47
      %p50 = scmp.ne.s32.totalorder %s33, %s49
      %p51 = scmp.eq.s32.totalorder %s25, 0
      %p52 = por %p50, %p51
      %s54 = sadd.s32 %s53, 1
      %p57 = scmp.eq.s32.totalorder %s19, 1
      %p58 = scmp.ne.s32.totalorder %s53, %s55
      %p59 = scmp.eq.s32.totalorder %s19, 0
      %p60 = por %p58, %p59
      %p61 = scmp.ne.s32.totalorder %s53, %s55
      %p62 = scmp.eq.s32.totalorder %s24, 1
      %p63 = por %p61, %p62
      %p64 = scmp.ne.s32.totalorder %s55, %s56
      %p65 = scmp.eq.s32.totalorder %s24, 0
      %p66 = por %p64, %p65
      %p67 = scmp.ne.s32.totalorder %s55, %s56
      %p68 = scmp.eq.s32.totalorder %s25, 1
      %p69 = por %p67, %p68
      %p71 = scmp.ne.s32.totalorder %s56, %s70
      %p72 = scmp.eq.s32.totalorder %s25, 0
      %p73 = por %p71, %p72
      %s75 = sadd.s32 %s74, 1
      %p78 = scmp.eq.s32.totalorder %s19, 1
      %p79 = scmp.ne.s32.totalorder %s74, %s76
      %p80 = scmp.eq.s32.totalorder %s19, 0
      %p81 = por %p79, %p80
      %p82 = scmp.ne.s32.totalorder %s74, %s76
      %p83 = scmp.eq.s32.totalorder %s24, 1
      %p84 = por %p82, %p83
      %p85 = scmp.ne.s32.totalorder %s76, %s77
      %p86 = scmp.eq.s32.totalorder %s24, 0
      %p87 = por %p85, %p86
      %p88 = scmp.ne.s32.totalorder %s76, %s77
      %p89 = scmp.eq.s32.totalorder %s25, 1
      %p90 = por %p88, %p89
      %p92 = scmp.ne.s32.totalorder %s77, %s91
      %p93 = scmp.eq.s32.totalorder %s25, 0
      %p94 = por %p92, %p93
      %s96 = sadd.s32 %s95, 1
      %p99 = scmp.eq.s32.totalorder %s19, 1
      %p100 = scmp.ne.s32.totalorder %s95, %s97
      %p101 = scmp.eq.s32.totalorder %s19, 0
      %p102 = por %p100, %p101
      %p103 = scmp.ne.s32.totalorder %s95, %s97
      %p104 = scmp.eq.s32.totalorder %s24, 1
      %p105 = por %p103, %p104
      %p106 = scmp.ne.s32.totalorder %s97, %s98
      %p107 = scmp.eq.s32.totalorder %s24, 0
      %p108 = por %p106, %p107
      %p109 = scmp.ne.s32.totalorder %s97, %s98
      %p110 = scmp.eq.s32.totalorder %s25, 1
      %p111 = por %p109, %p110
      %p113 = scmp.ne.s32.totalorder %s98, %s112
      %p114 = scmp.eq.s32.totalorder %s25, 0
      %p115 = por %p113, %p114
      %s117 = sadd.s32 %s116, 1
      %p120 = scmp.eq.s32.totalorder %s19, 1
      %p121 = scmp.ne.s32.totalorder %s116, %s118
      %p122 = scmp.eq.s32.totalorder %s19, 0
      %p123 = por %p121, %p122
      %p124 = scmp.ne.s32.totalorder %s116, %s118
      %p125 = scmp.eq.s32.totalorder %s24, 1
      %p126 = por %p124, %p125
      %p127 = scmp.ne.s32.totalorder %s118, %s119
      %p128 = scmp.eq.s32.totalorder %s24, 0
      %p129 = por %p127, %p128
      %p130 = scmp.ne.s32.totalorder %s118, %s119
      %p131 = scmp.eq.s32.totalorder %s25, 1
      %p132 = por %p130, %p131
      %p134 = scmp.ne.s32.totalorder %s119, %s133
      %p135 = scmp.eq.s32.totalorder %s25, 0
      %p136 = por %p134, %p135
      %s138 = sadd.s32 %s137, 1
      %p141 = scmp.eq.s32.totalorder %s19, 1
      %p142 = scmp.ne.s32.totalorder %s137, %s139
      %p143 = scmp.eq.s32.totalorder %s19, 0
      %p144 = por %p142, %p143
      %p145 = scmp.ne.s32.totalorder %s137, %s139
      %p146 = scmp.eq.s32.totalorder %s24, 1
      %p147 = por %p145, %p146
      %p148 = scmp.ne.s32.totalorder %s139, %s140
      %p149 = scmp.eq.s32.totalorder %s24, 0
      %p150 = por %p148, %p149
      %p151 = scmp.ne.s32.totalorder %s139, %s140
      %p152 = scmp.eq.s32.totalorder %s25, 1
      %p153 = por %p151, %p152
      %p155 = scmp.ne.s32.totalorder %s140, %s154
      %p156 = scmp.eq.s32.totalorder %s25, 0
      %p157 = por %p155, %p156
      %s159 = sadd.s32 %s158, 1
      %p162 = scmp.eq.s32.totalorder %s19, 1
      %p163 = scmp.ne.s32.totalorder %s158, %s160
      %p164 = scmp.eq.s32.totalorder %s19, 0
      %p165 = por %p163, %p164
      %p166 = scmp.ne.s32.totalorder %s158, %s160
      %p167 = scmp.eq.s32.totalorder %s24, 1
      %p168 = por %p166, %p167
      %p169 = scmp.ne.s32.totalorder %s160, %s161
      %p170 = scmp.eq.s32.totalorder %s24, 0
      %p171 = por %p169, %p170
      %p172 = scmp.ne.s32.totalorder %s160, %s161
      %p173 = scmp.eq.s32.totalorder %s25, 1
      %p174 = por %p172, %p173
      %p176 = scmp.ne.s32.totalorder %s161, %s175
      %p177 = scmp.eq.s32.totalorder %s25, 0
      %p178 = por %p176, %p177
      %s180 = sadd.s32 %s179, 1
      %p183 = scmp.eq.s32.totalorder %s19, 1
      %p184 = scmp.ne.s32.totalorder %s179, %s181
      %p185 = scmp.eq.s32.totalorder %s19, 0
      %p186 = por %p184, %p185
      %p187 = scmp.ne.s32.totalorder %s179, %s181
      %p188 = scmp.eq.s32.totalorder %s24, 1
      %p189 = por %p187, %p188
      %p190 = scmp.ne.s32.totalorder %s181, %s182
      %p191 = scmp.eq.s32.totalorder %s24, 0
      %p192 = por %p190, %p191
      %p193 = scmp.ne.s32.totalorder %s181, %s182
      %p194 = scmp.eq.s32.totalorder %s25, 1
      %p195 = por %p193, %p194
      %p197 = scmp.ne.s32.totalorder %s182, %s196
      %p198 = scmp.eq.s32.totalorder %s25, 0
      %p199 = por %p197, %p198
      %s201 = sadd.s32 %s200, 1
      %p204 = scmp.eq.s32.totalorder %s19, 1
      %p205 = scmp.ne.s32.totalorder %s200, %s202
      %p206 = scmp.eq.s32.totalorder %s19, 0
      %p207 = por %p205, %p206
      %p208 = scmp.ne.s32.totalorder %s200, %s202
      %p209 = scmp.eq.s32.totalorder %s24, 1
      %p210 = por %p208, %p209
      %p211 = scmp.ne.s32.totalorder %s202, %s203
      %p212 = scmp.eq.s32.totalorder %s24, 0
      %p213 = por %p211, %p212
      %p214 = scmp.ne.s32.totalorder %s202, %s203
      %p215 = scmp.eq.s32.totalorder %s25, 1
      %p216 = por %p214, %p215
      %p218 = scmp.ne.s32.totalorder %s203, %s217
      %p219 = scmp.eq.s32.totalorder %s25, 0
      %p220 = por %p218, %p219
      %s222 = sadd.s32 %s221, 1
      %p225 = scmp.eq.s32.totalorder %s19, 1
      %p226 = scmp.ne.s32.totalorder %s221, %s223
      %p227 = scmp.eq.s32.totalorder %s19, 0
      %p228 = por %p226, %p227
      %p229 = scmp.ne.s32.totalorder %s221, %s223
      %p230 = scmp.eq.s32.totalorder %s24, 1
      %p231 = por %p229, %p230
      %p232 = scmp.ne.s32.totalorder %s223, %s224
      %p233 = scmp.eq.s32.totalorder %s24, 0
      %p234 = por %p232, %p233
      %p235 = scmp.ne.s32.totalorder %s223, %s224
      %p236 = scmp.eq.s32.totalorder %s25, 1
      %p237 = por %p235, %p236
      %p239 = scmp.ne.s32.totalorder %s224, %s238
      %p240 = scmp.eq.s32.totalorder %s25, 0
      %p241 = por %p239, %p240
      %s242 = ssub.s32 %s19, %s26
      %p243 = scmp.eq.s32.totalorder %s242, 0
      %s245 = sadd.s32 %s244, 1
      %s246 = scalar_select %p243, %s244, %s245
      %p249 = pneg %p243
      %p250 = scmp.eq.s32.totalorder %s19, 1
      %p251 = por %p249, %p250
      %p252 = scmp.ne.s32.totalorder %s244, %s247
      %p253 = scmp.eq.s32.totalorder %s19, 0
      %p254 = por %p252, %p253
      %p255 = scmp.ne.s32.totalorder %s244, %s247
      %p256 = scmp.eq.s32.totalorder %s24, 1
      %p257 = por %p255, %p256
      %p258 = scmp.ne.s32.totalorder %s247, %s248
      %p259 = scmp.eq.s32.totalorder %s24, 0
      %p260 = por %p258, %p259
      %p261 = scmp.ne.s32.totalorder %s247, %s248
      %p262 = scmp.eq.s32.totalorder %s25, 1
      %p263 = por %p261, %p262
      %p265 = scmp.ne.s32.totalorder %s248, %s264
      %p266 = scmp.eq.s32.totalorder %s25, 0
      %p267 = por %p265, %p266
      %p268 = scmp.le.s32.totalorder 1, %s19
      %p269 = scmp.lt.s32.totalorder %s19, 3
      %p270 = pnand %p268, %p269
      %p271 = pneg %p270
      // Predicated region
      $region9: #{rwkv_block_forward.1} parent=5 // pred_check
        _
      $region10: #{rwkv_block_forward.1} parent=5 // pred_check_branch
        %273 = sbr.rel (%p270) target = $region12
      $region11: #{rwkv_block_forward.1} parent=5 // pred_region
        %s274 = ssub.s32 %s19, 1
        // Predicated region
        $region13: #{rwkv_block_forward.1} parent=11 // pred_check
          %p275 = pneg %p66
        $region14: #{rwkv_block_forward.1} parent=11 // pred_check_branch
          %277 = sbr.rel (%p275) target = $region16
        $region15: #{rwkv_block_forward.1} parent=11 // pred_region
          _
        $region16: #{rwkv_block_forward.1} parent=11 // pred_fallthru
          _
        // Predicated region
        $region17: #{rwkv_block_forward.1} parent=11 // pred_check
          %p278 = pneg %p87
        $region18: #{rwkv_block_forward.1} parent=11 // pred_check_branch
          %280 = sbr.rel (%p278) target = $region20
        $region19: #{rwkv_block_forward.1} parent=11 // pred_region
          _
        $region20: #{rwkv_block_forward.1} parent=11 // pred_fallthru
          _
        // Predicated region
        $region21: #{rwkv_block_forward.1} parent=11 // pred_check
          %p281 = pneg %p108
        $region22: #{rwkv_block_forward.1} parent=11 // pred_check_branch
          %283 = sbr.rel (%p281) target = $region24
        $region23: #{rwkv_block_forward.1} parent=11 // pred_region
          _
        $region24: #{rwkv_block_forward.1} parent=11 // pred_fallthru
          _
        // Predicated region
        $region25: #{rwkv_block_forward.1} parent=11 // pred_check
          %p284 = pneg %p129
        $region26: #{rwkv_block_forward.1} parent=11 // pred_check_branch
          %286 = sbr.rel (%p284) target = $region28
        $region27: #{rwkv_block_forward.1} parent=11 // pred_region
          _
        $region28: #{rwkv_block_forward.1} parent=11 // pred_fallthru
          _
        // Predicated region
        $region29: #{rwkv_block_forward.1} parent=11 // pred_check
          %p287 = pneg %p150
        $region30: #{rwkv_block_forward.1} parent=11 // pred_check_branch
          %289 = sbr.rel (%p287) target = $region32
        $region31: #{rwkv_block_forward.1} parent=11 // pred_region
          _
        $region32: #{rwkv_block_forward.1} parent=11 // pred_fallthru
          _
        // Predicated region
        $region33: #{rwkv_block_forward.1} parent=11 // pred_check
          %p290 = pneg %p171
        $region34: #{rwkv_block_forward.1} parent=11 // pred_check_branch
          %292 = sbr.rel (%p290) target = $region36
        $region35: #{rwkv_block_forward.1} parent=11 // pred_region
          _
        $region36: #{rwkv_block_forward.1} parent=11 // pred_fallthru
          _
        // Predicated region
        $region37: #{rwkv_block_forward.1} parent=11 // pred_check
          %p293 = pneg %p192
        $region38: #{rwkv_block_forward.1} parent=11 // pred_check_branch
          %295 = sbr.rel (%p293) target = $region40
        $region39: #{rwkv_block_forward.1} parent=11 // pred_region
          _
        $region40: #{rwkv_block_forward.1} parent=11 // pred_fallthru
          _
        // Predicated region
        $region41: #{rwkv_block_forward.1} parent=11 // pred_check
          %p296 = pneg %p213
        $region42: #{rwkv_block_forward.1} parent=11 // pred_check_branch
          %298 = sbr.rel (%p296) target = $region44
        $region43: #{rwkv_block_forward.1} parent=11 // pred_region
          _
        $region44: #{rwkv_block_forward.1} parent=11 // pred_fallthru
          _
        // Predicated region
        $region45: #{rwkv_block_forward.1} parent=11 // pred_check
          %p299 = pneg %p234
        $region46: #{rwkv_block_forward.1} parent=11 // pred_check_branch
          %301 = sbr.rel (%p299) target = $region48
        $region47: #{rwkv_block_forward.1} parent=11 // pred_region
          _
        $region48: #{rwkv_block_forward.1} parent=11 // pred_fallthru
          _
      $region12: #{rwkv_block_forward.1} parent=5 // pred_fallthru
        _
      %p302 = scmp.lt.s32.totalorder %s19, 2
      // Predicated region
      $region49: #{rwkv_block_forward.1} parent=5 // pred_check
        %p303 = pneg %p302
      $region50: #{rwkv_block_forward.1} parent=5 // pred_check_branch
        %305 = sbr.rel (%p303) target = $region52
      $region51: #{rwkv_block_forward.1} parent=5 // pred_region
        // Predicated region
        $region53: #{rwkv_block_forward.1} parent=51 // pred_check
          %p306 = pneg %p39
        $region54: #{rwkv_block_forward.1} parent=51 // pred_check_branch
          %308 = sbr.rel (%p306) target = $region56
        $region55: #{rwkv_block_forward.1} parent=51 // pred_region
          %p309 = scmp.lt.s32.totalorder %s19, 1
          %s310 = scalar_select %p309, %s19, 1
          %s311 = smul.addr %s310, 8
          %s312 = scalar_lea.vmem %s0, %s311
        $region56: #{rwkv_block_forward.1} parent=51 // pred_fallthru
          _
      $region52: #{rwkv_block_forward.1} parent=5 // pred_fallthru
        _
      %p313 = scmp.le.s32.totalorder 1, %s19
      %p314 = scmp.lt.s32.totalorder %s19, 3
      %p315 = pnand %p313, %p314
      %p316 = pneg %p315
      // Predicated region
      $region57: #{rwkv_block_forward.1} parent=5 // pred_check
        _
      $region58: #{rwkv_block_forward.1} parent=5 // pred_check_branch
        %318 = sbr.rel (%p315) target = $region60
      $region59: #{rwkv_block_forward.1} parent=5 // pred_region
        %s319 = ssub.s32 %s19, 1
        %p320 = scmp.lt.s32.totalorder %s24, 1
        %s321 = scalar_select %p320, %s24, 1
        %s322 = smul.addr %s321, 8
        %s323 = scalar_lea.vmem %s0, %s322
        %p324 = pneg %p45
        %p325 = pneg %p42
        %p326 = pneg %p66
        %p327 = pneg %p63
        %p328 = pneg %p87
        %p329 = pneg %p84
        %p330 = pneg %p108
        %p331 = pneg %p105
        %p332 = pneg %p129
        %p333 = pneg %p126
        %p334 = pneg %p150
        %p335 = pneg %p147
        %p336 = pneg %p171
        %p337 = pneg %p168
        %p338 = pneg %p192
        %p339 = pneg %p189
        %p340 = pneg %p213
        %p341 = pneg %p210
        %p342 = pneg %p234
        %p343 = pneg %p231
        %p344 = pneg %p260
        %p345 = pneg %p257
        %s346 = sand.u32 %s247, 1
        %s347 = scalar_lea.sflag [#allocation3], %s346
        %s348 = sand.u32 %s247, 1
        %s349 = smul.addr %s348, 8
        %s350 = scalar_lea.vmem [#allocation2], %s349
        %p351 = scmp.lt.s32.totalorder %s24, 1
        %s352 = scalar_select %p351, %s24, 1
        %s353 = smul.addr %s352, 8
        %s354 = scalar_lea.vmem %s0, %s353
        %v356 = vld [vmem:[%s354] sm:$0xff]
        %v357 = vld [vmem:[%s1] sm:$0xff]
        %v358 = vld [vmem:[%s1 + $0x8] sm:$0xff]
        %v359 = vld [vmem:[%s1 + $0x10] sm:$0x3]
        %v360 = vlaneseq
        %v361 = vshrl.u32 %v360, 7
        %v362 = vlaneseq
        %v363 = vand.u32 %v362, 127
        %v364 = vsub.s32 %v361, 1
        %vm365 = vcmp.eq.s32.totalorder %v363, %v364
        %v366 = vsel %vm365, 1, 0
        %v367 = vcvt.s32.f32 %v366
        %vm368 = vcmp.le.s32.totalorder %v363, %v361
        %v369 = vsel %vm368, 1, 0
        %v370 = vcvt.s32.f32 %v369
        %vm371 = vcmask 523264
        %v372 = vsel %vm371, %v356, 0.0
        %373 = vadd.xlane.f32.xlu0 %v372
        %v374 = vpop.xlane.xlu0 %373
        %v375 = vrcp.pop 64.0
        %v376 = vmul.f32 %v374, %v375
        %v377 = vsub.f32 %v356, %v376
        %v378 = vmul.f32 %v377, %v377
        %v379 = vsel %vm371, %v378, 0.0
        %380 = vadd.xlane.f32.xlu0 %v379
        %v381 = vpop.xlane.xlu0 %380
        %v382 = vmul.f32 %v381, %v375
        %v383 = vadd.f32 %v382, 1e-05
        %v384 = vrsqrt.pop %v383
        %v385 = vmul.f32 %v377, %v384
        %v386 = vlaneseq
        %v387 = vshrl.u32 %v386, 7
        %v388 = vsub.s32 0, %v387
        %v389 = vrot.slane %v357, %v388
        %v390 = vmul.f32 %v385, %v389
        %v391 = vlaneseq
        %v392 = vshrl.u32 %v391, 7
        %v393 = vsub.s32 1, %v392
        %v394 = vrot.slane %v357, %v393
        %v395 = vadd.f32 %v390, %v394
        %v396 = vsel %vm371, %v395, 0.0
        %397 = vadd.xlane.f32.xlu0 %v396
        %v398 = vpop.xlane.xlu0 %397
        %v399 = vmul.f32 %v398, %v375
        %v400 = vsub.f32 %v395, %v399
        %v401 = vmul.f32 %v400, %v400
        %v402 = vsel %vm371, %v401, 0.0
        %403 = vadd.xlane.f32.xlu0 %v402
        %v404 = vpop.xlane.xlu0 %403
        %v405 = vmul.f32 %v404, %v375
        %v406 = vadd.f32 %v405, 1e-05
        %v407 = vrsqrt.pop %v406
        %v408 = vmul.f32 %v400, %v407
        %v409 = vlaneseq
        %v410 = vshrl.u32 %v409, 7
        %v411 = vsub.s32 2, %v410
        %v412 = vrot.slane %v357, %v411
        %v413 = vmul.f32 %v408, %v412
        %v414 = vlaneseq
        %v415 = vshrl.u32 %v414, 7
        %v416 = vsub.s32 3, %v415
        %v417 = vrot.slane %v357, %v416
        %v418 = vadd.f32 %v413, %v417
        %v419 = vpack.c.bf16 %v418, %v418
        %v420 = vunpack.c.l.bf16 %v419
        %v421 = vsub.f32 %v418, %v420
        %vm422 = vcmask 64512
        %v424 = vsel %vm422, %v367, 0
        %426 = vmatprep.subr.mxu0 0.0
        %427 = vmatpush1.msra.mxu0 0.0
        %428 = vmatprep.subr.mxu0 0.0
        %429 = vmatpush1.msra.mxu0 0.0
        %430 = vmatprep.subr.mxu0 0.0
        %431 = vmatpush1.msra.mxu0 0.0
        %432 = vmatprep.subr.mxu0 0.0
        %433 = vmatpush1.msra.mxu0 0.0
        %434 = vmatprep.subr.mxu0 0.0
        %435 = vmatpush1.msra.mxu0 0.0
        %436 = vmatprep.subr.mxu0 0.0
        %437 = vmatpush1.msra.mxu0 0.0
        %438 = vmatprep.subr.mxu0 0.0
        %439 = vmatpush1.msra.mxu0 0.0
        %440 = vmatprep.subr.mxu0 0.0
        %441 = vmatpush1.msra.mxu0 0.0
        %442 = vmatprep.subr.mxu0 0.0
        %443 = vmatpush1.msra.mxu0 0.0
        %444 = vmatprep.subr.mxu0 0.0
        %445 = vmatpush1.msra.mxu0 0.0
        %446 = vmatprep.subr.mxu0 0.0
        %447 = vmatpush1.msra.mxu0 0.0
        %448 = vmatprep.subr.mxu0 0.0
        %449 = vmatpush1.msra.mxu0 0.0
        %450 = vmatprep.subr.mxu0 0.0
        %451 = vmatpush1.msra.mxu0 0.0
        %452 = vmatprep.subr.mxu0 0.0
        %453 = vmatpush1.msra.mxu0 0.0
        %454 = vmatprep.subr.mxu0 0.0
        %455 = vmatpush1.msra.mxu0 0.0
        %456 = vmatprep.subr.mxu0 0.0
        %457 = vmatpush1.msra.mxu0 %v421
        %458 = vmatprep.subr.mxu0 0.0
        %459 = vmatpush2.msra.mxu0 0.0
        %460 = vmatprep.subr.mxu0 0.0
        %461 = vmatpush2.msra.mxu0 0.0
        %462 = vmatprep.subr.mxu0 0.0
        %463 = vmatpush2.msra.mxu0 0.0
        %464 = vmatprep.subr.mxu0 0.0
        %465 = vmatpush2.msra.mxu0 0.0
        %466 = vmatprep.subr.mxu0 0.0
        %467 = vmatpush2.msra.mxu0 0.0
        %468 = vmatprep.subr.mxu0 0.0
        %469 = vmatpush2.msra.mxu0 0.0
        %470 = vmatprep.subr.mxu0 0.0
        %471 = vmatpush2.msra.mxu0 0.0
        %472 = vmatprep.subr.mxu0 0.0
        %473 = vmatpush2.msra.mxu0 0.0
        %474 = vmatprep.subr.mxu0 0.0
        %475 = vmatpush2.msra.mxu0 0.0
        %476 = vmatprep.subr.mxu0 0.0
        %477 = vmatpush2.msra.mxu0 0.0
        %478 = vmatprep.subr.mxu0 0.0
        %479 = vmatpush2.msra.mxu0 0.0
        %480 = vmatprep.subr.mxu0 0.0
        %481 = vmatpush2.msra.mxu0 0.0
        %482 = vmatprep.subr.mxu0 0.0
        %483 = vmatpush2.msra.mxu0 0.0
        %484 = vmatprep.subr.mxu0 0.0
        %485 = vmatpush2.msra.mxu0 0.0
        %486 = vmatprep.subr.mxu0 0.0
        %487 = vmatpush2.msra.mxu0 0.0
        %488 = vmatprep.subr.mxu0 0.0
        %489 = vmatpush2.msra.mxu0 0.0
        %490 = vmatprep.mubr.f32.mxu0 0.0
        %491 = vmatmul.mubr.f32.gmra.mxu0 %v424
        %v492 = vpop.f32.mrf.mxu0
        %v493 = vadd.f32 0.0, %v492
        %v494 = vpop.f32.mrf.mxu0
        %495 = vdwg.mxu0
        %496 = vmatprep.subr.mxu0 0.0
        %497 = vmatpush1.msra.mxu0 0.0
        %498 = vmatprep.subr.mxu0 0.0
        %499 = vmatpush1.msra.mxu0 0.0
        %500 = vmatprep.subr.mxu0 0.0
        %501 = vmatpush1.msra.mxu0 0.0
        %502 = vmatprep.subr.mxu0 0.0
        %503 = vmatpush1.msra.mxu0 0.0
        %504 = vmatprep.subr.mxu0 0.0
        %505 = vmatpush1.msra.mxu0 0.0
        %506 = vmatprep.subr.mxu0 0.0
        %507 = vmatpush1.msra.mxu0 0.0
        %508 = vmatprep.subr.mxu0 0.0
        %509 = vmatpush1.msra.mxu0 0.0
        %510 = vmatprep.subr.mxu0 0.0
        %511 = vmatpush1.msra.mxu0 0.0
        %512 = vmatprep.subr.mxu0 0.0
        %513 = vmatpush1.msra.mxu0 0.0
        %514 = vmatprep.subr.mxu0 0.0
        %515 = vmatpush1.msra.mxu0 0.0
        %516 = vmatprep.subr.mxu0 0.0
        %517 = vmatpush1.msra.mxu0 0.0
        %518 = vmatprep.subr.mxu0 0.0
        %519 = vmatpush1.msra.mxu0 0.0
        %520 = vmatprep.subr.mxu0 0.0
        %521 = vmatpush1.msra.mxu0 0.0
        %522 = vmatprep.subr.mxu0 0.0
        %523 = vmatpush1.msra.mxu0 0.0
        %524 = vmatprep.subr.mxu0 0.0
        %525 = vmatpush1.msra.mxu0 0.0
        %526 = vmatprep.subr.mxu0 0.0
        %527 = vmatpush1.msra.mxu0 %v420
        %528 = vmatprep.subr.mxu0 0.0
        %529 = vmatpush2.msra.mxu0 0.0
        %530 = vmatprep.subr.mxu0 0.0
        %531 = vmatpush2.msra.mxu0 0.0
        %532 = vmatprep.subr.mxu0 0.0
        %533 = vmatpush2.msra.mxu0 0.0
        %534 = vmatprep.subr.mxu0 0.0
        %535 = vmatpush2.msra.mxu0 0.0
        %536 = vmatprep.subr.mxu0 0.0
        %537 = vmatpush2.msra.mxu0 0.0
        %538 = vmatprep.subr.mxu0 0.0
        %539 = vmatpush2.msra.mxu0 0.0
        %540 = vmatprep.subr.mxu0 0.0
        %541 = vmatpush2.msra.mxu0 0.0
        %542 = vmatprep.subr.mxu0 0.0
        %543 = vmatpush2.msra.mxu0 0.0
        %544 = vmatprep.subr.mxu0 0.0
        %545 = vmatpush2.msra.mxu0 0.0
        %546 = vmatprep.subr.mxu0 0.0
        %547 = vmatpush2.msra.mxu0 0.0
        %548 = vmatprep.subr.mxu0 0.0
        %549 = vmatpush2.msra.mxu0 0.0
        %550 = vmatprep.subr.mxu0 0.0
        %551 = vmatpush2.msra.mxu0 0.0
        %552 = vmatprep.subr.mxu0 0.0
        %553 = vmatpush2.msra.mxu0 0.0
        %554 = vmatprep.subr.mxu0 0.0
        %555 = vmatpush2.msra.mxu0 0.0
        %556 = vmatprep.subr.mxu0 0.0
        %557 = vmatpush2.msra.mxu0 0.0
        %558 = vmatprep.subr.mxu0 0.0
        %559 = vmatpush2.msra.mxu0 0.0
        %560 = vmatprep.mubr.f32.mxu0 0.0
        %561 = vmatmul.mubr.f32.gmra.mxu0 %v424
        %v562 = vpop.f32.mrf.mxu0
        %v563 = vadd.f32 %v493, %v562
        %v564 = vpop.f32.mrf.mxu0
        %565 = vdwg.mxu0
        %v566 = vsub.f32 %v563, %v418
        %v567 = vlaneseq
        %v568 = vshrl.u32 %v567, 7
        %v569 = vsub.s32 6, %v568
        %v570 = vrot.slane %v357, %v569
        %v571 = vmul.f32 %v566, %v570
        %v572 = vadd.f32 %v418, %v571
        %v573 = vld [vmem:[%s2] sm:$0xff]
        %v574 = vld [vmem:[%s2 + $0x8] sm:$0xff]
        %v575 = vld [vmem:[%s2 + $0x10] sm:$0xff]
        %v576 = vld [vmem:[%s2 + $0x18] sm:$0xff]
        %v577 = vld [vmem:[%s2 + $0x20] sm:$0xff]
        %v578 = vld [vmem:[%s2 + $0x28] sm:$0xff]
        %v579 = vld [vmem:[%s2 + $0x30] sm:$0xff]
        %v580 = vld [vmem:[%s2 + $0x38] sm:$0xff]
        %v581 = vpack.c.bf16 %v572, %v572
        %v590 = vunpack.c.l.b16 %v573
        %v591 = vunpack.c.h.b16 %v573
        %v592 = vunpack.c.l.b16 %v574
        %v593 = vunpack.c.h.b16 %v574
        %v594 = vunpack.c.l.b16 %v575
        %v595 = vunpack.c.h.b16 %v575
        %v596 = vunpack.c.l.b16 %v576
        %v597 = vunpack.c.h.b16 %v576
        %v598 = vunpack.c.l.b16 %v577
        %v599 = vunpack.c.h.b16 %v577
        %v600 = vunpack.c.l.b16 %v578
        %v601 = vunpack.c.h.b16 %v578
        %v602 = vunpack.c.l.b16 %v579
        %v603 = vunpack.c.h.b16 %v579
        %v604 = vunpack.c.l.b16 %v580
        %v605 = vunpack.c.h.b16 %v580
        %v606 = vpack.c.b16 %v592, %v590
        %v607 = vpack.c.b16 %v593, %v591
        %v608 = vpack.c.b16 %v596, %v594
        %v609 = vpack.c.b16 %v597, %v595
        %v610 = vpack.c.b16 %v600, %v598
        %v611 = vpack.c.b16 %v601, %v599
        %v612 = vpack.c.b16 %v604, %v602
        %v613 = vpack.c.b16 %v605, %v603
        %v623 = vsel %vm371, %v581, 0
        %625 = vmatprep.subr.bf16.mxu0 0
        %626 = vmatpush1.bf16.msra.mxu0 0
        %627 = vmatprep.subr.bf16.mxu0 0
        %628 = vmatpush1.bf16.msra.mxu0 0
        %629 = vmatprep.subr.bf16.mxu0 0
        %630 = vmatpush1.bf16.msra.mxu0 0
        %631 = vmatprep.subr.bf16.mxu0 0
        %632 = vmatpush1.bf16.msra.mxu0 0
        %633 = vmatprep.subr.bf16.mxu0 %v613
        %634 = vmatpush1.bf16.msra.mxu0 %v612
        %635 = vmatprep.subr.bf16.mxu0 %v611
        %636 = vmatpush1.bf16.msra.mxu0 %v610
        %637 = vmatprep.subr.bf16.mxu0 %v609
        %638 = vmatpush1.bf16.msra.mxu0 %v608
        %639 = vmatprep.subr.bf16.mxu0 %v607
        %640 = vmatpush1.bf16.msra.mxu0 %v606
        %641 = vmatprep.subr.bf16.mxu0 0
        %642 = vmatpush2.bf16.msra.mxu0 0
        %643 = vmatprep.subr.bf16.mxu0 0
        %644 = vmatpush2.bf16.msra.mxu0 0
        %645 = vmatprep.subr.bf16.mxu0 0
        %646 = vmatpush2.bf16.msra.mxu0 0
        %647 = vmatprep.subr.bf16.mxu0 0
        %648 = vmatpush2.bf16.msra.mxu0 0
        %649 = vmatprep.subr.bf16.mxu0 0
        %650 = vmatpush2.bf16.msra.mxu0 0
        %651 = vmatprep.subr.bf16.mxu0 0
        %652 = vmatpush2.bf16.msra.mxu0 0
        %653 = vmatprep.subr.bf16.mxu0 0
        %654 = vmatpush2.bf16.msra.mxu0 0
        %655 = vmatprep.subr.bf16.mxu0 0
        %656 = vmatpush2.bf16.msra.mxu0 0
        %657 = vmatprep.mubr.bf16.mxu0 0
        %658 = vmatmul.mubr.bf16.gmra.mxu0 %v623
        %v659 = vpop.f32.mrf.mxu0
        %v660 = vadd.f32 0.0, %v659
        %v661 = vpop.f32.mrf.mxu0
        %v662 = vadd.f32 0.0, %v661
        %v663 = vpop.f32.mrf.mxu0
        %v664 = vpop.f32.mrf.mxu0
        %665 = vdwg.mxu0
        %v666 = vtanh.pop %v660
        %v667 = vtanh.pop %v662
        %v668 = vld [vmem:[%s3] sm:$0xf]
        %v669 = vld [vmem:[%s3 + $0x4] sm:$0xf]
        %v670 = vld [vmem:[%s3 + $0x8] sm:$0xf]
        %v671 = vld [vmem:[%s3 + $0xc] sm:$0xf]
        %v672 = vld [vmem:[%s3 + $0x10] sm:$0xf]
        %v673 = vld [vmem:[%s3 + $0x14] sm:$0xf]
        %v674 = vld [vmem:[%s3 + $0x18] sm:$0xf]
        %v675 = vld [vmem:[%s3 + $0x1c] sm:$0xf]
        %v676 = vld [vmem:[%s3 + $0x20] sm:$0xf]
        %v677 = vld [vmem:[%s3 + $0x24] sm:$0xf]
        %v678 = vld [vmem:[%s3 + $0x28] sm:$0xf]
        %v679 = vld [vmem:[%s3 + $0x2c] sm:$0xf]
        %v680 = vld [vmem:[%s3 + $0x30] sm:$0xf]
        %v681 = vld [vmem:[%s3 + $0x34] sm:$0xf]
        %v682 = vld [vmem:[%s3 + $0x38] sm:$0xf]
        %v683 = vld [vmem:[%s3 + $0x3c] sm:$0xf]
        %v684 = vld [vmem:[%s3 + $0x40] sm:$0xf]
        %v685 = vld [vmem:[%s3 + $0x44] sm:$0xf]
        %v686 = vld [vmem:[%s3 + $0x48] sm:$0xf]
        %v687 = vld [vmem:[%s3 + $0x4c] sm:$0xf]
        %v688 = vpack.c.bf16 %v666, %v666
        %v689 = vpack.c.bf16 %v667, %v667
        %v710 = vunpack.c.l.b16 %v668
        %v711 = vunpack.c.l.b16 %v669
        %v712 = vunpack.c.l.b16 %v670
        %v713 = vunpack.c.l.b16 %v671
        %v714 = vunpack.c.l.b16 %v672
        %v715 = vunpack.c.l.b16 %v673
        %v716 = vunpack.c.l.b16 %v674
        %v717 = vunpack.c.l.b16 %v675
        %v718 = vunpack.c.l.b16 %v676
        %v719 = vunpack.c.l.b16 %v677
        %v720 = vunpack.c.l.b16 %v678
        %v721 = vunpack.c.l.b16 %v679
        %v722 = vunpack.c.l.b16 %v680
        %v723 = vunpack.c.l.b16 %v681
        %v724 = vunpack.c.l.b16 %v682
        %v725 = vunpack.c.l.b16 %v683
        %v726 = vunpack.c.l.b16 %v684
        %v727 = vunpack.c.l.b16 %v685
        %v728 = vunpack.c.l.b16 %v686
        %v729 = vunpack.c.l.b16 %v687
        %v730 = vpack.c.b16 %v711, %v710
        %v731 = vpack.c.b16 %v713, %v712
        %v732 = vpack.c.b16 %v715, %v714
        %v733 = vpack.c.b16 %v717, %v716
        %v734 = vpack.c.b16 %v719, %v718
        %v735 = vpack.c.b16 %v721, %v720
        %v736 = vpack.c.b16 %v723, %v722
        %v737 = vpack.c.b16 %v725, %v724
        %v738 = vpack.c.b16 %v727, %v726
        %v739 = vpack.c.b16 %v729, %v728
        %vm750 = vcmask 261120
        %v752 = vsel %vm750, %v689, 0
        %754 = vmatprep.subr.bf16.mxu0 0
        %755 = vmatpush1.bf16.msra.mxu0 %v737
        %756 = vmatprep.subr.bf16.mxu0 0
        %757 = vmatpush1.bf16.msra.mxu0 %v736
        %758 = vmatprep.subr.bf16.mxu0 0
        %759 = vmatpush1.bf16.msra.mxu0 %v735
        %760 = vmatprep.subr.bf16.mxu0 0
        %761 = vmatpush1.bf16.msra.mxu0 %v734
        %762 = vmatprep.subr.bf16.mxu0 0
        %763 = vmatpush1.bf16.msra.mxu0 %v733
        %764 = vmatprep.subr.bf16.mxu0 0
        %765 = vmatpush1.bf16.msra.mxu0 %v732
        %766 = vmatprep.subr.bf16.mxu0 0
        %767 = vmatpush1.bf16.msra.mxu0 %v731
        %768 = vmatprep.subr.bf16.mxu0 0
        %769 = vmatpush1.bf16.msra.mxu0 %v730
        %770 = vmatprep.subr.bf16.mxu0 0
        %771 = vmatpush2.bf16.msra.mxu0 0
        %772 = vmatprep.subr.bf16.mxu0 0
        %773 = vmatpush2.bf16.msra.mxu0 0
        %774 = vmatprep.subr.bf16.mxu0 0
        %775 = vmatpush2.bf16.msra.mxu0 0
        %776 = vmatprep.subr.bf16.mxu0 0
        %777 = vmatpush2.bf16.msra.mxu0 0
        %778 = vmatprep.subr.bf16.mxu0 0
        %779 = vmatpush2.bf16.msra.mxu0 0
        %780 = vmatprep.subr.bf16.mxu0 0
        %781 = vmatpush2.bf16.msra.mxu0 0
        %782 = vmatprep.subr.bf16.mxu0 0
        %783 = vmatpush2.bf16.msra.mxu0 %v739
        %784 = vmatprep.subr.bf16.mxu0 0
        %785 = vmatpush2.bf16.msra.mxu0 %v738
        %786 = vmatprep.mubr.bf16.mxu0 %v752
        %787 = vmatmul.mubr.bf16.gmra.mxu0 %v688
        %v788 = vpop.f32.mrf.mxu0
        %v789 = vadd.f32 0.0, %v788
        %v790 = vpop.f32.mrf.mxu0
        %v791 = vpop.f32.mrf.mxu0
        %v792 = vpop.f32.mrf.mxu0
        %793 = vdwg.mxu0
        %v794 = vlaneseq
        %v795 = vshrl.u32 %v794, 7
        %v796 = vsub.s32 5, %v795
        %v797 = vrot.slane %v358, %v796
        %v798 = vadd.f32 %v797, %v789
        %v799 = vmul.f32 %v566, %v798
        %v800 = vadd.f32 %v418, %v799
        %v801 = vld [vmem:[%s4] sm:$0xf]
        %v802 = vld [vmem:[%s4 + $0x4] sm:$0xf]
        %v803 = vld [vmem:[%s4 + $0x8] sm:$0xf]
        %v804 = vld [vmem:[%s4 + $0xc] sm:$0xf]
        %v805 = vld [vmem:[%s4 + $0x10] sm:$0xf]
        %v806 = vld [vmem:[%s4 + $0x14] sm:$0xf]
        %v807 = vld [vmem:[%s4 + $0x18] sm:$0xf]
        %v808 = vld [vmem:[%s4 + $0x1c] sm:$0xf]
        %v809 = vpack.c.bf16 %v800, %v800
        %v818 = vunpack.c.l.b16 %v801
        %v819 = vunpack.c.l.b16 %v802
        %v820 = vunpack.c.l.b16 %v803
        %v821 = vunpack.c.l.b16 %v804
        %v822 = vunpack.c.l.b16 %v805
        %v823 = vunpack.c.l.b16 %v806
        %v824 = vunpack.c.l.b16 %v807
        %v825 = vunpack.c.l.b16 %v808
        %v826 = vpack.c.b16 %v819, %v818
        %v827 = vpack.c.b16 %v821, %v820
        %v828 = vpack.c.b16 %v823, %v822
        %v829 = vpack.c.b16 %v825, %v824
        %v835 = vsel %vm371, %v809, 0
        %837 = vmatprep.subr.bf16.mxu0 0
        %838 = vmatpush1.bf16.msra.mxu0 0
        %839 = vmatprep.subr.bf16.mxu0 0
        %840 = vmatpush1.bf16.msra.mxu0 0
        %841 = vmatprep.subr.bf16.mxu0 0
        %842 = vmatpush1.bf16.msra.mxu0 0
        %843 = vmatprep.subr.bf16.mxu0 0
        %844 = vmatpush1.bf16.msra.mxu0 0
        %845 = vmatprep.subr.bf16.mxu0 0
        %846 = vmatpush1.bf16.msra.mxu0 %v829
        %847 = vmatprep.subr.bf16.mxu0 0
        %848 = vmatpush1.bf16.msra.mxu0 %v828
        %849 = vmatprep.subr.bf16.mxu0 0
        %850 = vmatpush1.bf16.msra.mxu0 %v827
        %851 = vmatprep.subr.bf16.mxu0 0
        %852 = vmatpush1.bf16.msra.mxu0 %v826
        %853 = vmatprep.subr.bf16.mxu0 0
        %854 = vmatpush2.bf16.msra.mxu0 0
        %855 = vmatprep.subr.bf16.mxu0 0
        %856 = vmatpush2.bf16.msra.mxu0 0
        %857 = vmatprep.subr.bf16.mxu0 0
        %858 = vmatpush2.bf16.msra.mxu0 0
        %859 = vmatprep.subr.bf16.mxu0 0
        %860 = vmatpush2.bf16.msra.mxu0 0
        %861 = vmatprep.subr.bf16.mxu0 0
        %862 = vmatpush2.bf16.msra.mxu0 0
        %863 = vmatprep.subr.bf16.mxu0 0
        %864 = vmatpush2.bf16.msra.mxu0 0
        %865 = vmatprep.subr.bf16.mxu0 0
        %866 = vmatpush2.bf16.msra.mxu0 0
        %867 = vmatprep.subr.bf16.mxu0 0
        %868 = vmatpush2.bf16.msra.mxu0 0
        %869 = vmatprep.mubr.bf16.mxu0 0
        %870 = vmatmul.mubr.bf16.gmra.mxu0 %v835
        %v871 = vpop.f32.mrf.mxu0
        %v872 = vadd.f32 0.0, %v871
        %v873 = vpop.f32.mrf.mxu0
        %v874 = vpop.f32.mrf.mxu0
        %v875 = vpop.f32.mrf.mxu0
        %876 = vdwg.mxu0
        %s877 = scalar_lea.vmem %s3, 80
        %v878 = vld [vmem:[%s877] sm:$0xf]
        %v879 = vld [vmem:[%s877 + $0x4] sm:$0xf]
        %v880 = vld [vmem:[%s877 + $0x8] sm:$0xf]
        %v881 = vld [vmem:[%s877 + $0xc] sm:$0xf]
        %v882 = vld [vmem:[%s877 + $0x10] sm:$0xf]
        %v883 = vld [vmem:[%s877 + $0x14] sm:$0xf]
        %v884 = vld [vmem:[%s877 + $0x18] sm:$0xf]
        %v885 = vld [vmem:[%s877 + $0x1c] sm:$0xf]
        %v886 = vld [vmem:[%s877 + $0x20] sm:$0xf]
        %v887 = vld [vmem:[%s877 + $0x24] sm:$0xf]
        %v888 = vld [vmem:[%s877 + $0x28] sm:$0xf]
        %v889 = vld [vmem:[%s877 + $0x2c] sm:$0xf]
        %v890 = vld [vmem:[%s877 + $0x30] sm:$0xf]
        %v891 = vld [vmem:[%s877 + $0x34] sm:$0xf]
        %v892 = vld [vmem:[%s877 + $0x38] sm:$0xf]
        %v893 = vld [vmem:[%s877 + $0x3c] sm:$0xf]
        %v894 = vld [vmem:[%s877 + $0x40] sm:$0xf]
        %v895 = vld [vmem:[%s877 + $0x44] sm:$0xf]
        %v896 = vld [vmem:[%s877 + $0x48] sm:$0xf]
        %v897 = vld [vmem:[%s877 + $0x4c] sm:$0xf]
        %v918 = vunpack.c.l.b16 %v878
        %v919 = vunpack.c.l.b16 %v879
        %v920 = vunpack.c.l.b16 %v880
        %v921 = vunpack.c.l.b16 %v881
        %v922 = vunpack.c.l.b16 %v882
        %v923 = vunpack.c.l.b16 %v883
        %v924 = vunpack.c.l.b16 %v884
        %v925 = vunpack.c.l.b16 %v885
        %v926 = vunpack.c.l.b16 %v886
        %v927 = vunpack.c.l.b16 %v887
        %v928 = vunpack.c.l.b16 %v888
        %v929 = vunpack.c.l.b16 %v889
        %v930 = vunpack.c.l.b16 %v890
        %v931 = vunpack.c.l.b16 %v891
        %v932 = vunpack.c.l.b16 %v892
        %v933 = vunpack.c.l.b16 %v893
        %v934 = vunpack.c.l.b16 %v894
        %v935 = vunpack.c.l.b16 %v895
        %v936 = vunpack.c.l.b16 %v896
        %v937 = vunpack.c.l.b16 %v897
        %v938 = vpack.c.b16 %v919, %v918
        %v939 = vpack.c.b16 %v921, %v920
        %v940 = vpack.c.b16 %v923, %v922
        %v941 = vpack.c.b16 %v925, %v924
        %v942 = vpack.c.b16 %v927, %v926
        %v943 = vpack.c.b16 %v929, %v928
        %v944 = vpack.c.b16 %v931, %v930
        %v945 = vpack.c.b16 %v933, %v932
        %v946 = vpack.c.b16 %v935, %v934
        %v947 = vpack.c.b16 %v937, %v936
        %958 = vmatprep.subr.bf16.mxu0 0
        %959 = vmatpush1.bf16.msra.mxu0 %v945
        %960 = vmatprep.subr.bf16.mxu0 0
        %961 = vmatpush1.bf16.msra.mxu0 %v944
        %962 = vmatprep.subr.bf16.mxu0 0
        %963 = vmatpush1.bf16.msra.mxu0 %v943
        %964 = vmatprep.subr.bf16.mxu0 0
        %965 = vmatpush1.bf16.msra.mxu0 %v942
        %966 = vmatprep.subr.bf16.mxu0 0
        %967 = vmatpush1.bf16.msra.mxu0 %v941
        %968 = vmatprep.subr.bf16.mxu0 0
        %969 = vmatpush1.bf16.msra.mxu0 %v940
        %970 = vmatprep.subr.bf16.mxu0 0
        %971 = vmatpush1.bf16.msra.mxu0 %v939
        %972 = vmatprep.subr.bf16.mxu0 0
        %973 = vmatpush1.bf16.msra.mxu0 %v938
        %974 = vmatprep.subr.bf16.mxu0 0
        %975 = vmatpush2.bf16.msra.mxu0 0
        %976 = vmatprep.subr.bf16.mxu0 0
        %977 = vmatpush2.bf16.msra.mxu0 0
        %978 = vmatprep.subr.bf16.mxu0 0
        %979 = vmatpush2.bf16.msra.mxu0 0
        %980 = vmatprep.subr.bf16.mxu0 0
        %981 = vmatpush2.bf16.msra.mxu0 0
        %982 = vmatprep.subr.bf16.mxu0 0
        %983 = vmatpush2.bf16.msra.mxu0 0
        %984 = vmatprep.subr.bf16.mxu0 0
        %985 = vmatpush2.bf16.msra.mxu0 0
        %986 = vmatprep.subr.bf16.mxu0 0
        %987 = vmatpush2.bf16.msra.mxu0 %v947
        %988 = vmatprep.subr.bf16.mxu0 0
        %989 = vmatpush2.bf16.msra.mxu0 %v946
        %990 = vmatprep.mubr.bf16.mxu0 %v752
        %991 = vmatmul.mubr.bf16.gmra.mxu0 %v688
        %v992 = vpop.f32.mrf.mxu0
        %v993 = vadd.f32 0.0, %v992
        %v994 = vpop.f32.mrf.mxu0
        %v995 = vpop.f32.mrf.mxu0
        %v996 = vpop.f32.mrf.mxu0
        %997 = vdwg.mxu0
        %v998 = vlaneseq
        %v999 = vshrl.u32 %v998, 7
        %v1000 = vsub.s32 6, %v999
        %v1001 = vrot.slane %v358, %v1000
        %v1002 = vadd.f32 %v1001, %v993
        %v1003 = vmul.f32 %v566, %v1002
        %v1004 = vadd.f32 %v418, %v1003
        %s1005 = scalar_lea.vmem %s4, 32
        %v1006 = vld [vmem:[%s1005] sm:$0xf]
        %v1007 = vld [vmem:[%s1005 + $0x4] sm:$0xf]
        %v1008 = vld [vmem:[%s1005 + $0x8] sm:$0xf]
        %v1009 = vld [vmem:[%s1005 + $0xc] sm:$0xf]
        %v1010 = vld [vmem:[%s1005 + $0x10] sm:$0xf]
        %v1011 = vld [vmem:[%s1005 + $0x14] sm:$0xf]
        %v1012 = vld [vmem:[%s1005 + $0x18] sm:$0xf]
        %v1013 = vld [vmem:[%s1005 + $0x1c] sm:$0xf]
        %v1014 = vpack.c.bf16 %v1004, %v1004
        %v1023 = vunpack.c.l.b16 %v1006
        %v1024 = vunpack.c.l.b16 %v1007
        %v1025 = vunpack.c.l.b16 %v1008
        %v1026 = vunpack.c.l.b16 %v1009
        %v1027 = vunpack.c.l.b16 %v1010
        %v1028 = vunpack.c.l.b16 %v1011
        %v1029 = vunpack.c.l.b16 %v1012
        %v1030 = vunpack.c.l.b16 %v1013
        %v1031 = vpack.c.b16 %v1024, %v1023
        %v1032 = vpack.c.b16 %v1026, %v1025
        %v1033 = vpack.c.b16 %v1028, %v1027
        %v1034 = vpack.c.b16 %v1030, %v1029
        %v1040 = vsel %vm371, %v1014, 0
        %1042 = vmatprep.subr.bf16.mxu0 0
        %1043 = vmatpush1.bf16.msra.mxu0 0
        %1044 = vmatprep.subr.bf16.mxu0 0
        %1045 = vmatpush1.bf16.msra.mxu0 0
        %1046 = vmatprep.subr.bf16.mxu0 0
        %1047 = vmatpush1.bf16.msra.mxu0 0
        %1048 = vmatprep.subr.bf16.mxu0 0
        %1049 = vmatpush1.bf16.msra.mxu0 0
        %1050 = vmatprep.subr.bf16.mxu0 0
        %1051 = vmatpush1.bf16.msra.mxu0 %v1034
        %1052 = vmatprep.subr.bf16.mxu0 0
        %1053 = vmatpush1.bf16.msra.mxu0 %v1033
        %1054 = vmatprep.subr.bf16.mxu0 0
        %1055 = vmatpush1.bf16.msra.mxu0 %v1032
        %1056 = vmatprep.subr.bf16.mxu0 0
        %1057 = vmatpush1.bf16.msra.mxu0 %v1031
        %1058 = vmatprep.subr.bf16.mxu0 0
        %1059 = vmatpush2.bf16.msra.mxu0 0
        %1060 = vmatprep.subr.bf16.mxu0 0
        %1061 = vmatpush2.bf16.msra.mxu0 0
        %1062 = vmatprep.subr.bf16.mxu0 0
        %1063 = vmatpush2.bf16.msra.mxu0 0
        %1064 = vmatprep.subr.bf16.mxu0 0
        %1065 = vmatpush2.bf16.msra.mxu0 0
        %1066 = vmatprep.subr.bf16.mxu0 0
        %1067 = vmatpush2.bf16.msra.mxu0 0
        %1068 = vmatprep.subr.bf16.mxu0 0
        %1069 = vmatpush2.bf16.msra.mxu0 0
        %1070 = vmatprep.subr.bf16.mxu0 0
        %1071 = vmatpush2.bf16.msra.mxu0 0
        %1072 = vmatprep.subr.bf16.mxu0 0
        %1073 = vmatpush2.bf16.msra.mxu0 0
        %1074 = vmatprep.mubr.bf16.mxu0 0
        %1075 = vmatmul.mubr.bf16.gmra.mxu0 %v1040
        %v1076 = vpop.f32.mrf.mxu0
        %v1077 = vadd.f32 0.0, %v1076
        %v1078 = vpop.f32.mrf.mxu0
        %v1079 = vpop.f32.mrf.mxu0
        %v1080 = vpop.f32.mrf.mxu0
        %1081 = vdwg.mxu0
        %s1082 = scalar_lea.vmem %s3, 160
        %v1083 = vld [vmem:[%s1082] sm:$0xf]
        %v1084 = vld [vmem:[%s1082 + $0x4] sm:$0xf]
        %v1085 = vld [vmem:[%s1082 + $0x8] sm:$0xf]
        %v1086 = vld [vmem:[%s1082 + $0xc] sm:$0xf]
        %v1087 = vld [vmem:[%s1082 + $0x10] sm:$0xf]
        %v1088 = vld [vmem:[%s1082 + $0x14] sm:$0xf]
        %v1089 = vld [vmem:[%s1082 + $0x18] sm:$0xf]
        %v1090 = vld [vmem:[%s1082 + $0x1c] sm:$0xf]
        %v1091 = vld [vmem:[%s1082 + $0x20] sm:$0xf]
        %v1092 = vld [vmem:[%s1082 + $0x24] sm:$0xf]
        %v1093 = vld [vmem:[%s1082 + $0x28] sm:$0xf]
        %v1094 = vld [vmem:[%s1082 + $0x2c] sm:$0xf]
        %v1095 = vld [vmem:[%s1082 + $0x30] sm:$0xf]
        %v1096 = vld [vmem:[%s1082 + $0x34] sm:$0xf]
        %v1097 = vld [vmem:[%s1082 + $0x38] sm:$0xf]
        %v1098 = vld [vmem:[%s1082 + $0x3c] sm:$0xf]
        %v1099 = vld [vmem:[%s1082 + $0x40] sm:$0xf]
        %v1100 = vld [vmem:[%s1082 + $0x44] sm:$0xf]
        %v1101 = vld [vmem:[%s1082 + $0x48] sm:$0xf]
        %v1102 = vld [vmem:[%s1082 + $0x4c] sm:$0xf]
        %v1123 = vunpack.c.l.b16 %v1083
        %v1124 = vunpack.c.l.b16 %v1084
        %v1125 = vunpack.c.l.b16 %v1085
        %v1126 = vunpack.c.l.b16 %v1086
        %v1127 = vunpack.c.l.b16 %v1087
        %v1128 = vunpack.c.l.b16 %v1088
        %v1129 = vunpack.c.l.b16 %v1089
        %v1130 = vunpack.c.l.b16 %v1090
        %v1131 = vunpack.c.l.b16 %v1091
        %v1132 = vunpack.c.l.b16 %v1092
        %v1133 = vunpack.c.l.b16 %v1093
        %v1134 = vunpack.c.l.b16 %v1094
        %v1135 = vunpack.c.l.b16 %v1095
        %v1136 = vunpack.c.l.b16 %v1096
        %v1137 = vunpack.c.l.b16 %v1097
        %v1138 = vunpack.c.l.b16 %v1098
        %v1139 = vunpack.c.l.b16 %v1099
        %v1140 = vunpack.c.l.b16 %v1100
        %v1141 = vunpack.c.l.b16 %v1101
        %v1142 = vunpack.c.l.b16 %v1102
        %v1143 = vpack.c.b16 %v1124, %v1123
        %v1144 = vpack.c.b16 %v1126, %v1125
        %v1145 = vpack.c.b16 %v1128, %v1127
        %v1146 = vpack.c.b16 %v1130, %v1129
        %v1147 = vpack.c.b16 %v1132, %v1131
        %v1148 = vpack.c.b16 %v1134, %v1133
        %v1149 = vpack.c.b16 %v1136, %v1135
        %v1150 = vpack.c.b16 %v1138, %v1137
        %v1151 = vpack.c.b16 %v1140, %v1139
        %v1152 = vpack.c.b16 %v1142, %v1141
        %1163 = vmatprep.subr.bf16.mxu0 0
        %1164 = vmatpush1.bf16.msra.mxu0 %v1150
        %1165 = vmatprep.subr.bf16.mxu0 0
        %1166 = vmatpush1.bf16.msra.mxu0 %v1149
        %1167 = vmatprep.subr.bf16.mxu0 0
        %1168 = vmatpush1.bf16.msra.mxu0 %v1148
        %1169 = vmatprep.subr.bf16.mxu0 0
        %1170 = vmatpush1.bf16.msra.mxu0 %v1147
        %1171 = vmatprep.subr.bf16.mxu0 0
        %1172 = vmatpush1.bf16.msra.mxu0 %v1146
        %1173 = vmatprep.subr.bf16.mxu0 0
        %1174 = vmatpush1.bf16.msra.mxu0 %v1145
        %1175 = vmatprep.subr.bf16.mxu0 0
        %1176 = vmatpush1.bf16.msra.mxu0 %v1144
        %1177 = vmatprep.subr.bf16.mxu0 0
        %1178 = vmatpush1.bf16.msra.mxu0 %v1143
        %1179 = vmatprep.subr.bf16.mxu0 0
        %1180 = vmatpush2.bf16.msra.mxu0 0
        %1181 = vmatprep.subr.bf16.mxu0 0
        %1182 = vmatpush2.bf16.msra.mxu0 0
        %1183 = vmatprep.subr.bf16.mxu0 0
        %1184 = vmatpush2.bf16.msra.mxu0 0
        %1185 = vmatprep.subr.bf16.mxu0 0
        %1186 = vmatpush2.bf16.msra.mxu0 0
        %1187 = vmatprep.subr.bf16.mxu0 0
        %1188 = vmatpush2.bf16.msra.mxu0 0
        %1189 = vmatprep.subr.bf16.mxu0 0
        %1190 = vmatpush2.bf16.msra.mxu0 0
        %1191 = vmatprep.subr.bf16.mxu0 0
        %1192 = vmatpush2.bf16.msra.mxu0 %v1152
        %1193 = vmatprep.subr.bf16.mxu0 0
        %1194 = vmatpush2.bf16.msra.mxu0 %v1151
        %1195 = vmatprep.mubr.bf16.mxu0 %v752
        %1196 = vmatmul.mubr.bf16.gmra.mxu0 %v688
        %v1197 = vpop.f32.mrf.mxu0
        %v1198 = vadd.f32 0.0, %v1197
        %v1199 = vpop.f32.mrf.mxu0
        %v1200 = vpop.f32.mrf.mxu0
        %v1201 = vpop.f32.mrf.mxu0
        %1202 = vdwg.mxu0
        %v1203 = vlaneseq
        %v1204 = vshrl.u32 %v1203, 7
        %v1205 = vsub.s32 7, %v1204
        %v1206 = vrot.slane %v358, %v1205
        %v1207 = vadd.f32 %v1206, %v1198
        %v1208 = vmul.f32 %v566, %v1207
        %v1209 = vadd.f32 %v418, %v1208
        %s1210 = scalar_lea.vmem %s4, 64
        %v1211 = vld [vmem:[%s1210] sm:$0xf]
        %v1212 = vld [vmem:[%s1210 + $0x4] sm:$0xf]
        %v1213 = vld [vmem:[%s1210 + $0x8] sm:$0xf]
        %v1214 = vld [vmem:[%s1210 + $0xc] sm:$0xf]
        %v1215 = vld [vmem:[%s1210 + $0x10] sm:$0xf]
        %v1216 = vld [vmem:[%s1210 + $0x14] sm:$0xf]
        %v1217 = vld [vmem:[%s1210 + $0x18] sm:$0xf]
        %v1218 = vld [vmem:[%s1210 + $0x1c] sm:$0xf]
        %v1219 = vpack.c.bf16 %v1209, %v1209
        %v1228 = vunpack.c.l.b16 %v1211
        %v1229 = vunpack.c.l.b16 %v1212
        %v1230 = vunpack.c.l.b16 %v1213
        %v1231 = vunpack.c.l.b16 %v1214
        %v1232 = vunpack.c.l.b16 %v1215
        %v1233 = vunpack.c.l.b16 %v1216
        %v1234 = vunpack.c.l.b16 %v1217
        %v1235 = vunpack.c.l.b16 %v1218
        %v1236 = vpack.c.b16 %v1229, %v1228
        %v1237 = vpack.c.b16 %v1231, %v1230
        %v1238 = vpack.c.b16 %v1233, %v1232
        %v1239 = vpack.c.b16 %v1235, %v1234
        %v1245 = vsel %vm371, %v1219, 0
        %1247 = vmatprep.subr.bf16.mxu0 0
        %1248 = vmatpush1.bf16.msra.mxu0 0
        %1249 = vmatprep.subr.bf16.mxu0 0
        %1250 = vmatpush1.bf16.msra.mxu0 0
        %1251 = vmatprep.subr.bf16.mxu0 0
        %1252 = vmatpush1.bf16.msra.mxu0 0
        %1253 = vmatprep.subr.bf16.mxu0 0
        %1254 = vmatpush1.bf16.msra.mxu0 0
        %1255 = vmatprep.subr.bf16.mxu0 0
        %1256 = vmatpush1.bf16.msra.mxu0 %v1239
        %1257 = vmatprep.subr.bf16.mxu0 0
        %1258 = vmatpush1.bf16.msra.mxu0 %v1238
        %1259 = vmatprep.subr.bf16.mxu0 0
        %1260 = vmatpush1.bf16.msra.mxu0 %v1237
        %1261 = vmatprep.subr.bf16.mxu0 0
        %1262 = vmatpush1.bf16.msra.mxu0 %v1236
        %1263 = vmatprep.subr.bf16.mxu0 0
        %1264 = vmatpush2.bf16.msra.mxu0 0
        %1265 = vmatprep.subr.bf16.mxu0 0
        %1266 = vmatpush2.bf16.msra.mxu0 0
        %1267 = vmatprep.subr.bf16.mxu0 0
        %1268 = vmatpush2.bf16.msra.mxu0 0
        %1269 = vmatprep.subr.bf16.mxu0 0
        %1270 = vmatpush2.bf16.msra.mxu0 0
        %1271 = vmatprep.subr.bf16.mxu0 0
        %1272 = vmatpush2.bf16.msra.mxu0 0
        %1273 = vmatprep.subr.bf16.mxu0 0
        %1274 = vmatpush2.bf16.msra.mxu0 0
        %1275 = vmatprep.subr.bf16.mxu0 0
        %1276 = vmatpush2.bf16.msra.mxu0 0
        %1277 = vmatprep.subr.bf16.mxu0 0
        %1278 = vmatpush2.bf16.msra.mxu0 0
        %1279 = vmatprep.mubr.bf16.mxu0 0
        %1280 = vmatmul.mubr.bf16.gmra.mxu0 %v1245
        %v1281 = vpop.f32.mrf.mxu0
        %v1282 = vadd.f32 0.0, %v1281
        %v1283 = vpop.f32.mrf.mxu0
        %v1284 = vpop.f32.mrf.mxu0
        %v1285 = vpop.f32.mrf.mxu0
        %1286 = vdwg.mxu0
        %s1287 = scalar_lea.vmem %s3, 240
        %v1288 = vld [vmem:[%s1287] sm:$0xf]
        %v1289 = vld [vmem:[%s1287 + $0x4] sm:$0xf]
        %v1290 = vld [vmem:[%s1287 + $0x8] sm:$0xf]
        %v1291 = vld [vmem:[%s1287 + $0xc] sm:$0xf]
        %v1292 = vld [vmem:[%s1287 + $0x10] sm:$0xf]
        %v1293 = vld [vmem:[%s1287 + $0x14] sm:$0xf]
        %v1294 = vld [vmem:[%s1287 + $0x18] sm:$0xf]
        %v1295 = vld [vmem:[%s1287 + $0x1c] sm:$0xf]
        %v1296 = vld [vmem:[%s1287 + $0x20] sm:$0xf]
        %v1297 = vld [vmem:[%s1287 + $0x24] sm:$0xf]
        %v1298 = vld [vmem:[%s1287 + $0x28] sm:$0xf]
        %v1299 = vld [vmem:[%s1287 + $0x2c] sm:$0xf]
        %v1300 = vld [vmem:[%s1287 + $0x30] sm:$0xf]
        %v1301 = vld [vmem:[%s1287 + $0x34] sm:$0xf]
        %v1302 = vld [vmem:[%s1287 + $0x38] sm:$0xf]
        %v1303 = vld [vmem:[%s1287 + $0x3c] sm:$0xf]
        %v1304 = vld [vmem:[%s1287 + $0x40] sm:$0xf]
        %v1305 = vld [vmem:[%s1287 + $0x44] sm:$0xf]
        %v1306 = vld [vmem:[%s1287 + $0x48] sm:$0xf]
        %v1307 = vld [vmem:[%s1287 + $0x4c] sm:$0xf]
        %v1328 = vunpack.c.l.b16 %v1288
        %v1329 = vunpack.c.l.b16 %v1289
        %v1330 = vunpack.c.l.b16 %v1290
        %v1331 = vunpack.c.l.b16 %v1291
        %v1332 = vunpack.c.l.b16 %v1292
        %v1333 = vunpack.c.l.b16 %v1293
        %v1334 = vunpack.c.l.b16 %v1294
        %v1335 = vunpack.c.l.b16 %v1295
        %v1336 = vunpack.c.l.b16 %v1296
        %v1337 = vunpack.c.l.b16 %v1297
        %v1338 = vunpack.c.l.b16 %v1298
        %v1339 = vunpack.c.l.b16 %v1299
        %v1340 = vunpack.c.l.b16 %v1300
        %v1341 = vunpack.c.l.b16 %v1301
        %v1342 = vunpack.c.l.b16 %v1302
        %v1343 = vunpack.c.l.b16 %v1303
        %v1344 = vunpack.c.l.b16 %v1304
        %v1345 = vunpack.c.l.b16 %v1305
        %v1346 = vunpack.c.l.b16 %v1306
        %v1347 = vunpack.c.l.b16 %v1307
        %v1348 = vpack.c.b16 %v1329, %v1328
        %v1349 = vpack.c.b16 %v1331, %v1330
        %v1350 = vpack.c.b16 %v1333, %v1332
        %v1351 = vpack.c.b16 %v1335, %v1334
        %v1352 = vpack.c.b16 %v1337, %v1336
        %v1353 = vpack.c.b16 %v1339, %v1338
        %v1354 = vpack.c.b16 %v1341, %v1340
        %v1355 = vpack.c.b16 %v1343, %v1342
        %v1356 = vpack.c.b16 %v1345, %v1344
        %v1357 = vpack.c.b16 %v1347, %v1346
        %1368 = vmatprep.subr.bf16.mxu0 0
        %1369 = vmatpush1.bf16.msra.mxu0 %v1355
        %1370 = vmatprep.subr.bf16.mxu0 0
        %1371 = vmatpush1.bf16.msra.mxu0 %v1354
        %1372 = vmatprep.subr.bf16.mxu0 0
        %1373 = vmatpush1.bf16.msra.mxu0 %v1353
        %1374 = vmatprep.subr.bf16.mxu0 0
        %1375 = vmatpush1.bf16.msra.mxu0 %v1352
        %1376 = vmatprep.subr.bf16.mxu0 0
        %1377 = vmatpush1.bf16.msra.mxu0 %v1351
        %1378 = vmatprep.subr.bf16.mxu0 0
        %1379 = vmatpush1.bf16.msra.mxu0 %v1350
        %1380 = vmatprep.subr.bf16.mxu0 0
        %1381 = vmatpush1.bf16.msra.mxu0 %v1349
        %1382 = vmatprep.subr.bf16.mxu0 0
        %1383 = vmatpush1.bf16.msra.mxu0 %v1348
        %1384 = vmatprep.subr.bf16.mxu0 0
        %1385 = vmatpush2.bf16.msra.mxu0 0
        %1386 = vmatprep.subr.bf16.mxu0 0
        %1387 = vmatpush2.bf16.msra.mxu0 0
        %1388 = vmatprep.subr.bf16.mxu0 0
        %1389 = vmatpush2.bf16.msra.mxu0 0
        %1390 = vmatprep.subr.bf16.mxu0 0
        %1391 = vmatpush2.bf16.msra.mxu0 0
        %1392 = vmatprep.subr.bf16.mxu0 0
        %1393 = vmatpush2.bf16.msra.mxu0 0
        %1394 = vmatprep.subr.bf16.mxu0 0
        %1395 = vmatpush2.bf16.msra.mxu0 0
        %1396 = vmatprep.subr.bf16.mxu0 0
        %1397 = vmatpush2.bf16.msra.mxu0 %v1357
        %1398 = vmatprep.subr.bf16.mxu0 0
        %1399 = vmatpush2.bf16.msra.mxu0 %v1356
        %1400 = vmatprep.mubr.bf16.mxu0 %v752
        %1401 = vmatmul.mubr.bf16.gmra.mxu0 %v688
        %v1402 = vpop.f32.mrf.mxu0
        %v1403 = vadd.f32 0.0, %v1402
        %v1404 = vpop.f32.mrf.mxu0
        %v1405 = vpop.f32.mrf.mxu0
        %v1406 = vpop.f32.mrf.mxu0
        %1407 = vdwg.mxu0
        %v1408 = vlaneseq
        %v1409 = vshrl.u32 %v1408, 7
        %v1410 = vsub.s32 0, %v1409
        %v1411 = vrot.slane %v359, %v1410
        %v1412 = vadd.f32 %v1411, %v1403
        %v1413 = vmul.f32 %v566, %v1412
        %v1414 = vadd.f32 %v418, %v1413
        %s1415 = scalar_lea.vmem %s4, 96
        %v1416 = vld [vmem:[%s1415] sm:$0xf]
        %v1417 = vld [vmem:[%s1415 + $0x4] sm:$0xf]
        %v1418 = vld [vmem:[%s1415 + $0x8] sm:$0xf]
        %v1419 = vld [vmem:[%s1415 + $0xc] sm:$0xf]
        %v1420 = vld [vmem:[%s1415 + $0x10] sm:$0xf]
        %v1421 = vld [vmem:[%s1415 + $0x14] sm:$0xf]
        %v1422 = vld [vmem:[%s1415 + $0x18] sm:$0xf]
        %v1423 = vld [vmem:[%s1415 + $0x1c] sm:$0xf]
        %v1424 = vpack.c.bf16 %v1414, %v1414
        %v1433 = vunpack.c.l.b16 %v1416
        %v1434 = vunpack.c.l.b16 %v1417
        %v1435 = vunpack.c.l.b16 %v1418
        %v1436 = vunpack.c.l.b16 %v1419
        %v1437 = vunpack.c.l.b16 %v1420
        %v1438 = vunpack.c.l.b16 %v1421
        %v1439 = vunpack.c.l.b16 %v1422
        %v1440 = vunpack.c.l.b16 %v1423
        %v1441 = vpack.c.b16 %v1434, %v1433
        %v1442 = vpack.c.b16 %v1436, %v1435
        %v1443 = vpack.c.b16 %v1438, %v1437
        %v1444 = vpack.c.b16 %v1440, %v1439
        %v1450 = vsel %vm371, %v1424, 0
        %1452 = vmatprep.subr.bf16.mxu0 0
        %1453 = vmatpush1.bf16.msra.mxu0 0
        %1454 = vmatprep.subr.bf16.mxu0 0
        %1455 = vmatpush1.bf16.msra.mxu0 0
        %1456 = vmatprep.subr.bf16.mxu0 0
        %1457 = vmatpush1.bf16.msra.mxu0 0
        %1458 = vmatprep.subr.bf16.mxu0 0
        %1459 = vmatpush1.bf16.msra.mxu0 0
        %1460 = vmatprep.subr.bf16.mxu0 0
        %1461 = vmatpush1.bf16.msra.mxu0 %v1444
        %1462 = vmatprep.subr.bf16.mxu0 0
        %1463 = vmatpush1.bf16.msra.mxu0 %v1443
        %1464 = vmatprep.subr.bf16.mxu0 0
        %1465 = vmatpush1.bf16.msra.mxu0 %v1442
        %1466 = vmatprep.subr.bf16.mxu0 0
        %1467 = vmatpush1.bf16.msra.mxu0 %v1441
        %1468 = vmatprep.subr.bf16.mxu0 0
        %1469 = vmatpush2.bf16.msra.mxu0 0
        %1470 = vmatprep.subr.bf16.mxu0 0
        %1471 = vmatpush2.bf16.msra.mxu0 0
        %1472 = vmatprep.subr.bf16.mxu0 0
        %1473 = vmatpush2.bf16.msra.mxu0 0
        %1474 = vmatprep.subr.bf16.mxu0 0
        %1475 = vmatpush2.bf16.msra.mxu0 0
        %1476 = vmatprep.subr.bf16.mxu0 0
        %1477 = vmatpush2.bf16.msra.mxu0 0
        %1478 = vmatprep.subr.bf16.mxu0 0
        %1479 = vmatpush2.bf16.msra.mxu0 0
        %1480 = vmatprep.subr.bf16.mxu0 0
        %1481 = vmatpush2.bf16.msra.mxu0 0
        %1482 = vmatprep.subr.bf16.mxu0 0
        %1483 = vmatpush2.bf16.msra.mxu0 0
        %1484 = vmatprep.mubr.bf16.mxu0 0
        %1485 = vmatmul.mubr.bf16.gmra.mxu0 %v1450
        %v1486 = vpop.f32.mrf.mxu0
        %v1487 = vadd.f32 0.0, %v1486
        %v1488 = vpop.f32.mrf.mxu0
        %v1489 = vpop.f32.mrf.mxu0
        %v1490 = vpop.f32.mrf.mxu0
        %1491 = vdwg.mxu0
        %s1492 = scalar_lea.vmem %s3, 320
        %v1493 = vld [vmem:[%s1492] sm:$0xf]
        %v1494 = vld [vmem:[%s1492 + $0x4] sm:$0xf]
        %v1495 = vld [vmem:[%s1492 + $0x8] sm:$0xf]
        %v1496 = vld [vmem:[%s1492 + $0xc] sm:$0xf]
        %v1497 = vld [vmem:[%s1492 + $0x10] sm:$0xf]
        %v1498 = vld [vmem:[%s1492 + $0x14] sm:$0xf]
        %v1499 = vld [vmem:[%s1492 + $0x18] sm:$0xf]
        %v1500 = vld [vmem:[%s1492 + $0x1c] sm:$0xf]
        %v1501 = vld [vmem:[%s1492 + $0x20] sm:$0xf]
        %v1502 = vld [vmem:[%s1492 + $0x24] sm:$0xf]
        %v1503 = vld [vmem:[%s1492 + $0x28] sm:$0xf]
        %v1504 = vld [vmem:[%s1492 + $0x2c] sm:$0xf]
        %v1505 = vld [vmem:[%s1492 + $0x30] sm:$0xf]
        %v1506 = vld [vmem:[%s1492 + $0x34] sm:$0xf]
        %v1507 = vld [vmem:[%s1492 + $0x38] sm:$0xf]
        %v1508 = vld [vmem:[%s1492 + $0x3c] sm:$0xf]
        %v1509 = vld [vmem:[%s1492 + $0x40] sm:$0xf]
        %v1510 = vld [vmem:[%s1492 + $0x44] sm:$0xf]
        %v1511 = vld [vmem:[%s1492 + $0x48] sm:$0xf]
        %v1512 = vld [vmem:[%s1492 + $0x4c] sm:$0xf]
        %v1533 = vunpack.c.l.b16 %v1493
        %v1534 = vunpack.c.l.b16 %v1494
        %v1535 = vunpack.c.l.b16 %v1495
        %v1536 = vunpack.c.l.b16 %v1496
        %v1537 = vunpack.c.l.b16 %v1497
        %v1538 = vunpack.c.l.b16 %v1498
        %v1539 = vunpack.c.l.b16 %v1499
        %v1540 = vunpack.c.l.b16 %v1500
        %v1541 = vunpack.c.l.b16 %v1501
        %v1542 = vunpack.c.l.b16 %v1502
        %v1543 = vunpack.c.l.b16 %v1503
        %v1544 = vunpack.c.l.b16 %v1504
        %v1545 = vunpack.c.l.b16 %v1505
        %v1546 = vunpack.c.l.b16 %v1506
        %v1547 = vunpack.c.l.b16 %v1507
        %v1548 = vunpack.c.l.b16 %v1508
        %v1549 = vunpack.c.l.b16 %v1509
        %v1550 = vunpack.c.l.b16 %v1510
        %v1551 = vunpack.c.l.b16 %v1511
        %v1552 = vunpack.c.l.b16 %v1512
        %v1553 = vpack.c.b16 %v1534, %v1533
        %v1554 = vpack.c.b16 %v1536, %v1535
        %v1555 = vpack.c.b16 %v1538, %v1537
        %v1556 = vpack.c.b16 %v1540, %v1539
        %v1557 = vpack.c.b16 %v1542, %v1541
        %v1558 = vpack.c.b16 %v1544, %v1543
        %v1559 = vpack.c.b16 %v1546, %v1545
        %v1560 = vpack.c.b16 %v1548, %v1547
        %v1561 = vpack.c.b16 %v1550, %v1549
        %v1562 = vpack.c.b16 %v1552, %v1551
        %1573 = vmatprep.subr.bf16.mxu0 0
        %1574 = vmatpush1.bf16.msra.mxu0 %v1560
        %1575 = vmatprep.subr.bf16.mxu0 0
        %1576 = vmatpush1.bf16.msra.mxu0 %v1559
        %1577 = vmatprep.subr.bf16.mxu0 0
        %1578 = vmatpush1.bf16.msra.mxu0 %v1558
        %1579 = vmatprep.subr.bf16.mxu0 0
        %1580 = vmatpush1.bf16.msra.mxu0 %v1557
        %1581 = vmatprep.subr.bf16.mxu0 0
        %1582 = vmatpush1.bf16.msra.mxu0 %v1556
        %1583 = vmatprep.subr.bf16.mxu0 0
        %1584 = vmatpush1.bf16.msra.mxu0 %v1555
        %1585 = vmatprep.subr.bf16.mxu0 0
        %1586 = vmatpush1.bf16.msra.mxu0 %v1554
        %1587 = vmatprep.subr.bf16.mxu0 0
        %1588 = vmatpush1.bf16.msra.mxu0 %v1553
        %1589 = vmatprep.subr.bf16.mxu0 0
        %1590 = vmatpush2.bf16.msra.mxu0 0
        %1591 = vmatprep.subr.bf16.mxu0 0
        %1592 = vmatpush2.bf16.msra.mxu0 0
        %1593 = vmatprep.subr.bf16.mxu0 0
        %1594 = vmatpush2.bf16.msra.mxu0 0
        %1595 = vmatprep.subr.bf16.mxu0 0
        %1596 = vmatpush2.bf16.msra.mxu0 0
        %1597 = vmatprep.subr.bf16.mxu0 0
        %1598 = vmatpush2.bf16.msra.mxu0 0
        %1599 = vmatprep.subr.bf16.mxu0 0
        %1600 = vmatpush2.bf16.msra.mxu0 0
        %1601 = vmatprep.subr.bf16.mxu0 0
        %1602 = vmatpush2.bf16.msra.mxu0 %v1562
        %1603 = vmatprep.subr.bf16.mxu0 0
        %1604 = vmatpush2.bf16.msra.mxu0 %v1561
        %1605 = vmatprep.mubr.bf16.mxu0 %v752
        %1606 = vmatmul.mubr.bf16.gmra.mxu0 %v688
        %v1607 = vpop.f32.mrf.mxu0
        %v1608 = vadd.f32 0.0, %v1607
        %v1609 = vpop.f32.mrf.mxu0
        %v1610 = vpop.f32.mrf.mxu0
        %v1611 = vpop.f32.mrf.mxu0
        %1612 = vdwg.mxu0
        %v1613 = vlaneseq
        %v1614 = vshrl.u32 %v1613, 7
        %v1615 = vsub.s32 1, %v1614
        %v1616 = vrot.slane %v359, %v1615
        %v1617 = vadd.f32 %v1616, %v1608
        %v1618 = vmul.f32 %v566, %v1617
        %v1619 = vadd.f32 %v418, %v1618
        %s1620 = scalar_lea.vmem %s4, 128
        %v1621 = vld [vmem:[%s1620] sm:$0xf]
        %v1622 = vld [vmem:[%s1620 + $0x4] sm:$0xf]
        %v1623 = vld [vmem:[%s1620 + $0x8] sm:$0xf]
        %v1624 = vld [vmem:[%s1620 + $0xc] sm:$0xf]
        %v1625 = vld [vmem:[%s1620 + $0x10] sm:$0xf]
        %v1626 = vld [vmem:[%s1620 + $0x14] sm:$0xf]
        %v1627 = vld [vmem:[%s1620 + $0x18] sm:$0xf]
        %v1628 = vld [vmem:[%s1620 + $0x1c] sm:$0xf]
        %v1629 = vpack.c.bf16 %v1619, %v1619
        %v1638 = vunpack.c.l.b16 %v1621
        %v1639 = vunpack.c.l.b16 %v1622
        %v1640 = vunpack.c.l.b16 %v1623
        %v1641 = vunpack.c.l.b16 %v1624
        %v1642 = vunpack.c.l.b16 %v1625
        %v1643 = vunpack.c.l.b16 %v1626
        %v1644 = vunpack.c.l.b16 %v1627
        %v1645 = vunpack.c.l.b16 %v1628
        %v1646 = vpack.c.b16 %v1639, %v1638
        %v1647 = vpack.c.b16 %v1641, %v1640
        %v1648 = vpack.c.b16 %v1643, %v1642
        %v1649 = vpack.c.b16 %v1645, %v1644
        %v1655 = vsel %vm371, %v1629, 0
        %1657 = vmatprep.subr.bf16.mxu0 0
        %1658 = vmatpush1.bf16.msra.mxu0 0
        %1659 = vmatprep.subr.bf16.mxu0 0
        %1660 = vmatpush1.bf16.msra.mxu0 0
        %1661 = vmatprep.subr.bf16.mxu0 0
        %1662 = vmatpush1.bf16.msra.mxu0 0
        %1663 = vmatprep.subr.bf16.mxu0 0
        %1664 = vmatpush1.bf16.msra.mxu0 0
        %1665 = vmatprep.subr.bf16.mxu0 0
        %1666 = vmatpush1.bf16.msra.mxu0 %v1649
        %1667 = vmatprep.subr.bf16.mxu0 0
        %1668 = vmatpush1.bf16.msra.mxu0 %v1648
        %1669 = vmatprep.subr.bf16.mxu0 0
        %1670 = vmatpush1.bf16.msra.mxu0 %v1647
        %1671 = vmatprep.subr.bf16.mxu0 0
        %1672 = vmatpush1.bf16.msra.mxu0 %v1646
        %1673 = vmatprep.subr.bf16.mxu0 0
        %1674 = vmatpush2.bf16.msra.mxu0 0
        %1675 = vmatprep.subr.bf16.mxu0 0
        %1676 = vmatpush2.bf16.msra.mxu0 0
        %1677 = vmatprep.subr.bf16.mxu0 0
        %1678 = vmatpush2.bf16.msra.mxu0 0
        %1679 = vmatprep.subr.bf16.mxu0 0
        %1680 = vmatpush2.bf16.msra.mxu0 0
        %1681 = vmatprep.subr.bf16.mxu0 0
        %1682 = vmatpush2.bf16.msra.mxu0 0
        %1683 = vmatprep.subr.bf16.mxu0 0
        %1684 = vmatpush2.bf16.msra.mxu0 0
        %1685 = vmatprep.subr.bf16.mxu0 0
        %1686 = vmatpush2.bf16.msra.mxu0 0
        %1687 = vmatprep.subr.bf16.mxu0 0
        %1688 = vmatpush2.bf16.msra.mxu0 0
        %1689 = vmatprep.mubr.bf16.mxu0 0
        %1690 = vmatmul.mubr.bf16.gmra.mxu0 %v1655
        %v1691 = vpop.f32.mrf.mxu0
        %v1692 = vadd.f32 0.0, %v1691
        %v1693 = vpop.f32.mrf.mxu0
        %v1694 = vpop.f32.mrf.mxu0
        %v1695 = vpop.f32.mrf.mxu0
        %1696 = vdwg.mxu0
        %v1697 = vxor.u32 %v1487, 2147483648
        %v1698 = vmul.f32 %v1697, 1.442695
        %v1699 = vpow.pop %v1698
        %v1700 = vadd.f32 %v1699, 1.0
        %v1701 = vrcp.pop %v1700
        %v1702 = vmul.f32 1.0, %v1701
        %v1703 = vmul.f32 %v1487, %v1702
        %v1704 = vtanh.pop %v1692
        %v1705 = vld [vmem:[%s5] sm:$0xf]
        %v1706 = vld [vmem:[%s5 + $0x4] sm:$0xf]
        %v1707 = vld [vmem:[%s5 + $0x8] sm:$0xf]
        %v1708 = vld [vmem:[%s5 + $0xc] sm:$0xf]
        %v1709 = vld [vmem:[%s5 + $0x10] sm:$0xf]
        %v1710 = vld [vmem:[%s5 + $0x14] sm:$0xf]
        %v1711 = vld [vmem:[%s5 + $0x18] sm:$0xf]
        %v1712 = vld [vmem:[%s5 + $0x1c] sm:$0xf]
        %v1713 = vpack.c.bf16 %v1704, %v1704
        %v1722 = vunpack.c.l.b16 %v1705
        %v1723 = vunpack.c.l.b16 %v1706
        %v1724 = vunpack.c.l.b16 %v1707
        %v1725 = vunpack.c.l.b16 %v1708
        %v1726 = vunpack.c.l.b16 %v1709
        %v1727 = vunpack.c.l.b16 %v1710
        %v1728 = vunpack.c.l.b16 %v1711
        %v1729 = vunpack.c.l.b16 %v1712
        %v1730 = vpack.c.b16 %v1723, %v1722
        %v1731 = vpack.c.b16 %v1725, %v1724
        %v1732 = vpack.c.b16 %v1727, %v1726
        %v1733 = vpack.c.b16 %v1729, %v1728
        %v1739 = vsel %vm371, %v1713, 0
        %1741 = vmatprep.subr.bf16.mxu0 0
        %1742 = vmatpush1.bf16.msra.mxu0 0
        %1743 = vmatprep.subr.bf16.mxu0 0
        %1744 = vmatpush1.bf16.msra.mxu0 0
        %1745 = vmatprep.subr.bf16.mxu0 0
        %1746 = vmatpush1.bf16.msra.mxu0 0
        %1747 = vmatprep.subr.bf16.mxu0 0
        %1748 = vmatpush1.bf16.msra.mxu0 0
        %1749 = vmatprep.subr.bf16.mxu0 0
        %1750 = vmatpush1.bf16.msra.mxu0 %v1733
        %1751 = vmatprep.subr.bf16.mxu0 0
        %1752 = vmatpush1.bf16.msra.mxu0 %v1732
        %1753 = vmatprep.subr.bf16.mxu0 0
        %1754 = vmatpush1.bf16.msra.mxu0 %v1731
        %1755 = vmatprep.subr.bf16.mxu0 0
        %1756 = vmatpush1.bf16.msra.mxu0 %v1730
        %1757 = vmatprep.subr.bf16.mxu0 0
        %1758 = vmatpush2.bf16.msra.mxu0 0
        %1759 = vmatprep.subr.bf16.mxu0 0
        %1760 = vmatpush2.bf16.msra.mxu0 0
        %1761 = vmatprep.subr.bf16.mxu0 0
        %1762 = vmatpush2.bf16.msra.mxu0 0
        %1763 = vmatprep.subr.bf16.mxu0 0
        %1764 = vmatpush2.bf16.msra.mxu0 0
        %1765 = vmatprep.subr.bf16.mxu0 0
        %1766 = vmatpush2.bf16.msra.mxu0 0
        %1767 = vmatprep.subr.bf16.mxu0 0
        %1768 = vmatpush2.bf16.msra.mxu0 0
        %1769 = vmatprep.subr.bf16.mxu0 0
        %1770 = vmatpush2.bf16.msra.mxu0 0
        %1771 = vmatprep.subr.bf16.mxu0 0
        %1772 = vmatpush2.bf16.msra.mxu0 0
        %1773 = vmatprep.mubr.bf16.mxu0 0
        %1774 = vmatmul.mubr.bf16.gmra.mxu0 %v1739
        %v1775 = vpop.f32.mrf.mxu0
        %v1776 = vadd.f32 0.0, %v1775
        %v1777 = vpop.f32.mrf.mxu0
        %v1778 = vpop.f32.mrf.mxu0
        %v1779 = vpop.f32.mrf.mxu0
        %1780 = vdwg.mxu0
        %v1781 = vlaneseq
        %v1782 = vshrl.u32 %v1781, 7
        %v1783 = vsub.s32 7, %v1782
        %v1784 = vrot.slane %v357, %v1783
        %v1785 = vadd.f32 %v1784, %v1776
        %v1786 = vmul.f32 %v1785, 1.442695
        %v1787 = vpow.pop %v1786
        %v1788 = vsub.f32 0.0, %v1787
        %v1789 = vpack.c.bf16 %v1788, %v1788
        %v1790 = vunpack.c.l.bf16 %v1789
        %v1791 = vsub.f32 %v1788, %v1790
        %v1793 = vsel %vm422, %v370, 0
        %1795 = vmatprep.subr.mxu0 0.0
        %1796 = vmatpush1.msra.mxu0 0.0
        %1797 = vmatprep.subr.mxu0 0.0
        %1798 = vmatpush1.msra.mxu0 0.0
        %1799 = vmatprep.subr.mxu0 0.0
        %1800 = vmatpush1.msra.mxu0 0.0
        %1801 = vmatprep.subr.mxu0 0.0
        %1802 = vmatpush1.msra.mxu0 0.0
        %1803 = vmatprep.subr.mxu0 0.0
        %1804 = vmatpush1.msra.mxu0 0.0
        %1805 = vmatprep.subr.mxu0 0.0
        %1806 = vmatpush1.msra.mxu0 0.0
        %1807 = vmatprep.subr.mxu0 0.0
        %1808 = vmatpush1.msra.mxu0 0.0
        %1809 = vmatprep.subr.mxu0 0.0
        %1810 = vmatpush1.msra.mxu0 0.0
        %1811 = vmatprep.subr.mxu0 0.0
        %1812 = vmatpush1.msra.mxu0 0.0
        %1813 = vmatprep.subr.mxu0 0.0
        %1814 = vmatpush1.msra.mxu0 0.0
        %1815 = vmatprep.subr.mxu0 0.0
        %1816 = vmatpush1.msra.mxu0 0.0
        %1817 = vmatprep.subr.mxu0 0.0
        %1818 = vmatpush1.msra.mxu0 0.0
        %1819 = vmatprep.subr.mxu0 0.0
        %1820 = vmatpush1.msra.mxu0 0.0
        %1821 = vmatprep.subr.mxu0 0.0
        %1822 = vmatpush1.msra.mxu0 0.0
        %1823 = vmatprep.subr.mxu0 0.0
        %1824 = vmatpush1.msra.mxu0 0.0
        %1825 = vmatprep.subr.mxu0 0.0
        %1826 = vmatpush1.msra.mxu0 %v1791
        %1827 = vmatprep.subr.mxu0 0.0
        %1828 = vmatpush2.msra.mxu0 0.0
        %1829 = vmatprep.subr.mxu0 0.0
        %1830 = vmatpush2.msra.mxu0 0.0
        %1831 = vmatprep.subr.mxu0 0.0
        %1832 = vmatpush2.msra.mxu0 0.0
        %1833 = vmatprep.subr.mxu0 0.0
        %1834 = vmatpush2.msra.mxu0 0.0
        %1835 = vmatprep.subr.mxu0 0.0
        %1836 = vmatpush2.msra.mxu0 0.0
        %1837 = vmatprep.subr.mxu0 0.0
        %1838 = vmatpush2.msra.mxu0 0.0
        %1839 = vmatprep.subr.mxu0 0.0
        %1840 = vmatpush2.msra.mxu0 0.0
        %1841 = vmatprep.subr.mxu0 0.0
        %1842 = vmatpush2.msra.mxu0 0.0
        %1843 = vmatprep.subr.mxu0 0.0
        %1844 = vmatpush2.msra.mxu0 0.0
        %1845 = vmatprep.subr.mxu0 0.0
        %1846 = vmatpush2.msra.mxu0 0.0
        %1847 = vmatprep.subr.mxu0 0.0
        %1848 = vmatpush2.msra.mxu0 0.0
        %1849 = vmatprep.subr.mxu0 0.0
        %1850 = vmatpush2.msra.mxu0 0.0
        %1851 = vmatprep.subr.mxu0 0.0
        %1852 = vmatpush2.msra.mxu0 0.0
        %1853 = vmatprep.subr.mxu0 0.0
        %1854 = vmatpush2.msra.mxu0 0.0
        %1855 = vmatprep.subr.mxu0 0.0
        %1856 = vmatpush2.msra.mxu0 0.0
        %1857 = vmatprep.subr.mxu0 0.0
        %1858 = vmatpush2.msra.mxu0 0.0
        %1859 = vmatprep.mubr.f32.mxu0 0.0
        %1860 = vmatmul.mubr.f32.gmra.mxu0 %v1793
        %v1861 = vpop.f32.mrf.mxu0
        %v1862 = vadd.f32 0.0, %v1861
        %v1863 = vpop.f32.mrf.mxu0
        %1864 = vdwg.mxu0
        %1865 = vmatprep.subr.mxu0 0.0
        %1866 = vmatpush1.msra.mxu0 0.0
        %1867 = vmatprep.subr.mxu0 0.0
        %1868 = vmatpush1.msra.mxu0 0.0
        %1869 = vmatprep.subr.mxu0 0.0
        %1870 = vmatpush1.msra.mxu0 0.0
        %1871 = vmatprep.subr.mxu0 0.0
        %1872 = vmatpush1.msra.mxu0 0.0
        %1873 = vmatprep.subr.mxu0 0.0
        %1874 = vmatpush1.msra.mxu0 0.0
        %1875 = vmatprep.subr.mxu0 0.0
        %1876 = vmatpush1.msra.mxu0 0.0
        %1877 = vmatprep.subr.mxu0 0.0
        %1878 = vmatpush1.msra.mxu0 0.0
        %1879 = vmatprep.subr.mxu0 0.0
        %1880 = vmatpush1.msra.mxu0 0.0
        %1881 = vmatprep.subr.mxu0 0.0
        %1882 = vmatpush1.msra.mxu0 0.0
        %1883 = vmatprep.subr.mxu0 0.0
        %1884 = vmatpush1.msra.mxu0 0.0
        %1885 = vmatprep.subr.mxu0 0.0
        %1886 = vmatpush1.msra.mxu0 0.0
        %1887 = vmatprep.subr.mxu0 0.0
        %1888 = vmatpush1.msra.mxu0 0.0
        %1889 = vmatprep.subr.mxu0 0.0
        %1890 = vmatpush1.msra.mxu0 0.0
        %1891 = vmatprep.subr.mxu0 0.0
        %1892 = vmatpush1.msra.mxu0 0.0
        %1893 = vmatprep.subr.mxu0 0.0
        %1894 = vmatpush1.msra.mxu0 0.0
        %1895 = vmatprep.subr.mxu0 0.0
        %1896 = vmatpush1.msra.mxu0 %v1790
        %1897 = vmatprep.subr.mxu0 0.0
        %1898 = vmatpush2.msra.mxu0 0.0
        %1899 = vmatprep.subr.mxu0 0.0
        %1900 = vmatpush2.msra.mxu0 0.0
        %1901 = vmatprep.subr.mxu0 0.0
        %1902 = vmatpush2.msra.mxu0 0.0
        %1903 = vmatprep.subr.mxu0 0.0
        %1904 = vmatpush2.msra.mxu0 0.0
        %1905 = vmatprep.subr.mxu0 0.0
        %1906 = vmatpush2.msra.mxu0 0.0
        %1907 = vmatprep.subr.mxu0 0.0
        %1908 = vmatpush2.msra.mxu0 0.0
        %1909 = vmatprep.subr.mxu0 0.0
        %1910 = vmatpush2.msra.mxu0 0.0
        %1911 = vmatprep.subr.mxu0 0.0
        %1912 = vmatpush2.msra.mxu0 0.0
        %1913 = vmatprep.subr.mxu0 0.0
        %1914 = vmatpush2.msra.mxu0 0.0
        %1915 = vmatprep.subr.mxu0 0.0
        %1916 = vmatpush2.msra.mxu0 0.0
        %1917 = vmatprep.subr.mxu0 0.0
        %1918 = vmatpush2.msra.mxu0 0.0
        %1919 = vmatprep.subr.mxu0 0.0
        %1920 = vmatpush2.msra.mxu0 0.0
        %1921 = vmatprep.subr.mxu0 0.0
        %1922 = vmatpush2.msra.mxu0 0.0
        %1923 = vmatprep.subr.mxu0 0.0
        %1924 = vmatpush2.msra.mxu0 0.0
        %1925 = vmatprep.subr.mxu0 0.0
        %1926 = vmatpush2.msra.mxu0 0.0
        %1927 = vmatprep.subr.mxu0 0.0
        %1928 = vmatpush2.msra.mxu0 0.0
        %1929 = vmatprep.mubr.f32.mxu0 0.0
        %1930 = vmatmul.mubr.f32.gmra.mxu0 %v1793
        %v1931 = vpop.f32.mrf.mxu0
        %v1932 = vadd.f32 %v1862, %v1931
        %v1933 = vpop.f32.mrf.mxu0
        %1934 = vdwg.mxu0
        %v1935 = vsub.f32 %v1932, %v1788
        %v1936 = vmul.f32 %v1935, 1.442695
        %v1937 = vpow.pop %v1936
        %v1938 = vmul.f32 %v872, %v1937
        %v1939 = vsub.f32 0.0, %v1932
        %v1940 = vmul.f32 %v1939, 1.442695
        %v1941 = vpow.pop %v1940
        %v1942 = vmul.f32 %v1077, %v1941
        %v1944 = vsel %vm371, %v1938, 0
        %v1947 = vsel %vm371, %v1942, 0
        %1949 = vmatprep.subr.mxu0 0.0
        %1950 = vmatpush1.xpose.msra.mxu0 0.0
        %1951 = vmatprep.subr.mxu0 0.0
        %1952 = vmatpush1.xpose.msra.mxu0 0.0
        %1953 = vmatprep.subr.mxu0 0.0
        %1954 = vmatpush1.xpose.msra.mxu0 0.0
        %1955 = vmatprep.subr.mxu0 0.0
        %1956 = vmatpush1.xpose.msra.mxu0 0.0
        %1957 = vmatprep.subr.mxu0 0.0
        %1958 = vmatpush1.xpose.msra.mxu0 0.0
        %1959 = vmatprep.subr.mxu0 0.0
        %1960 = vmatpush1.xpose.msra.mxu0 0.0
        %1961 = vmatprep.subr.mxu0 0.0
        %1962 = vmatpush1.xpose.msra.mxu0 0.0
        %1963 = vmatprep.subr.mxu0 0.0
        %1964 = vmatpush1.xpose.msra.mxu0 0.0
        %1965 = vmatprep.subr.mxu0 0.0
        %1966 = vmatpush1.xpose.msra.mxu0 0.0
        %1967 = vmatprep.subr.mxu0 0.0
        %1968 = vmatpush1.xpose.msra.mxu0 0.0
        %1969 = vmatprep.subr.mxu0 0.0
        %1970 = vmatpush1.xpose.msra.mxu0 0.0
        %1971 = vmatprep.subr.mxu0 0.0
        %1972 = vmatpush1.xpose.msra.mxu0 0.0
        %1973 = vmatprep.subr.mxu0 0.0
        %1974 = vmatpush1.xpose.msra.mxu0 0.0
        %1975 = vmatprep.subr.mxu0 0.0
        %1976 = vmatpush1.xpose.msra.mxu0 0.0
        %1977 = vmatprep.subr.mxu0 0.0
        %1978 = vmatpush1.xpose.msra.mxu0 0.0
        %1979 = vmatprep.subr.mxu0 0.0
        %1980 = vmatpush1.xpose.msra.mxu0 %v1947
        %1981 = vmatprep.subr.mxu0 0.0
        %1982 = vmatpush2.xpose.msra.mxu0 0.0
        %1983 = vmatprep.subr.mxu0 0.0
        %1984 = vmatpush2.xpose.msra.mxu0 0.0
        %1985 = vmatprep.subr.mxu0 0.0
        %1986 = vmatpush2.xpose.msra.mxu0 0.0
        %1987 = vmatprep.subr.mxu0 0.0
        %1988 = vmatpush2.xpose.msra.mxu0 0.0
        %1989 = vmatprep.subr.mxu0 0.0
        %1990 = vmatpush2.xpose.msra.mxu0 0.0
        %1991 = vmatprep.subr.mxu0 0.0
        %1992 = vmatpush2.xpose.msra.mxu0 0.0
        %1993 = vmatprep.subr.mxu0 0.0
        %1994 = vmatpush2.xpose.msra.mxu0 0.0
        %1995 = vmatprep.subr.mxu0 0.0
        %1996 = vmatpush2.xpose.msra.mxu0 0.0
        %1997 = vmatprep.subr.mxu0 0.0
        %1998 = vmatpush2.xpose.msra.mxu0 0.0
        %1999 = vmatprep.subr.mxu0 0.0
        %2000 = vmatpush2.xpose.msra.mxu0 0.0
        %2001 = vmatprep.subr.mxu0 0.0
        %2002 = vmatpush2.xpose.msra.mxu0 0.0
        %2003 = vmatprep.subr.mxu0 0.0
        %2004 = vmatpush2.xpose.msra.mxu0 0.0
        %2005 = vmatprep.subr.mxu0 0.0
        %2006 = vmatpush2.xpose.msra.mxu0 0.0
        %2007 = vmatprep.subr.mxu0 0.0
        %2008 = vmatpush2.xpose.msra.mxu0 0.0
        %2009 = vmatprep.subr.mxu0 0.0
        %2010 = vmatpush2.xpose.msra.mxu0 0.0
        %2011 = vmatprep.subr.mxu0 0.0
        %2012 = vmatpush2.xpose.msra.mxu0 0.0
        %2013 = vmatprep.mubr.f32.mxu0 0.0
        %2014 = vmatmul.mubr.f32.gmra.mxu0 %v1944
        %v2015 = vpop.f32.mrf.mxu0
        %v2016 = vadd.f32 0.0, %v2015
        %v2017 = vpop.f32.mrf.mxu0
        %2018 = vdwg.mxu0
        %v2019 = vlaneseq
        %v2020 = vshrl.u32 %v2019, 7
        %v2021 = vsub.s32 0, %v2020
        %v2022 = vrot.slane %v358, %v2021
        %v2023 = vmul.f32 %v872, %v2022
        %v2024 = vmul.f32 %v2023, %v1077
        %v2025 = vsel %vm371, %v2024, 0.0
        %2026 = vadd.xlane.f32.xlu0 %v2025
        %v2027 = vpop.xlane.xlu0 %2026
        %vm2028 = vcmp.lt.s32.totalorder %v363, %v361
        %v2029 = vsel %vm2028, %v2016, 0.0
        %vm2030 = vcmp.eq.s32.totalorder %v363, %v361
        %v2031 = vsel %vm2030, %v2027, 0.0
        %v2032 = vadd.f32 %v2029, %v2031
        %v2034 = vsel %vm422, %v2032, 0
        %2036 = vmatprep.subr.mxu0 0.0
        %2037 = vmatpush1.msra.mxu0 0.0
        %2038 = vmatprep.subr.mxu0 0.0
        %2039 = vmatpush1.msra.mxu0 0.0
        %2040 = vmatprep.subr.mxu0 0.0
        %2041 = vmatpush1.msra.mxu0 0.0
        %2042 = vmatprep.subr.mxu0 0.0
        %2043 = vmatpush1.msra.mxu0 0.0
        %2044 = vmatprep.subr.mxu0 0.0
        %2045 = vmatpush1.msra.mxu0 0.0
        %2046 = vmatprep.subr.mxu0 0.0
        %2047 = vmatpush1.msra.mxu0 0.0
        %2048 = vmatprep.subr.mxu0 0.0
        %2049 = vmatpush1.msra.mxu0 0.0
        %2050 = vmatprep.subr.mxu0 0.0
        %2051 = vmatpush1.msra.mxu0 0.0
        %2052 = vmatprep.subr.mxu0 0.0
        %2053 = vmatpush1.msra.mxu0 0.0
        %2054 = vmatprep.subr.mxu0 0.0
        %2055 = vmatpush1.msra.mxu0 0.0
        %2056 = vmatprep.subr.mxu0 0.0
        %2057 = vmatpush1.msra.mxu0 0.0
        %2058 = vmatprep.subr.mxu0 0.0
        %2059 = vmatpush1.msra.mxu0 0.0
        %2060 = vmatprep.subr.mxu0 0.0
        %2061 = vmatpush1.msra.mxu0 0.0
        %2062 = vmatprep.subr.mxu0 0.0
        %2063 = vmatpush1.msra.mxu0 0.0
        %2064 = vmatprep.subr.mxu0 0.0
        %2065 = vmatpush1.msra.mxu0 0.0
        %2066 = vmatprep.subr.mxu0 0.0
        %2067 = vmatpush1.msra.mxu0 %v1282
        %2068 = vmatprep.subr.mxu0 0.0
        %2069 = vmatpush2.msra.mxu0 0.0
        %2070 = vmatprep.subr.mxu0 0.0
        %2071 = vmatpush2.msra.mxu0 0.0
        %2072 = vmatprep.subr.mxu0 0.0
        %2073 = vmatpush2.msra.mxu0 0.0
        %2074 = vmatprep.subr.mxu0 0.0
        %2075 = vmatpush2.msra.mxu0 0.0
        %2076 = vmatprep.subr.mxu0 0.0
        %2077 = vmatpush2.msra.mxu0 0.0
        %2078 = vmatprep.subr.mxu0 0.0
        %2079 = vmatpush2.msra.mxu0 0.0
        %2080 = vmatprep.subr.mxu0 0.0
        %2081 = vmatpush2.msra.mxu0 0.0
        %2082 = vmatprep.subr.mxu0 0.0
        %2083 = vmatpush2.msra.mxu0 0.0
        %2084 = vmatprep.subr.mxu0 0.0
        %2085 = vmatpush2.msra.mxu0 0.0
        %2086 = vmatprep.subr.mxu0 0.0
        %2087 = vmatpush2.msra.mxu0 0.0
        %2088 = vmatprep.subr.mxu0 0.0
        %2089 = vmatpush2.msra.mxu0 0.0
        %2090 = vmatprep.subr.mxu0 0.0
        %2091 = vmatpush2.msra.mxu0 0.0
        %2092 = vmatprep.subr.mxu0 0.0
        %2093 = vmatpush2.msra.mxu0 0.0
        %2094 = vmatprep.subr.mxu0 0.0
        %2095 = vmatpush2.msra.mxu0 0.0
        %2096 = vmatprep.subr.mxu0 0.0
        %2097 = vmatpush2.msra.mxu0 0.0
        %2098 = vmatprep.subr.mxu0 0.0
        %2099 = vmatpush2.msra.mxu0 0.0
        %2100 = vmatprep.mubr.f32.mxu0 0.0
        %2101 = vmatmul.mubr.f32.gmra.mxu0 %v2034
        %v2102 = vpop.f32.mrf.mxu0
        %v2103 = vadd.f32 0.0, %v2102
        %v2104 = vpop.f32.mrf.mxu0
        %2105 = vdwg.mxu0
        %v2106 = vsel %vm371, %v2103, 0.0
        %2107 = vadd.xlane.f32.xlu0 %v2106
        %v2108 = vpop.xlane.xlu0 %2107
        %v2109 = vmul.f32 %v2108, %v375
        %v2110 = vsub.f32 %v2103, %v2109
        %v2111 = vmul.f32 %v2110, %v2110
        %v2112 = vsel %vm371, %v2111, 0.0
        %2113 = vadd.xlane.f32.xlu0 %v2112
        %v2114 = vpop.xlane.xlu0 %2113
        %v2115 = vmul.f32 %v2114, %v375
        %v2116 = vadd.f32 %v2115, 0.00064
        %v2117 = vrsqrt.pop %v2116
        %v2118 = vmul.f32 %v2110, %v2117
        %v2119 = vlaneseq
        %v2120 = vshrl.u32 %v2119, 7
        %v2121 = vsub.s32 1, %v2120
        %v2122 = vrot.slane %v358, %v2121
        %v2123 = vmul.f32 %v2118, %v2122
        %v2124 = vlaneseq
        %v2125 = vshrl.u32 %v2124, 7
        %v2126 = vsub.s32 2, %v2125
        %v2127 = vrot.slane %v358, %v2126
        %v2128 = vadd.f32 %v2123, %v2127
        %v2129 = vmul.f32 %v2128, %v1703
        %v2130 = vld [vmem:[%s6] sm:$0xf]
        %v2131 = vld [vmem:[%s6 + $0x4] sm:$0xf]
        %v2132 = vld [vmem:[%s6 + $0x8] sm:$0xf]
        %v2133 = vld [vmem:[%s6 + $0xc] sm:$0xf]
        %v2134 = vld [vmem:[%s6 + $0x10] sm:$0xf]
        %v2135 = vld [vmem:[%s6 + $0x14] sm:$0xf]
        %v2136 = vld [vmem:[%s6 + $0x18] sm:$0xf]
        %v2137 = vld [vmem:[%s6 + $0x1c] sm:$0xf]
        %v2138 = vpack.c.bf16 %v2129, %v2129
        %v2147 = vunpack.c.l.b16 %v2130
        %v2148 = vunpack.c.l.b16 %v2131
        %v2149 = vunpack.c.l.b16 %v2132
        %v2150 = vunpack.c.l.b16 %v2133
        %v2151 = vunpack.c.l.b16 %v2134
        %v2152 = vunpack.c.l.b16 %v2135
        %v2153 = vunpack.c.l.b16 %v2136
        %v2154 = vunpack.c.l.b16 %v2137
        %v2155 = vpack.c.b16 %v2148, %v2147
        %v2156 = vpack.c.b16 %v2150, %v2149
        %v2157 = vpack.c.b16 %v2152, %v2151
        %v2158 = vpack.c.b16 %v2154, %v2153
        %v2164 = vsel %vm371, %v2138, 0
        %2166 = vmatprep.subr.bf16.mxu0 0
        %2167 = vmatpush1.bf16.msra.mxu0 0
        %2168 = vmatprep.subr.bf16.mxu0 0
        %2169 = vmatpush1.bf16.msra.mxu0 0
        %2170 = vmatprep.subr.bf16.mxu0 0
        %2171 = vmatpush1.bf16.msra.mxu0 0
        %2172 = vmatprep.subr.bf16.mxu0 0
        %2173 = vmatpush1.bf16.msra.mxu0 0
        %2174 = vmatprep.subr.bf16.mxu0 0
        %2175 = vmatpush1.bf16.msra.mxu0 %v2158
        %2176 = vmatprep.subr.bf16.mxu0 0
        %2177 = vmatpush1.bf16.msra.mxu0 %v2157
        %2178 = vmatprep.subr.bf16.mxu0 0
        %2179 = vmatpush1.bf16.msra.mxu0 %v2156
        %2180 = vmatprep.subr.bf16.mxu0 0
        %2181 = vmatpush1.bf16.msra.mxu0 %v2155
        %2182 = vmatprep.subr.bf16.mxu0 0
        %2183 = vmatpush2.bf16.msra.mxu0 0
        %2184 = vmatprep.subr.bf16.mxu0 0
        %2185 = vmatpush2.bf16.msra.mxu0 0
        %2186 = vmatprep.subr.bf16.mxu0 0
        %2187 = vmatpush2.bf16.msra.mxu0 0
        %2188 = vmatprep.subr.bf16.mxu0 0
        %2189 = vmatpush2.bf16.msra.mxu0 0
        %2190 = vmatprep.subr.bf16.mxu0 0
        %2191 = vmatpush2.bf16.msra.mxu0 0
        %2192 = vmatprep.subr.bf16.mxu0 0
        %2193 = vmatpush2.bf16.msra.mxu0 0
        %2194 = vmatprep.subr.bf16.mxu0 0
        %2195 = vmatpush2.bf16.msra.mxu0 0
        %2196 = vmatprep.subr.bf16.mxu0 0
        %2197 = vmatpush2.bf16.msra.mxu0 0
        %2198 = vmatprep.mubr.bf16.mxu0 0
        %2199 = vmatmul.mubr.bf16.gmra.mxu0 %v2164
        %v2200 = vpop.f32.mrf.mxu0
        %v2201 = vadd.f32 0.0, %v2200
        %v2202 = vpop.f32.mrf.mxu0
        %v2203 = vpop.f32.mrf.mxu0
        %v2204 = vpop.f32.mrf.mxu0
        %2205 = vdwg.mxu0
        %v2206 = vadd.f32 %v395, %v2201
        %v2207 = vsel %vm371, %v2206, 0.0
        %2208 = vadd.xlane.f32.xlu0 %v2207
        %v2209 = vpop.xlane.xlu0 %2208
        %v2210 = vmul.f32 %v2209, %v375
        %v2211 = vsub.f32 %v2206, %v2210
        %v2212 = vmul.f32 %v2211, %v2211
        %v2213 = vsel %vm371, %v2212, 0.0
        %2214 = vadd.xlane.f32.xlu0 %v2213
        %v2215 = vpop.xlane.xlu0 %2214
        %v2216 = vmul.f32 %v2215, %v375
        %v2217 = vadd.f32 %v2216, 1e-05
        %v2218 = vrsqrt.pop %v2217
        %v2219 = vmul.f32 %v2211, %v2218
        %v2220 = vlaneseq
        %v2221 = vshrl.u32 %v2220, 7
        %v2222 = vsub.s32 4, %v2221
        %v2223 = vrot.slane %v357, %v2222
        %v2224 = vmul.f32 %v2219, %v2223
        %v2225 = vlaneseq
        %v2226 = vshrl.u32 %v2225, 7
        %v2227 = vsub.s32 5, %v2226
        %v2228 = vrot.slane %v357, %v2227
        %v2229 = vadd.f32 %v2224, %v2228
        %v2230 = vpack.c.bf16 %v2229, %v2229
        %v2231 = vunpack.c.l.bf16 %v2230
        %v2232 = vsub.f32 %v2229, %v2231
        %2233 = vmatprep.subr.mxu0 0.0
        %2234 = vmatpush1.msra.mxu0 0.0
        %2235 = vmatprep.subr.mxu0 0.0
        %2236 = vmatpush1.msra.mxu0 0.0
        %2237 = vmatprep.subr.mxu0 0.0
        %2238 = vmatpush1.msra.mxu0 0.0
        %2239 = vmatprep.subr.mxu0 0.0
        %2240 = vmatpush1.msra.mxu0 0.0
        %2241 = vmatprep.subr.mxu0 0.0
        %2242 = vmatpush1.msra.mxu0 0.0
        %2243 = vmatprep.subr.mxu0 0.0
        %2244 = vmatpush1.msra.mxu0 0.0
        %2245 = vmatprep.subr.mxu0 0.0
        %2246 = vmatpush1.msra.mxu0 0.0
        %2247 = vmatprep.subr.mxu0 0.0
        %2248 = vmatpush1.msra.mxu0 0.0
        %2249 = vmatprep.subr.mxu0 0.0
        %2250 = vmatpush1.msra.mxu0 0.0
        %2251 = vmatprep.subr.mxu0 0.0
        %2252 = vmatpush1.msra.mxu0 0.0
        %2253 = vmatprep.subr.mxu0 0.0
        %2254 = vmatpush1.msra.mxu0 0.0
        %2255 = vmatprep.subr.mxu0 0.0
        %2256 = vmatpush1.msra.mxu0 0.0
        %2257 = vmatprep.subr.mxu0 0.0
        %2258 = vmatpush1.msra.mxu0 0.0
        %2259 = vmatprep.subr.mxu0 0.0
        %2260 = vmatpush1.msra.mxu0 0.0
        %2261 = vmatprep.subr.mxu0 0.0
        %2262 = vmatpush1.msra.mxu0 0.0
        %2263 = vmatprep.subr.mxu0 0.0
        %2264 = vmatpush1.msra.mxu0 %v2232
        %2265 = vmatprep.subr.mxu0 0.0
        %2266 = vmatpush2.msra.mxu0 0.0
        %2267 = vmatprep.subr.mxu0 0.0
        %2268 = vmatpush2.msra.mxu0 0.0
        %2269 = vmatprep.subr.mxu0 0.0
        %2270 = vmatpush2.msra.mxu0 0.0
        %2271 = vmatprep.subr.mxu0 0.0
        %2272 = vmatpush2.msra.mxu0 0.0
        %2273 = vmatprep.subr.mxu0 0.0
        %2274 = vmatpush2.msra.mxu0 0.0
        %2275 = vmatprep.subr.mxu0 0.0
        %2276 = vmatpush2.msra.mxu0 0.0
        %2277 = vmatprep.subr.mxu0 0.0
        %2278 = vmatpush2.msra.mxu0 0.0
        %2279 = vmatprep.subr.mxu0 0.0
        %2280 = vmatpush2.msra.mxu0 0.0
        %2281 = vmatprep.subr.mxu0 0.0
        %2282 = vmatpush2.msra.mxu0 0.0
        %2283 = vmatprep.subr.mxu0 0.0
        %2284 = vmatpush2.msra.mxu0 0.0
        %2285 = vmatprep.subr.mxu0 0.0
        %2286 = vmatpush2.msra.mxu0 0.0
        %2287 = vmatprep.subr.mxu0 0.0
        %2288 = vmatpush2.msra.mxu0 0.0
        %2289 = vmatprep.subr.mxu0 0.0
        %2290 = vmatpush2.msra.mxu0 0.0
        %2291 = vmatprep.subr.mxu0 0.0
        %2292 = vmatpush2.msra.mxu0 0.0
        %2293 = vmatprep.subr.mxu0 0.0
        %2294 = vmatpush2.msra.mxu0 0.0
        %2295 = vmatprep.subr.mxu0 0.0
        %2296 = vmatpush2.msra.mxu0 0.0
        %2297 = vmatprep.mubr.f32.mxu0 0.0
        %2298 = vmatmul.mubr.f32.gmra.mxu0 %v424
        %v2299 = vpop.f32.mrf.mxu0
        %v2300 = vadd.f32 0.0, %v2299
        %v2301 = vpop.f32.mrf.mxu0
        %2302 = vdwg.mxu0
        %2303 = vmatprep.subr.mxu0 0.0
        %2304 = vmatpush1.msra.mxu0 0.0
        %2305 = vmatprep.subr.mxu0 0.0
        %2306 = vmatpush1.msra.mxu0 0.0
        %2307 = vmatprep.subr.mxu0 0.0
        %2308 = vmatpush1.msra.mxu0 0.0
        %2309 = vmatprep.subr.mxu0 0.0
        %2310 = vmatpush1.msra.mxu0 0.0
        %2311 = vmatprep.subr.mxu0 0.0
        %2312 = vmatpush1.msra.mxu0 0.0
        %2313 = vmatprep.subr.mxu0 0.0
        %2314 = vmatpush1.msra.mxu0 0.0
        %2315 = vmatprep.subr.mxu0 0.0
        %2316 = vmatpush1.msra.mxu0 0.0
        %2317 = vmatprep.subr.mxu0 0.0
        %2318 = vmatpush1.msra.mxu0 0.0
        %2319 = vmatprep.subr.mxu0 0.0
        %2320 = vmatpush1.msra.mxu0 0.0
        %2321 = vmatprep.subr.mxu0 0.0
        %2322 = vmatpush1.msra.mxu0 0.0
        %2323 = vmatprep.subr.mxu0 0.0
        %2324 = vmatpush1.msra.mxu0 0.0
        %2325 = vmatprep.subr.mxu0 0.0
        %2326 = vmatpush1.msra.mxu0 0.0
        %2327 = vmatprep.subr.mxu0 0.0
        %2328 = vmatpush1.msra.mxu0 0.0
        %2329 = vmatprep.subr.mxu0 0.0
        %2330 = vmatpush1.msra.mxu0 0.0
        %2331 = vmatprep.subr.mxu0 0.0
        %2332 = vmatpush1.msra.mxu0 0.0
        %2333 = vmatprep.subr.mxu0 0.0
        %2334 = vmatpush1.msra.mxu0 %v2231
        %2335 = vmatprep.subr.mxu0 0.0
        %2336 = vmatpush2.msra.mxu0 0.0
        %2337 = vmatprep.subr.mxu0 0.0
        %2338 = vmatpush2.msra.mxu0 0.0
        %2339 = vmatprep.subr.mxu0 0.0
        %2340 = vmatpush2.msra.mxu0 0.0
        %2341 = vmatprep.subr.mxu0 0.0
        %2342 = vmatpush2.msra.mxu0 0.0
        %2343 = vmatprep.subr.mxu0 0.0
        %2344 = vmatpush2.msra.mxu0 0.0
        %2345 = vmatprep.subr.mxu0 0.0
        %2346 = vmatpush2.msra.mxu0 0.0
        %2347 = vmatprep.subr.mxu0 0.0
        %2348 = vmatpush2.msra.mxu0 0.0
        %2349 = vmatprep.subr.mxu0 0.0
        %2350 = vmatpush2.msra.mxu0 0.0
        %2351 = vmatprep.subr.mxu0 0.0
        %2352 = vmatpush2.msra.mxu0 0.0
        %2353 = vmatprep.subr.mxu0 0.0
        %2354 = vmatpush2.msra.mxu0 0.0
        %2355 = vmatprep.subr.mxu0 0.0
        %2356 = vmatpush2.msra.mxu0 0.0
        %2357 = vmatprep.subr.mxu0 0.0
        %2358 = vmatpush2.msra.mxu0 0.0
        %2359 = vmatprep.subr.mxu0 0.0
        %2360 = vmatpush2.msra.mxu0 0.0
        %2361 = vmatprep.subr.mxu0 0.0
        %2362 = vmatpush2.msra.mxu0 0.0
        %2363 = vmatprep.subr.mxu0 0.0
        %2364 = vmatpush2.msra.mxu0 0.0
        %2365 = vmatprep.subr.mxu0 0.0
        %2366 = vmatpush2.msra.mxu0 0.0
        %2367 = vmatprep.mubr.f32.mxu0 0.0
        %2368 = vmatmul.mubr.f32.gmra.mxu0 %v424
        %v2369 = vpop.f32.mrf.mxu0
        %v2370 = vadd.f32 %v2300, %v2369
        %v2371 = vpop.f32.mrf.mxu0
        %2372 = vdwg.mxu0
        %v2373 = vsub.f32 %v2370, %v2229
        %v2374 = vlaneseq
        %v2375 = vshrl.u32 %v2374, 7
        %v2376 = vsub.s32 3, %v2375
        %v2377 = vrot.slane %v358, %v2376
        %v2378 = vmul.f32 %v2373, %v2377
        %v2379 = vadd.f32 %v2229, %v2378
        %v2380 = vlaneseq
        %v2381 = vshrl.u32 %v2380, 7
        %v2382 = vsub.s32 4, %v2381
        %v2383 = vrot.slane %v358, %v2382
        %v2384 = vmul.f32 %v2373, %v2383
        %v2385 = vadd.f32 %v2229, %v2384
        %v2386 = vld [vmem:[%s7] sm:$0xf]
        %v2387 = vld [vmem:[%s7 + $0x4] sm:$0xf]
        %v2388 = vld [vmem:[%s7 + $0x8] sm:$0xf]
        %v2389 = vld [vmem:[%s7 + $0xc] sm:$0xf]
        %v2390 = vld [vmem:[%s7 + $0x10] sm:$0xf]
        %v2391 = vld [vmem:[%s7 + $0x14] sm:$0xf]
        %v2392 = vld [vmem:[%s7 + $0x18] sm:$0xf]
        %v2393 = vld [vmem:[%s7 + $0x1c] sm:$0xf]
        %v2394 = vpack.c.bf16 %v2379, %v2379
        %v2403 = vunpack.c.l.b16 %v2386
        %v2404 = vunpack.c.l.b16 %v2387
        %v2405 = vunpack.c.l.b16 %v2388
        %v2406 = vunpack.c.l.b16 %v2389
        %v2407 = vunpack.c.l.b16 %v2390
        %v2408 = vunpack.c.l.b16 %v2391
        %v2409 = vunpack.c.l.b16 %v2392
        %v2410 = vunpack.c.l.b16 %v2393
        %v2411 = vpack.c.b16 %v2404, %v2403
        %v2412 = vpack.c.b16 %v2406, %v2405
        %v2413 = vpack.c.b16 %v2408, %v2407
        %v2414 = vpack.c.b16 %v2410, %v2409
        %v2420 = vsel %vm371, %v2394, 0
        %2422 = vmatprep.subr.bf16.mxu0 0
        %2423 = vmatpush1.bf16.msra.mxu0 0
        %2424 = vmatprep.subr.bf16.mxu0 0
        %2425 = vmatpush1.bf16.msra.mxu0 0
        %2426 = vmatprep.subr.bf16.mxu0 0
        %2427 = vmatpush1.bf16.msra.mxu0 0
        %2428 = vmatprep.subr.bf16.mxu0 0
        %2429 = vmatpush1.bf16.msra.mxu0 0
        %2430 = vmatprep.subr.bf16.mxu0 0
        %2431 = vmatpush1.bf16.msra.mxu0 %v2414
        %2432 = vmatprep.subr.bf16.mxu0 0
        %2433 = vmatpush1.bf16.msra.mxu0 %v2413
        %2434 = vmatprep.subr.bf16.mxu0 0
        %2435 = vmatpush1.bf16.msra.mxu0 %v2412
        %2436 = vmatprep.subr.bf16.mxu0 0
        %2437 = vmatpush1.bf16.msra.mxu0 %v2411
        %2438 = vmatprep.subr.bf16.mxu0 0
        %2439 = vmatpush2.bf16.msra.mxu0 0
        %2440 = vmatprep.subr.bf16.mxu0 0
        %2441 = vmatpush2.bf16.msra.mxu0 0
        %2442 = vmatprep.subr.bf16.mxu0 0
        %2443 = vmatpush2.bf16.msra.mxu0 0
        %2444 = vmatprep.subr.bf16.mxu0 0
        %2445 = vmatpush2.bf16.msra.mxu0 0
        %2446 = vmatprep.subr.bf16.mxu0 0
        %2447 = vmatpush2.bf16.msra.mxu0 0
        %2448 = vmatprep.subr.bf16.mxu0 0
        %2449 = vmatpush2.bf16.msra.mxu0 0
        %2450 = vmatprep.subr.bf16.mxu0 0
        %2451 = vmatpush2.bf16.msra.mxu0 0
        %2452 = vmatprep.subr.bf16.mxu0 0
        %2453 = vmatpush2.bf16.msra.mxu0 0
        %2454 = vmatprep.mubr.bf16.mxu0 0
        %2455 = vmatmul.mubr.bf16.gmra.mxu0 %v2420
        %v2456 = vpop.f32.mrf.mxu0
        %v2457 = vadd.f32 0.0, %v2456
        %v2458 = vpop.f32.mrf.mxu0
        %v2459 = vpop.f32.mrf.mxu0
        %v2460 = vpop.f32.mrf.mxu0
        %2461 = vdwg.mxu0
        %v2462 = vmax.f32 %v2457, 0.0
        %v2463 = vmul.f32 %v2462, %v2462
        %v2464 = vld [vmem:[%s9] sm:$0xf]
        %v2465 = vld [vmem:[%s9 + $0x4] sm:$0xf]
        %v2466 = vld [vmem:[%s9 + $0x8] sm:$0xf]
        %v2467 = vld [vmem:[%s9 + $0xc] sm:$0xf]
        %v2468 = vld [vmem:[%s9 + $0x10] sm:$0xf]
        %v2469 = vld [vmem:[%s9 + $0x14] sm:$0xf]
        %v2470 = vld [vmem:[%s9 + $0x18] sm:$0xf]
        %v2471 = vld [vmem:[%s9 + $0x1c] sm:$0xf]
        %v2472 = vld [vmem:[%s9 + $0x20] sm:$0xf]
        %v2473 = vld [vmem:[%s9 + $0x24] sm:$0xf]
        %v2474 = vld [vmem:[%s9 + $0x28] sm:$0xf]
        %v2475 = vld [vmem:[%s9 + $0x2c] sm:$0xf]
        %v2476 = vld [vmem:[%s9 + $0x30] sm:$0xf]
        %v2477 = vld [vmem:[%s9 + $0x34] sm:$0xf]
        %v2478 = vld [vmem:[%s9 + $0x38] sm:$0xf]
        %v2479 = vld [vmem:[%s9 + $0x3c] sm:$0xf]
        %v2480 = vpack.c.bf16 %v2463, %v2463
        %v2497 = vunpack.c.l.b16 %v2464
        %v2498 = vunpack.c.l.b16 %v2465
        %v2499 = vunpack.c.l.b16 %v2466
        %v2500 = vunpack.c.l.b16 %v2467
        %v2501 = vunpack.c.l.b16 %v2468
        %v2502 = vunpack.c.l.b16 %v2469
        %v2503 = vunpack.c.l.b16 %v2470
        %v2504 = vunpack.c.l.b16 %v2471
        %v2505 = vunpack.c.l.b16 %v2472
        %v2506 = vunpack.c.l.b16 %v2473
        %v2507 = vunpack.c.l.b16 %v2474
        %v2508 = vunpack.c.l.b16 %v2475
        %v2509 = vunpack.c.l.b16 %v2476
        %v2510 = vunpack.c.l.b16 %v2477
        %v2511 = vunpack.c.l.b16 %v2478
        %v2512 = vunpack.c.l.b16 %v2479
        %v2513 = vpack.c.b16 %v2498, %v2497
        %v2514 = vpack.c.b16 %v2500, %v2499
        %v2515 = vpack.c.b16 %v2502, %v2501
        %v2516 = vpack.c.b16 %v2504, %v2503
        %v2517 = vpack.c.b16 %v2506, %v2505
        %v2518 = vpack.c.b16 %v2508, %v2507
        %v2519 = vpack.c.b16 %v2510, %v2509
        %v2520 = vpack.c.b16 %v2512, %v2511
        %2529 = vmatprep.subr.bf16.mxu0 0
        %2530 = vmatpush1.bf16.msra.mxu0 %v2520
        %2531 = vmatprep.subr.bf16.mxu0 0
        %2532 = vmatpush1.bf16.msra.mxu0 %v2519
        %2533 = vmatprep.subr.bf16.mxu0 0
        %2534 = vmatpush1.bf16.msra.mxu0 %v2518
        %2535 = vmatprep.subr.bf16.mxu0 0
        %2536 = vmatpush1.bf16.msra.mxu0 %v2517
        %2537 = vmatprep.subr.bf16.mxu0 0
        %2538 = vmatpush1.bf16.msra.mxu0 %v2516
        %2539 = vmatprep.subr.bf16.mxu0 0
        %2540 = vmatpush1.bf16.msra.mxu0 %v2515
        %2541 = vmatprep.subr.bf16.mxu0 0
        %2542 = vmatpush1.bf16.msra.mxu0 %v2514
        %2543 = vmatprep.subr.bf16.mxu0 0
        %2544 = vmatpush1.bf16.msra.mxu0 %v2513
        %2545 = vmatprep.subr.bf16.mxu0 0
        %2546 = vmatpush2.bf16.msra.mxu0 0
        %2547 = vmatprep.subr.bf16.mxu0 0
        %2548 = vmatpush2.bf16.msra.mxu0 0
        %2549 = vmatprep.subr.bf16.mxu0 0
        %2550 = vmatpush2.bf16.msra.mxu0 0
        %2551 = vmatprep.subr.bf16.mxu0 0
        %2552 = vmatpush2.bf16.msra.mxu0 0
        %2553 = vmatprep.subr.bf16.mxu0 0
        %2554 = vmatpush2.bf16.msra.mxu0 0
        %2555 = vmatprep.subr.bf16.mxu0 0
        %2556 = vmatpush2.bf16.msra.mxu0 0
        %2557 = vmatprep.subr.bf16.mxu0 0
        %2558 = vmatpush2.bf16.msra.mxu0 0
        %2559 = vmatprep.subr.bf16.mxu0 0
        %2560 = vmatpush2.bf16.msra.mxu0 0
        %2561 = vmatprep.mubr.bf16.mxu0 0
        %2562 = vmatmul.mubr.bf16.gmra.mxu0 %v2480
        %v2563 = vpop.f32.mrf.mxu0
        %v2564 = vadd.f32 0.0, %v2563
        %v2565 = vpop.f32.mrf.mxu0
        %v2566 = vpop.f32.mrf.mxu0
        %v2567 = vpop.f32.mrf.mxu0
        %2568 = vdwg.mxu0
        %v2569 = vld [vmem:[%s8] sm:$0xf]
        %v2570 = vld [vmem:[%s8 + $0x4] sm:$0xf]
        %v2571 = vld [vmem:[%s8 + $0x8] sm:$0xf]
        %v2572 = vld [vmem:[%s8 + $0xc] sm:$0xf]
        %v2573 = vld [vmem:[%s8 + $0x10] sm:$0xf]
        %v2574 = vld [vmem:[%s8 + $0x14] sm:$0xf]
        %v2575 = vld [vmem:[%s8 + $0x18] sm:$0xf]
        %v2576 = vld [vmem:[%s8 + $0x1c] sm:$0xf]
        %v2577 = vpack.c.bf16 %v2385, %v2385
        %v2586 = vunpack.c.l.b16 %v2569
        %v2587 = vunpack.c.l.b16 %v2570
        %v2588 = vunpack.c.l.b16 %v2571
        %v2589 = vunpack.c.l.b16 %v2572
        %v2590 = vunpack.c.l.b16 %v2573
        %v2591 = vunpack.c.l.b16 %v2574
        %v2592 = vunpack.c.l.b16 %v2575
        %v2593 = vunpack.c.l.b16 %v2576
        %v2594 = vpack.c.b16 %v2587, %v2586
        %v2595 = vpack.c.b16 %v2589, %v2588
        %v2596 = vpack.c.b16 %v2591, %v2590
        %v2597 = vpack.c.b16 %v2593, %v2592
        %v2603 = vsel %vm371, %v2577, 0
        %2605 = vmatprep.subr.bf16.mxu0 0
        %2606 = vmatpush1.bf16.msra.mxu0 0
        %2607 = vmatprep.subr.bf16.mxu0 0
        %2608 = vmatpush1.bf16.msra.mxu0 0
        %2609 = vmatprep.subr.bf16.mxu0 0
        %2610 = vmatpush1.bf16.msra.mxu0 0
        %2611 = vmatprep.subr.bf16.mxu0 0
        %2612 = vmatpush1.bf16.msra.mxu0 0
        %2613 = vmatprep.subr.bf16.mxu0 0
        %2614 = vmatpush1.bf16.msra.mxu0 %v2597
        %2615 = vmatprep.subr.bf16.mxu0 0
        %2616 = vmatpush1.bf16.msra.mxu0 %v2596
        %2617 = vmatprep.subr.bf16.mxu0 0
        %2618 = vmatpush1.bf16.msra.mxu0 %v2595
        %2619 = vmatprep.subr.bf16.mxu0 0
        %2620 = vmatpush1.bf16.msra.mxu0 %v2594
        %2621 = vmatprep.subr.bf16.mxu0 0
        %2622 = vmatpush2.bf16.msra.mxu0 0
        %2623 = vmatprep.subr.bf16.mxu0 0
        %2624 = vmatpush2.bf16.msra.mxu0 0
        %2625 = vmatprep.subr.bf16.mxu0 0
        %2626 = vmatpush2.bf16.msra.mxu0 0
        %2627 = vmatprep.subr.bf16.mxu0 0
        %2628 = vmatpush2.bf16.msra.mxu0 0
        %2629 = vmatprep.subr.bf16.mxu0 0
        %2630 = vmatpush2.bf16.msra.mxu0 0
        %2631 = vmatprep.subr.bf16.mxu0 0
        %2632 = vmatpush2.bf16.msra.mxu0 0
        %2633 = vmatprep.subr.bf16.mxu0 0
        %2634 = vmatpush2.bf16.msra.mxu0 0
        %2635 = vmatprep.subr.bf16.mxu0 0
        %2636 = vmatpush2.bf16.msra.mxu0 0
        %2637 = vmatprep.mubr.bf16.mxu0 0
        %2638 = vmatmul.mubr.bf16.gmra.mxu0 %v2603
        %v2639 = vpop.f32.mrf.mxu0
        %v2640 = vadd.f32 0.0, %v2639
        %v2641 = vpop.f32.mrf.mxu0
        %v2642 = vpop.f32.mrf.mxu0
        %v2643 = vpop.f32.mrf.mxu0
        %2644 = vdwg.mxu0
        %v2645 = vxor.u32 %v2640, 2147483648
        %v2646 = vmul.f32 %v2645, 1.442695
        %v2647 = vpow.pop %v2646
        %v2648 = vadd.f32 %v2647, 1.0
        %v2649 = vrcp.pop %v2648
        %v2650 = vmul.f32 1.0, %v2649
        %v2651 = vmul.f32 %v2650, %v2564
        %v2652 = vadd.f32 %v2206, %v2651
        %2653 = vst.msk [vmem:[%s350] sm:$0xff] %vm371, %v2652
        %s2654 = sand.u32 %s247, 1
        %s2655 = scalar_lea.sflag [#allocation3], %s2654
        %s2656 = sand.u32 %s247, 1
        %s2657 = smul.addr %s2656, 8
        %s2658 = scalar_lea.vmem [#allocation2], %s2657
        // Predicated region
        $region61: #{rwkv_block_forward.1} parent=59 // pred_check
          %p2659 = pneg %p257
        $region62: #{rwkv_block_forward.1} parent=59 // pred_check_branch
          %2661 = sbr.rel (%p2659) target = $region64
        $region63: #{rwkv_block_forward.1} parent=59 // pred_region
          %s2663 = ssub.s32 128, 128
          %2664 = vsyncadd %s2655, %s2663
          %s2665 = smul.addr %s24, 128
          %s2666 = scalar_lea.hbm %s10, %s2665
          %s2668 = sshll.u32 %s2658, 4
          %s2669 = int_to_ptr.vmem [resolvable:$true] %s2668
          %2671 = dma.vmem_to_hbm [thread:$0]  %s2669, 128, %s2666, %s2655
        $region64: #{rwkv_block_forward.1} parent=59 // pred_fallthru
          _
      $region60: #{rwkv_block_forward.1} parent=5 // pred_fallthru
        _
      %p2672 = scmp.le.s32.totalorder 2, %s19
      // Predicated region
      $region65: #{rwkv_block_forward.1} parent=5 // pred_check
        %p2673 = pneg %p2672
      $region66: #{rwkv_block_forward.1} parent=5 // pred_check_branch
        %2675 = sbr.rel (%p2673) target = $region68
      $region67: #{rwkv_block_forward.1} parent=5 // pred_region
        %s2676 = ssub.s32 %s19, 2
        // Predicated region
        $region69: #{rwkv_block_forward.1} parent=67 // pred_check
          %p2677 = pneg %p263
        $region70: #{rwkv_block_forward.1} parent=67 // pred_check_branch
          %2679 = sbr.rel (%p2677) target = $region72
        $region71: #{rwkv_block_forward.1} parent=67 // pred_region
          %s2680 = sand.u32 %s248, 1
          %s2681 = scalar_lea.sflag [#allocation3], %s2680
          %s2682 = sand.u32 %s248, 1
          %s2683 = smul.addr %s2682, 8
          %s2684 = scalar_lea.vmem [#allocation2], %s2683
          %2685 = dma.done %s2681, 128
        $region72: #{rwkv_block_forward.1} parent=67 // pred_fallthru
          _
      $region68: #{rwkv_block_forward.1} parent=5 // pred_fallthru
        _
    $region6: #{rwkv_block_forward.1} parent=1 // loop_footer
      %s23 = sadd.s32 1, %s19
    $region7: #{rwkv_block_forward.1} parent=1 // loop_footer_branch
      %18 = sbr.rel target = $region3
    $region8: #{rwkv_block_forward.1} parent=1 // loop_exit
      _
    %2686 = vsyncpa [#allocation3], 1
    %s2687 = scalar_lea.sflag [#allocation3], 1
    %2688 = vsyncpa %s2687, 1

</llo_original>
